<compile_context>
chip_gen: v5e
topology: v5e:2x2
jax: 0.10.0
libtpu: 0.0.40
codegen_flags: <defaults>
</compile_context>

<pallas_src>
import jax
import jax.numpy as jnp
from jax.experimental import pallas as pl
from jax.experimental.pallas import tpu as pltpu

EPS = 1e-5


def conv_bn_add_kernel(x_ref, w_ref, gb_ref, res_ref, o_ref):
    # x_ref:   (Cin,  M)    activations (channels on sublanes, M = N*H*W on lanes)
    # w_ref:   (Cout, Cin)  1x1 conv weight (f32 / bf16 / fp8, persistent dtype)
    # gb_ref:  (Cout, 2)    packed BN affine: [:,0]=gamma, [:,1]=beta (f32)
    # res_ref: (Cout, M)    residual
    # o_ref:   (Cout, M)    output
    w = w_ref[...]
    x = x_ref[...].astype(w.dtype)  # no-op on the f32 path; cheap in-kernel cast otherwise

    # 1x1 convolution == matmul on the MXU, f32 accumulation.
    y = jnp.dot(w, x, preferred_element_type=jnp.float32)  # (Cout, M)

    # Training-mode BatchNorm batch statistics per channel, single sweep
    # (E[y], E[y^2]); biased variance as in PyTorch's normalization.
    m = y.shape[1]
    inv_m = jnp.float32(1.0 / m)
    s = jnp.sum(y, axis=1, keepdims=True)        # (Cout, 1)
    ss = jnp.sum(y * y, axis=1, keepdims=True)   # (Cout, 1)
    mean = s * inv_m
    # Clamp: single-pass variance can go slightly negative from f32 cancellation.
    var = jnp.maximum(ss * inv_m - mean * mean, jnp.float32(0.0))
    inv_std = jax.lax.rsqrt(var + jnp.float32(EPS))

    # Fold the BN affine into per-channel scale/shift -> 2 VPU ops per element.
    gamma = gb_ref[:, 0:1]                       # static slices, zero cost
    beta = gb_ref[:, 1:2]
    scale = gamma * inv_std                      # (Cout, 1)
    shift = beta - mean * scale                  # (Cout, 1)

    out = res_ref[...].astype(jnp.float32) + y * scale + shift
    o_ref[...] = out.astype(o_ref.dtype)


def prepare_params(weight, gamma, beta, matmul_dtype=jnp.bfloat16):
    """One-time parameter prep (OUTSIDE the per-call hot path).

    weight: (Cout, Cin, 1, 1).  gamma/beta: (Cout,).
    matmul_dtype: None -> keep f32 weight; jnp.bfloat16 (default, v5e/v6e);
                  jnp.float8_e4m3fn possible on v7x.
    Returns (w2d, gb) as persistent device arrays.
    """
    Cout, Cin = weight.shape[0], weight.shape[1]
    w2d = weight.reshape(Cout, Cin)              # straight reshape, no transpose
    if matmul_dtype is not None:
        w2d = w2d.astype(matmul_dtype)
    gb = jnp.stack(
        [gamma.astype(jnp.float32), beta.astype(jnp.float32)], axis=1
    )                                            # (Cout, 2)
    return jax.device_put(w2d), jax.device_put(gb)


@jax.jit
def conv_bn_add(x183, x171, w2d, gb):
    """x183, x171: NCHW.  w2d: (Cout, Cin) persistent (possibly bf16).  gb: (Cout, 2)."""
    N, Cin, H, W_sp = x183.shape
    Cout = w2d.shape[0]
    M = N * H * W_sp

    # C-major layout: for N == 1 (the module's shape) NCHW -> (C, H*W) is a
    # pure, copy-free reshape -- zero transposes around the kernel.
    if N == 1:
        x_flat = x183.reshape(Cin, M)
        res_flat = x171.reshape(Cout, M)
    else:
        x_flat = jnp.transpose(x183, (1, 0, 2, 3)).reshape(Cin, M)
        res_flat = jnp.transpose(x171, (1, 0, 2, 3)).reshape(Cout, M)

    out_dtype = x171.dtype
    bytes_accessed = int(
        x_flat.size * jnp.dtype(x_flat.dtype).itemsize
        + w2d.size * jnp.dtype(w2d.dtype).itemsize
        + gb.size * 4
        + res_flat.size * jnp.dtype(res_flat.dtype).itemsize
        + Cout * M * jnp.dtype(out_dtype).itemsize
    )
    cost = pl.CostEstimate(
        flops=2 * M * Cin * Cout,
        transcendentals=Cout,            # one rsqrt per channel
        bytes_accessed=bytes_accessed,
    )

    # Whole problem fits comfortably in VMEM -> single invocation, full-array
    # blocks, no grid (avoids ~0.35 us/step pipeline overhead on a ~1-2 us,
    # HBM-DMA-bound kernel).  Intentionally NOT split across v7x TensorCores.
    out_flat = pl.pallas_call(
        conv_bn_add_kernel,
        out_shape=jax.ShapeDtypeStruct((Cout, M), out_dtype),
        in_specs=[
            pl.BlockSpec(memory_space=pltpu.VMEM),
            pl.BlockSpec(memory_space=pltpu.VMEM),
            pl.BlockSpec(memory_space=pltpu.VMEM),
            pl.BlockSpec(memory_space=pltpu.VMEM),
        ],
        out_specs=pl.BlockSpec(memory_space=pltpu.VMEM),
        cost_estimate=cost,
    )(x_flat, w2d, gb, res_flat)

    if N == 1:
        return out_flat.reshape(N, Cout, H, W_sp)
    return jnp.transpose(out_flat.reshape(Cout, N, H, W_sp), (1, 0, 2, 3))


if __name__ == "__main__":
    key = jax.random.PRNGKey(0)
    k1, k2, k3, k4, k5 = jax.random.split(key, 5)

    N, C, H, W = 1, 440, 7, 7  # shapes implied by the module
    x183 = jax.random.normal(k1, (N, C, H, W), dtype=jnp.float32)
    x171 = jax.random.normal(k2, (N, C, H, W), dtype=jnp.float32)

    # Deterministic synthetic parameters mirroring the module's shapes.
    weight = jax.random.normal(k3, (C, C, 1, 1), dtype=jnp.float32) * 0.05
    gamma = jnp.ones((C,), dtype=jnp.float32) + 0.1 * jax.random.normal(k4, (C,), dtype=jnp.float32)
    beta = 0.1 * jax.random.normal(k5, (C,), dtype=jnp.float32)

    # Pure-JAX reference (1x1 conv + training-mode BN + add).
    xf = jnp.transpose(x183, (0, 2, 3, 1)).reshape(N * H * W, C)
    y = xf @ weight.reshape(C, C).T
    mu = y.mean(axis=0)
    var = ((y - mu) ** 2).mean(axis=0)
    yn = (y - mu) / jnp.sqrt(var + EPS)
    ref = jnp.transpose(x171, (0, 2, 3, 1)).reshape(N * H * W, C) + gamma * yn + beta
    ref = jnp.transpose(ref.reshape(N, H, W, C), (0, 3, 1, 2))

    # 1) f32-weight path: tight correctness gate on the kernel itself.
    w_f32, gb_f32 = prepare_params(weight, gamma, beta, matmul_dtype=None)
    out_f32 = conv_bn_add(x183, x171, w_f32, gb_f32)
    jax.block_until_ready(out_f32)
    assert jnp.allclose(out_f32, ref, atol=1e-3, rtol=1e-3), "f32 path mismatch vs reference"

    # 2) Default path: persistent bf16 weight (the hot path; no per-call cast).
    w_bf16, gb = prepare_params(weight, gamma, beta)  # default matmul_dtype=bf16
    out = conv_bn_add(x183, x171, w_bf16, gb)
    jax.block_until_ready(out)
    assert jnp.allclose(out, ref, atol=1e-1, rtol=1e-1), "bf16 path mismatch vs reference"

    print("KERNEL_OK")
</pallas_src>

<mosaic_0001>
module attributes {stable_mosaic.version = 11 : i64} {
  func.func @conv_bn_add_kernel(%arg0: memref<440x49xf32, #tpu.memory_space<vmem>>, %arg1: memref<440x440xf32, #tpu.memory_space<vmem>>, %arg2: memref<440x2xf32, #tpu.memory_space<vmem>>, %arg3: memref<440x49xf32, #tpu.memory_space<vmem>>, %arg4: memref<440x49xf32, #tpu.memory_space<vmem>>) attributes {dimension_semantics = [], scalar_prefetch = 0 : i64, scratch_operands = 0 : i64, tpu.core_type = #tpu.core_type<tc>} {
    %c0 = arith.constant 0 : index
    %c0_0 = arith.constant 0 : index
    %0 = vector.load %arg1[%c0, %c0_0] : memref<440x440xf32, #tpu.memory_space<vmem>>, vector<440x440xf32>
    %c0_1 = arith.constant 0 : index
    %c0_2 = arith.constant 0 : index
    %1 = vector.load %arg0[%c0_1, %c0_2] : memref<440x49xf32, #tpu.memory_space<vmem>>, vector<440x49xf32>
    %cst = arith.constant dense<0.000000e+00> : vector<440x49xf32>
    %2 = tpu.matmul %0, %1, %cst {dimension_numbers = #tpu.dot_dimension_numbers<[1], [0], [0], [1], [0, 0, 1, 1], [], []>} : vector<440x440xf32>, vector<440x49xf32>, vector<440x49xf32> -> vector<440x49xf32>
    %cst_3 = arith.constant dense<0.000000e+00> : vector<440xf32>
    %3 = vector.multi_reduction <add>, %2, %cst_3 [1] : vector<440x49xf32> to vector<440xf32>
    %4 = vector.shape_cast %3 : vector<440xf32> to vector<440x1xf32>
    %5 = arith.mulf %2, %2 : vector<440x49xf32>
    %cst_4 = arith.constant dense<0.000000e+00> : vector<440xf32>
    %6 = vector.multi_reduction <add>, %5, %cst_4 [1] : vector<440x49xf32> to vector<440xf32>
    %7 = vector.shape_cast %6 : vector<440xf32> to vector<440x1xf32>
    %cst_5 = arith.constant 0.0204081628 : f32
    %8 = vector.broadcast %cst_5 : f32 to vector<440x1xf32>
    %9 = arith.mulf %4, %8 : vector<440x1xf32>
    %cst_6 = arith.constant 0.0204081628 : f32
    %10 = vector.broadcast %cst_6 : f32 to vector<440x1xf32>
    %11 = arith.mulf %7, %10 : vector<440x1xf32>
    %12 = arith.mulf %9, %9 : vector<440x1xf32>
    %13 = arith.subf %11, %12 : vector<440x1xf32>
    %cst_7 = arith.constant 0.000000e+00 : f32
    %14 = vector.broadcast %cst_7 : f32 to vector<440x1xf32>
    %15 = arith.maximumf %13, %14 : vector<440x1xf32>
    %cst_8 = arith.constant 9.99999974E-6 : f32
    %16 = vector.broadcast %cst_8 : f32 to vector<440x1xf32>
    %17 = arith.addf %15, %16 : vector<440x1xf32>
    %18 = math.rsqrt %17 : vector<440x1xf32>
    %c0_9 = arith.constant 0 : index
    %c0_10 = arith.constant 0 : index
    %19 = vector.load %arg2[%c0_9, %c0_10] : memref<440x2xf32, #tpu.memory_space<vmem>>, vector<440x1xf32>
    %c0_11 = arith.constant 0 : index
    %c1 = arith.constant 1 : index
    %20 = vector.load %arg2[%c0_11, %c1] : memref<440x2xf32, #tpu.memory_space<vmem>>, vector<440x1xf32>
    %21 = arith.mulf %19, %18 : vector<440x1xf32>
    %22 = arith.mulf %9, %21 : vector<440x1xf32>
    %23 = arith.subf %20, %22 : vector<440x1xf32>
    %c0_12 = arith.constant 0 : index
    %c0_13 = arith.constant 0 : index
    %24 = vector.load %arg3[%c0_12, %c0_13] : memref<440x49xf32, #tpu.memory_space<vmem>>, vector<440x49xf32>
    %25 = vector.broadcast %21 : vector<440x1xf32> to vector<440x49xf32>
    %26 = arith.mulf %2, %25 : vector<440x49xf32>
    %27 = arith.addf %24, %26 : vector<440x49xf32>
    %28 = vector.broadcast %23 : vector<440x1xf32> to vector<440x49xf32>
    %29 = arith.addf %27, %28 : vector<440x49xf32>
    %c0_14 = arith.constant 0 : index
    %c0_15 = arith.constant 0 : index
    %30 = vector.load %arg4[%c0_14, %c0_15] : memref<440x49xf32, #tpu.memory_space<vmem>>, vector<440x49xf32>
    tpu.vector_store %arg4[%c0_14, %c0_15], %29 {strides = array<i32>} : memref<440x49xf32, #tpu.memory_space<vmem>>, vector<440x49xf32>,
    return
  }
}

</mosaic_0001>

<llo_original>
// kernel: conv_bn_add.1
$region0: #{conv_bn_add.1}
  #allocation0 [shape = 'u32[]', space=smem, size = 0x4, offset = 0x4, fixed_abs, tag = 'smem constant byte address 0x4 - core index']
  #allocation1 [shape = 'u32[72,128]{1,0:T(1,128)}', space=vmem, size = 0x9000, scoped, tag = 'internal scratch']
  %s0 = inlined_call_operand.vmem [shape: f32[440,49], index: 0, kind: input, shape index: {}]
  %s1 = inlined_call_operand.vmem [shape: f32[440,440], index: 1, kind: input, shape index: {}]
  %s2 = inlined_call_operand.vmem [shape: f32[440,2], index: 2, kind: input, shape index: {}]
  %s3 = inlined_call_operand.vmem [shape: f32[440,49], index: 3, kind: input, shape index: {}]
  %s4 = inlined_call_operand.vmem [shape: f32[440,49], index: 4, kind: output, shape index: {}]
  %s5 = sld [smem:[#allocation0]]
  $region26: #{conv_bn_add.1} parent=0
    _
  %s7 = ssub.s32 1, %s5
  %s8 = scalar_select 0, %s7, %s5
  // Predicated region
  $region2: #{conv_bn_add.1} parent=0 // pred_check
    _
  $region3: #{conv_bn_add.1} parent=0 // pred_check_branch
    %10 = sbr.rel (0) target = $region5
  $region4: #{conv_bn_add.1} parent=0 // pred_region
    _
  $region5: #{conv_bn_add.1} parent=0 // pred_fallthru
    _
  // Predicated region
  $region6: #{conv_bn_add.1} parent=0 // pred_check
    _
  $region7: #{conv_bn_add.1} parent=0 // pred_check_branch
    %12 = sbr.rel (0) target = $region9
  $region8: #{conv_bn_add.1} parent=0 // pred_region
    _
  $region9: #{conv_bn_add.1} parent=0 // pred_fallthru
    _
  // Predicated region
  $region10: #{conv_bn_add.1} parent=0 // pred_check
    _
  $region11: #{conv_bn_add.1} parent=0 // pred_check_branch
    %14 = sbr.rel (0) target = $region13
  $region12: #{conv_bn_add.1} parent=0 // pred_region
    _
  $region13: #{conv_bn_add.1} parent=0 // pred_fallthru
    _
  // Predicated region
  $region14: #{conv_bn_add.1} parent=0 // pred_check
    _
  $region15: #{conv_bn_add.1} parent=0 // pred_check_branch
    %16 = sbr.rel (0) target = $region17
  $region16: #{conv_bn_add.1} parent=0 // pred_region
    _
  $region17: #{conv_bn_add.1} parent=0 // pred_fallthru
    _
  %v17 = vld [vmem:[%s1] sm:$0xff]
  %v18 = vld [vmem:[%s1 + $0x8] sm:$0xff]
  %v19 = vld [vmem:[%s1 + $0x10] sm:$0xff]
  %v20 = vld [vmem:[%s1 + $0x18] sm:$0xff]
  %v21 = vld [vmem:[%s1 + $0x20] sm:$0xff]
  %v22 = vld [vmem:[%s1 + $0x28] sm:$0xff]
  %v23 = vld [vmem:[%s1 + $0x30] sm:$0xff]
  %v24 = vld [vmem:[%s1 + $0x38] sm:$0xff]
  %v25 = vld [vmem:[%s1 + $0x40] sm:$0xff]
  %v26 = vld [vmem:[%s1 + $0x48] sm:$0xff]
  %v27 = vld [vmem:[%s1 + $0x50] sm:$0xff]
  %v28 = vld [vmem:[%s1 + $0x58] sm:$0xff]
  %v29 = vld [vmem:[%s1 + $0x60] sm:$0xff]
  %v30 = vld [vmem:[%s1 + $0x68] sm:$0xff]
  %v31 = vld [vmem:[%s1 + $0x70] sm:$0xff]
  %v32 = vld [vmem:[%s1 + $0x78] sm:$0xff]
  %v33 = vld [vmem:[%s1 + $0x80] sm:$0xff]
  %v34 = vld [vmem:[%s1 + $0x88] sm:$0xff]
  %v35 = vld [vmem:[%s1 + $0x90] sm:$0xff]
  %v36 = vld [vmem:[%s1 + $0x98] sm:$0xff]
  %v37 = vld [vmem:[%s1 + $0xa0] sm:$0xff]
  %v38 = vld [vmem:[%s1 + $0xa8] sm:$0xff]
  %v39 = vld [vmem:[%s1 + $0xb0] sm:$0xff]
  %v40 = vld [vmem:[%s1 + $0xb8] sm:$0xff]
  %v41 = vld [vmem:[%s1 + $0xc0] sm:$0xff]
  %v42 = vld [vmem:[%s1 + $0xc8] sm:$0xff]
  %v43 = vld [vmem:[%s1 + $0xd0] sm:$0xff]
  %v44 = vld [vmem:[%s1 + $0xd8] sm:$0xff]
  %v45 = vld [vmem:[%s1 + $0xe0] sm:$0xff]
  %v46 = vld [vmem:[%s1 + $0xe8] sm:$0xff]
  %v47 = vld [vmem:[%s1 + $0xf0] sm:$0xff]
  %v48 = vld [vmem:[%s1 + $0xf8] sm:$0xff]
  %v49 = vld [vmem:[%s1 + $0x100] sm:$0xff]
  %v50 = vld [vmem:[%s1 + $0x108] sm:$0xff]
  %v51 = vld [vmem:[%s1 + $0x110] sm:$0xff]
  %v52 = vld [vmem:[%s1 + $0x118] sm:$0xff]
  %v53 = vld [vmem:[%s1 + $0x120] sm:$0xff]
  %v54 = vld [vmem:[%s1 + $0x128] sm:$0xff]
  %v55 = vld [vmem:[%s1 + $0x130] sm:$0xff]
  %v56 = vld [vmem:[%s1 + $0x138] sm:$0xff]
  %v57 = vld [vmem:[%s1 + $0x140] sm:$0xff]
  %v58 = vld [vmem:[%s1 + $0x148] sm:$0xff]
  %v59 = vld [vmem:[%s1 + $0x150] sm:$0xff]
  %v60 = vld [vmem:[%s1 + $0x158] sm:$0xff]
  %v61 = vld [vmem:[%s1 + $0x160] sm:$0xff]
  %v62 = vld [vmem:[%s1 + $0x168] sm:$0xff]
  %v63 = vld [vmem:[%s1 + $0x170] sm:$0xff]
  %v64 = vld [vmem:[%s1 + $0x178] sm:$0xff]
  %v65 = vld [vmem:[%s1 + $0x180] sm:$0xff]
  %v66 = vld [vmem:[%s1 + $0x188] sm:$0xff]
  %v67 = vld [vmem:[%s1 + $0x190] sm:$0xff]
  %v68 = vld [vmem:[%s1 + $0x198] sm:$0xff]
  %v69 = vld [vmem:[%s1 + $0x1a0] sm:$0xff]
  %v70 = vld [vmem:[%s1 + $0x1a8] sm:$0xff]
  %v71 = vld [vmem:[%s1 + $0x1b0] sm:$0xff]
  %v72 = vld [vmem:[%s1 + $0x1b8] sm:$0xff]
  %v73 = vld [vmem:[%s1 + $0x1c0] sm:$0xff]
  %v74 = vld [vmem:[%s1 + $0x1c8] sm:$0xff]
  %v75 = vld [vmem:[%s1 + $0x1d0] sm:$0xff]
  %v76 = vld [vmem:[%s1 + $0x1d8] sm:$0xff]
  %v77 = vld [vmem:[%s1 + $0x1e0] sm:$0xff]
  %v78 = vld [vmem:[%s1 + $0x1e8] sm:$0xff]
  %v79 = vld [vmem:[%s1 + $0x1f0] sm:$0xff]
  %v80 = vld [vmem:[%s1 + $0x1f8] sm:$0xff]
  %v81 = vld [vmem:[%s1 + $0x200] sm:$0xff]
  %v82 = vld [vmem:[%s1 + $0x208] sm:$0xff]
  %v83 = vld [vmem:[%s1 + $0x210] sm:$0xff]
  %v84 = vld [vmem:[%s1 + $0x218] sm:$0xff]
  %v85 = vld [vmem:[%s1 + $0x220] sm:$0xff]
  %v86 = vld [vmem:[%s1 + $0x228] sm:$0xff]
  %v87 = vld [vmem:[%s1 + $0x230] sm:$0xff]
  %v88 = vld [vmem:[%s1 + $0x238] sm:$0xff]
  %v89 = vld [vmem:[%s1 + $0x240] sm:$0xff]
  %v90 = vld [vmem:[%s1 + $0x248] sm:$0xff]
  %v91 = vld [vmem:[%s1 + $0x250] sm:$0xff]
  %v92 = vld [vmem:[%s1 + $0x258] sm:$0xff]
  %v93 = vld [vmem:[%s1 + $0x260] sm:$0xff]
  %v94 = vld [vmem:[%s1 + $0x268] sm:$0xff]
  %v95 = vld [vmem:[%s1 + $0x270] sm:$0xff]
  %v96 = vld [vmem:[%s1 + $0x278] sm:$0xff]
  %v97 = vld [vmem:[%s1 + $0x280] sm:$0xff]
  %v98 = vld [vmem:[%s1 + $0x288] sm:$0xff]
  %v99 = vld [vmem:[%s1 + $0x290] sm:$0xff]
  %v100 = vld [vmem:[%s1 + $0x298] sm:$0xff]
  %v101 = vld [vmem:[%s1 + $0x2a0] sm:$0xff]
  %v102 = vld [vmem:[%s1 + $0x2a8] sm:$0xff]
  %v103 = vld [vmem:[%s1 + $0x2b0] sm:$0xff]
  %v104 = vld [vmem:[%s1 + $0x2b8] sm:$0xff]
  %v105 = vld [vmem:[%s1 + $0x2c0] sm:$0xff]
  %v106 = vld [vmem:[%s1 + $0x2c8] sm:$0xff]
  %v107 = vld [vmem:[%s1 + $0x2d0] sm:$0xff]
  %v108 = vld [vmem:[%s1 + $0x2d8] sm:$0xff]
  %v109 = vld [vmem:[%s1 + $0x2e0] sm:$0xff]
  %v110 = vld [vmem:[%s1 + $0x2e8] sm:$0xff]
  %v111 = vld [vmem:[%s1 + $0x2f0] sm:$0xff]
  %v112 = vld [vmem:[%s1 + $0x2f8] sm:$0xff]
  %v113 = vld [vmem:[%s1 + $0x300] sm:$0xff]
  %v114 = vld [vmem:[%s1 + $0x308] sm:$0xff]
  %v115 = vld [vmem:[%s1 + $0x310] sm:$0xff]
  %v116 = vld [vmem:[%s1 + $0x318] sm:$0xff]
  %v117 = vld [vmem:[%s1 + $0x320] sm:$0xff]
  %v118 = vld [vmem:[%s1 + $0x328] sm:$0xff]
  %v119 = vld [vmem:[%s1 + $0x330] sm:$0xff]
  %v120 = vld [vmem:[%s1 + $0x338] sm:$0xff]
  %v121 = vld [vmem:[%s1 + $0x340] sm:$0xff]
  %v122 = vld [vmem:[%s1 + $0x348] sm:$0xff]
  %v123 = vld [vmem:[%s1 + $0x350] sm:$0xff]
  %v124 = vld [vmem:[%s1 + $0x358] sm:$0xff]
  %v125 = vld [vmem:[%s1 + $0x360] sm:$0xff]
  %v126 = vld [vmem:[%s1 + $0x368] sm:$0xff]
  %v127 = vld [vmem:[%s1 + $0x370] sm:$0xff]
  %v128 = vld [vmem:[%s1 + $0x378] sm:$0xff]
  %v129 = vld [vmem:[%s1 + $0x380] sm:$0xff]
  %v130 = vld [vmem:[%s1 + $0x388] sm:$0xff]
  %v131 = vld [vmem:[%s1 + $0x390] sm:$0xff]
  %v132 = vld [vmem:[%s1 + $0x398] sm:$0xff]
  %v133 = vld [vmem:[%s1 + $0x3a0] sm:$0xff]
  %v134 = vld [vmem:[%s1 + $0x3a8] sm:$0xff]
  %v135 = vld [vmem:[%s1 + $0x3b0] sm:$0xff]
  %v136 = vld [vmem:[%s1 + $0x3b8] sm:$0xff]
  %v137 = vld [vmem:[%s1 + $0x3c0] sm:$0xff]
  %v138 = vld [vmem:[%s1 + $0x3c8] sm:$0xff]
  %v139 = vld [vmem:[%s1 + $0x3d0] sm:$0xff]
  %v140 = vld [vmem:[%s1 + $0x3d8] sm:$0xff]
  %v141 = vld [vmem:[%s1 + $0x3e0] sm:$0xff]
  %v142 = vld [vmem:[%s1 + $0x3e8] sm:$0xff]
  %v143 = vld [vmem:[%s1 + $0x3f0] sm:$0xff]
  %v144 = vld [vmem:[%s1 + $0x3f8] sm:$0xff]
  %v145 = vld [vmem:[%s1 + $0x400] sm:$0xff]
  %v146 = vld [vmem:[%s1 + $0x408] sm:$0xff]
  %v147 = vld [vmem:[%s1 + $0x410] sm:$0xff]
  %v148 = vld [vmem:[%s1 + $0x418] sm:$0xff]
  %v149 = vld [vmem:[%s1 + $0x420] sm:$0xff]
  %v150 = vld [vmem:[%s1 + $0x428] sm:$0xff]
  %v151 = vld [vmem:[%s1 + $0x430] sm:$0xff]
  %v152 = vld [vmem:[%s1 + $0x438] sm:$0xff]
  %v153 = vld [vmem:[%s1 + $0x440] sm:$0xff]
  %v154 = vld [vmem:[%s1 + $0x448] sm:$0xff]
  %v155 = vld [vmem:[%s1 + $0x450] sm:$0xff]
  %v156 = vld [vmem:[%s1 + $0x458] sm:$0xff]
  %v157 = vld [vmem:[%s1 + $0x460] sm:$0xff]
  %v158 = vld [vmem:[%s1 + $0x468] sm:$0xff]
  %v159 = vld [vmem:[%s1 + $0x470] sm:$0xff]
  %v160 = vld [vmem:[%s1 + $0x478] sm:$0xff]
  %v161 = vld [vmem:[%s1 + $0x480] sm:$0xff]
  %v162 = vld [vmem:[%s1 + $0x488] sm:$0xff]
  %v163 = vld [vmem:[%s1 + $0x490] sm:$0xff]
  %v164 = vld [vmem:[%s1 + $0x498] sm:$0xff]
  %v165 = vld [vmem:[%s1 + $0x4a0] sm:$0xff]
  %v166 = vld [vmem:[%s1 + $0x4a8] sm:$0xff]
  %v167 = vld [vmem:[%s1 + $0x4b0] sm:$0xff]
  %v168 = vld [vmem:[%s1 + $0x4b8] sm:$0xff]
  %v169 = vld [vmem:[%s1 + $0x4c0] sm:$0xff]
  %v170 = vld [vmem:[%s1 + $0x4c8] sm:$0xff]
  %v171 = vld [vmem:[%s1 + $0x4d0] sm:$0xff]
  %v172 = vld [vmem:[%s1 + $0x4d8] sm:$0xff]
  %v173 = vld [vmem:[%s1 + $0x4e0] sm:$0xff]
  %v174 = vld [vmem:[%s1 + $0x4e8] sm:$0xff]
  %v175 = vld [vmem:[%s1 + $0x4f0] sm:$0xff]
  %v176 = vld [vmem:[%s1 + $0x4f8] sm:$0xff]
  %v177 = vld [vmem:[%s1 + $0x500] sm:$0xff]
  %v178 = vld [vmem:[%s1 + $0x508] sm:$0xff]
  %v179 = vld [vmem:[%s1 + $0x510] sm:$0xff]
  %v180 = vld [vmem:[%s1 + $0x518] sm:$0xff]
  %v181 = vld [vmem:[%s1 + $0x520] sm:$0xff]
  %v182 = vld [vmem:[%s1 + $0x528] sm:$0xff]
  %v183 = vld [vmem:[%s1 + $0x530] sm:$0xff]
  %v184 = vld [vmem:[%s1 + $0x538] sm:$0xff]
  %v185 = vld [vmem:[%s1 + $0x540] sm:$0xff]
  %v186 = vld [vmem:[%s1 + $0x548] sm:$0xff]
  %v187 = vld [vmem:[%s1 + $0x550] sm:$0xff]
  %v188 = vld [vmem:[%s1 + $0x558] sm:$0xff]
  %v189 = vld [vmem:[%s1 + $0x560] sm:$0xff]
  %v190 = vld [vmem:[%s1 + $0x568] sm:$0xff]
  %v191 = vld [vmem:[%s1 + $0x570] sm:$0xff]
  %v192 = vld [vmem:[%s1 + $0x578] sm:$0xff]
  %v193 = vld [vmem:[%s1 + $0x580] sm:$0xff]
  %v194 = vld [vmem:[%s1 + $0x588] sm:$0xff]
  %v195 = vld [vmem:[%s1 + $0x590] sm:$0xff]
  %v196 = vld [vmem:[%s1 + $0x598] sm:$0xff]
  %v197 = vld [vmem:[%s1 + $0x5a0] sm:$0xff]
  %v198 = vld [vmem:[%s1 + $0x5a8] sm:$0xff]
  %v199 = vld [vmem:[%s1 + $0x5b0] sm:$0xff]
  %v200 = vld [vmem:[%s1 + $0x5b8] sm:$0xff]
  %v201 = vld [vmem:[%s1 + $0x5c0] sm:$0xff]
  %v202 = vld [vmem:[%s1 + $0x5c8] sm:$0xff]
  %v203 = vld [vmem:[%s1 + $0x5d0] sm:$0xff]
  %v204 = vld [vmem:[%s1 + $0x5d8] sm:$0xff]
  %v205 = vld [vmem:[%s1 + $0x5e0] sm:$0xff]
  %v206 = vld [vmem:[%s1 + $0x5e8] sm:$0xff]
  %v207 = vld [vmem:[%s1 + $0x5f0] sm:$0xff]
  %v208 = vld [vmem:[%s1 + $0x5f8] sm:$0xff]
  %v209 = vld [vmem:[%s1 + $0x600] sm:$0xff]
  %v210 = vld [vmem:[%s1 + $0x608] sm:$0xff]
  %v211 = vld [vmem:[%s1 + $0x610] sm:$0xff]
  %v212 = vld [vmem:[%s1 + $0x618] sm:$0xff]
  %v213 = vld [vmem:[%s1 + $0x620] sm:$0xff]
  %v214 = vld [vmem:[%s1 + $0x628] sm:$0xff]
  %v215 = vld [vmem:[%s1 + $0x630] sm:$0xff]
  %v216 = vld [vmem:[%s1 + $0x638] sm:$0xff]
  %v217 = vld [vmem:[%s1 + $0x640] sm:$0xff]
  %v218 = vld [vmem:[%s1 + $0x648] sm:$0xff]
  %v219 = vld [vmem:[%s1 + $0x650] sm:$0xff]
  %v220 = vld [vmem:[%s1 + $0x658] sm:$0xff]
  %v221 = vld [vmem:[%s1 + $0x660] sm:$0xff]
  %v222 = vld [vmem:[%s1 + $0x668] sm:$0xff]
  %v223 = vld [vmem:[%s1 + $0x670] sm:$0xff]
  %v224 = vld [vmem:[%s1 + $0x678] sm:$0xff]
  %v225 = vld [vmem:[%s1 + $0x680] sm:$0xff]
  %v226 = vld [vmem:[%s1 + $0x688] sm:$0xff]
  %v227 = vld [vmem:[%s1 + $0x690] sm:$0xff]
  %v228 = vld [vmem:[%s1 + $0x698] sm:$0xff]
  %v229 = vld [vmem:[%s1 + $0x6a0] sm:$0xff]
  %v230 = vld [vmem:[%s1 + $0x6a8] sm:$0xff]
  %v231 = vld [vmem:[%s1 + $0x6b0] sm:$0xff]
  %v232 = vld [vmem:[%s1 + $0x6b8] sm:$0xff]
  %v233 = vld [vmem:[%s1 + $0x6c0] sm:$0xff]
  %v234 = vld [vmem:[%s1 + $0x6c8] sm:$0xff]
  %v235 = vld [vmem:[%s1 + $0x6d0] sm:$0xff]
  %v236 = vld [vmem:[%s1 + $0x6d8] sm:$0xff]
  %v237 = vld [vmem:[%s0] sm:$0xff]
  %v238 = vld [vmem:[%s0 + $0x8] sm:$0xff]
  %v239 = vld [vmem:[%s0 + $0x10] sm:$0xff]
  %v240 = vld [vmem:[%s0 + $0x18] sm:$0xff]
  %v241 = vld [vmem:[%s0 + $0x20] sm:$0xff]
  %v242 = vld [vmem:[%s0 + $0x28] sm:$0xff]
  %v243 = vld [vmem:[%s0 + $0x30] sm:$0xff]
  %v244 = vld [vmem:[%s0 + $0x38] sm:$0xff]
  %v245 = vld [vmem:[%s0 + $0x40] sm:$0xff]
  %v246 = vld [vmem:[%s0 + $0x48] sm:$0xff]
  %v247 = vld [vmem:[%s0 + $0x50] sm:$0xff]
  %v248 = vld [vmem:[%s0 + $0x58] sm:$0xff]
  %v249 = vld [vmem:[%s0 + $0x60] sm:$0xff]
  %v250 = vld [vmem:[%s0 + $0x68] sm:$0xff]
  %v251 = vld [vmem:[%s0 + $0x70] sm:$0xff]
  %v252 = vld [vmem:[%s0 + $0x78] sm:$0xff]
  %v253 = vld [vmem:[%s0 + $0x80] sm:$0xff]
  %v254 = vld [vmem:[%s0 + $0x88] sm:$0xff]
  %v255 = vld [vmem:[%s0 + $0x90] sm:$0xff]
  %v256 = vld [vmem:[%s0 + $0x98] sm:$0xff]
  %v257 = vld [vmem:[%s0 + $0xa0] sm:$0xff]
  %v258 = vld [vmem:[%s0 + $0xa8] sm:$0xff]
  %v259 = vld [vmem:[%s0 + $0xb0] sm:$0xff]
  %v260 = vld [vmem:[%s0 + $0xb8] sm:$0xff]
  %v261 = vld [vmem:[%s0 + $0xc0] sm:$0xff]
  %v262 = vld [vmem:[%s0 + $0xc8] sm:$0xff]
  %v263 = vld [vmem:[%s0 + $0xd0] sm:$0xff]
  %v264 = vld [vmem:[%s0 + $0xd8] sm:$0xff]
  %v265 = vld [vmem:[%s0 + $0xe0] sm:$0xff]
  %v266 = vld [vmem:[%s0 + $0xe8] sm:$0xff]
  %v267 = vld [vmem:[%s0 + $0xf0] sm:$0xff]
  %v268 = vld [vmem:[%s0 + $0xf8] sm:$0xff]
  %v269 = vld [vmem:[%s0 + $0x100] sm:$0xff]
  %v270 = vld [vmem:[%s0 + $0x108] sm:$0xff]
  %v271 = vld [vmem:[%s0 + $0x110] sm:$0xff]
  %v272 = vld [vmem:[%s0 + $0x118] sm:$0xff]
  %v273 = vld [vmem:[%s0 + $0x120] sm:$0xff]
  %v274 = vld [vmem:[%s0 + $0x128] sm:$0xff]
  %v275 = vld [vmem:[%s0 + $0x130] sm:$0xff]
  %v276 = vld [vmem:[%s0 + $0x138] sm:$0xff]
  %v277 = vld [vmem:[%s0 + $0x140] sm:$0xff]
  %v278 = vld [vmem:[%s0 + $0x148] sm:$0xff]
  %v279 = vld [vmem:[%s0 + $0x150] sm:$0xff]
  %v280 = vld [vmem:[%s0 + $0x158] sm:$0xff]
  %v281 = vld [vmem:[%s0 + $0x160] sm:$0xff]
  %v282 = vld [vmem:[%s0 + $0x168] sm:$0xff]
  %v283 = vld [vmem:[%s0 + $0x170] sm:$0xff]
  %v284 = vld [vmem:[%s0 + $0x178] sm:$0xff]
  %v285 = vld [vmem:[%s0 + $0x180] sm:$0xff]
  %v286 = vld [vmem:[%s0 + $0x188] sm:$0xff]
  %v287 = vld [vmem:[%s0 + $0x190] sm:$0xff]
  %v288 = vld [vmem:[%s0 + $0x198] sm:$0xff]
  %v289 = vld [vmem:[%s0 + $0x1a0] sm:$0xff]
  %v290 = vld [vmem:[%s0 + $0x1a8] sm:$0xff]
  %v291 = vld [vmem:[%s0 + $0x1b0] sm:$0xff]
  %vm292 = vcmask 457728
  %v294 = vsel %vm292, %v20, 0
  %v297 = vsel %vm292, %v24, 0
  %v300 = vsel %vm292, %v28, 0
  %v303 = vsel %vm292, %v32, 0
  %v306 = vsel %vm292, %v36, 0
  %v309 = vsel %vm292, %v40, 0
  %v312 = vsel %vm292, %v44, 0
  %v315 = vsel %vm292, %v48, 0
  %v318 = vsel %vm292, %v52, 0
  %v321 = vsel %vm292, %v56, 0
  %v324 = vsel %vm292, %v60, 0
  %v327 = vsel %vm292, %v64, 0
  %v330 = vsel %vm292, %v68, 0
  %v333 = vsel %vm292, %v72, 0
  %v336 = vsel %vm292, %v76, 0
  %v339 = vsel %vm292, %v80, 0
  %v342 = vsel %vm292, %v84, 0
  %v345 = vsel %vm292, %v88, 0
  %v348 = vsel %vm292, %v92, 0
  %v351 = vsel %vm292, %v96, 0
  %v354 = vsel %vm292, %v100, 0
  %v357 = vsel %vm292, %v104, 0
  %v360 = vsel %vm292, %v108, 0
  %v363 = vsel %vm292, %v112, 0
  %v366 = vsel %vm292, %v116, 0
  %v369 = vsel %vm292, %v120, 0
  %v372 = vsel %vm292, %v124, 0
  %v375 = vsel %vm292, %v128, 0
  %v378 = vsel %vm292, %v132, 0
  %v381 = vsel %vm292, %v136, 0
  %v384 = vsel %vm292, %v140, 0
  %v387 = vsel %vm292, %v144, 0
  %v390 = vsel %vm292, %v148, 0
  %v393 = vsel %vm292, %v152, 0
  %v396 = vsel %vm292, %v156, 0
  %v399 = vsel %vm292, %v160, 0
  %v402 = vsel %vm292, %v164, 0
  %v405 = vsel %vm292, %v168, 0
  %v408 = vsel %vm292, %v172, 0
  %v411 = vsel %vm292, %v176, 0
  %v414 = vsel %vm292, %v180, 0
  %v417 = vsel %vm292, %v184, 0
  %v420 = vsel %vm292, %v188, 0
  %v423 = vsel %vm292, %v192, 0
  %v426 = vsel %vm292, %v196, 0
  %v429 = vsel %vm292, %v200, 0
  %v432 = vsel %vm292, %v204, 0
  %v435 = vsel %vm292, %v208, 0
  %v438 = vsel %vm292, %v212, 0
  %v441 = vsel %vm292, %v216, 0
  %v444 = vsel %vm292, %v220, 0
  %v447 = vsel %vm292, %v224, 0
  %v450 = vsel %vm292, %v228, 0
  %v453 = vsel %vm292, %v232, 0
  %v456 = vsel %vm292, %v236, 0
  %458 = vmatpush.msra.mxu0 %v252
  %459 = vmatpush.msra.mxu0 %v251
  %460 = vmatpush.msra.mxu0 %v250
  %461 = vmatpush.msra.mxu0 %v249
  %462 = vmatpush.msra.mxu0 %v248
  %463 = vmatpush.msra.mxu0 %v247
  %464 = vmatpush.msra.mxu0 %v246
  %465 = vmatpush.msra.mxu0 %v245
  %466 = vmatpush.msra.mxu0 %v244
  %467 = vmatpush.msra.mxu0 %v243
  %468 = vmatpush.msra.mxu0 %v242
  %469 = vmatpush.msra.mxu0 %v241
  %470 = vmatpush.msra.mxu0 %v240
  %471 = vmatpush.msra.mxu0 %v239
  %472 = vmatpush.msra.mxu0 %v238
  %473 = vmatpush.msra.mxu0 %v237
  %474 = vmatmul.f32.gmra.mxu0 %v17
  %v475 = vpop.f32.mrf.mxu0
  %v476 = vadd.f32 0.0, %v475
  %477 = vmatmul.f32.gmra.mxu0 %v21
  %v478 = vpop.f32.mrf.mxu0
  %v479 = vadd.f32 0.0, %v478
  %480 = vmatmul.f32.gmra.mxu0 %v25
  %v481 = vpop.f32.mrf.mxu0
  %v482 = vadd.f32 0.0, %v481
  %483 = vmatmul.f32.gmra.mxu0 %v29
  %v484 = vpop.f32.mrf.mxu0
  %v485 = vadd.f32 0.0, %v484
  %486 = vmatmul.f32.gmra.mxu0 %v33
  %v487 = vpop.f32.mrf.mxu0
  %v488 = vadd.f32 0.0, %v487
  %489 = vmatmul.f32.gmra.mxu0 %v37
  %v490 = vpop.f32.mrf.mxu0
  %v491 = vadd.f32 0.0, %v490
  %492 = vmatmul.f32.gmra.mxu0 %v41
  %v493 = vpop.f32.mrf.mxu0
  %v494 = vadd.f32 0.0, %v493
  %495 = vmatmul.f32.gmra.mxu0 %v45
  %v496 = vpop.f32.mrf.mxu0
  %v497 = vadd.f32 0.0, %v496
  %498 = vmatmul.f32.gmra.mxu0 %v49
  %v499 = vpop.f32.mrf.mxu0
  %v500 = vadd.f32 0.0, %v499
  %501 = vmatmul.f32.gmra.mxu0 %v53
  %v502 = vpop.f32.mrf.mxu0
  %v503 = vadd.f32 0.0, %v502
  %504 = vmatmul.f32.gmra.mxu0 %v57
  %v505 = vpop.f32.mrf.mxu0
  %v506 = vadd.f32 0.0, %v505
  %507 = vmatmul.f32.gmra.mxu0 %v61
  %v508 = vpop.f32.mrf.mxu0
  %v509 = vadd.f32 0.0, %v508
  %510 = vmatmul.f32.gmra.mxu0 %v65
  %v511 = vpop.f32.mrf.mxu0
  %v512 = vadd.f32 0.0, %v511
  %513 = vmatmul.f32.gmra.mxu0 %v69
  %v514 = vpop.f32.mrf.mxu0
  %v515 = vadd.f32 0.0, %v514
  %516 = vmatmul.f32.gmra.mxu0 %v73
  %v517 = vpop.f32.mrf.mxu0
  %v518 = vadd.f32 0.0, %v517
  %519 = vmatmul.f32.gmra.mxu0 %v77
  %v520 = vpop.f32.mrf.mxu0
  %v521 = vadd.f32 0.0, %v520
  %522 = vmatmul.f32.gmra.mxu0 %v81
  %v523 = vpop.f32.mrf.mxu0
  %v524 = vadd.f32 0.0, %v523
  %525 = vmatmul.f32.gmra.mxu0 %v85
  %v526 = vpop.f32.mrf.mxu0
  %v527 = vadd.f32 0.0, %v526
  %528 = vmatmul.f32.gmra.mxu0 %v89
  %v529 = vpop.f32.mrf.mxu0
  %v530 = vadd.f32 0.0, %v529
  %531 = vmatmul.f32.gmra.mxu0 %v93
  %v532 = vpop.f32.mrf.mxu0
  %v533 = vadd.f32 0.0, %v532
  %534 = vmatmul.f32.gmra.mxu0 %v97
  %v535 = vpop.f32.mrf.mxu0
  %v536 = vadd.f32 0.0, %v535
  %537 = vmatmul.f32.gmra.mxu0 %v101
  %v538 = vpop.f32.mrf.mxu0
  %v539 = vadd.f32 0.0, %v538
  %540 = vmatmul.f32.gmra.mxu0 %v105
  %v541 = vpop.f32.mrf.mxu0
  %v542 = vadd.f32 0.0, %v541
  %543 = vmatmul.f32.gmra.mxu0 %v109
  %v544 = vpop.f32.mrf.mxu0
  %v545 = vadd.f32 0.0, %v544
  %546 = vmatmul.f32.gmra.mxu0 %v113
  %v547 = vpop.f32.mrf.mxu0
  %v548 = vadd.f32 0.0, %v547
  %549 = vmatmul.f32.gmra.mxu0 %v117
  %v550 = vpop.f32.mrf.mxu0
  %v551 = vadd.f32 0.0, %v550
  %552 = vmatmul.f32.gmra.mxu0 %v121
  %v553 = vpop.f32.mrf.mxu0
  %v554 = vadd.f32 0.0, %v553
  %555 = vmatmul.f32.gmra.mxu0 %v125
  %v556 = vpop.f32.mrf.mxu0
  %v557 = vadd.f32 0.0, %v556
  %558 = vmatmul.f32.gmra.mxu0 %v129
  %v559 = vpop.f32.mrf.mxu0
  %v560 = vadd.f32 0.0, %v559
  %561 = vmatmul.f32.gmra.mxu0 %v133
  %v562 = vpop.f32.mrf.mxu0
  %v563 = vadd.f32 0.0, %v562
  %564 = vmatmul.f32.gmra.mxu0 %v137
  %v565 = vpop.f32.mrf.mxu0
  %v566 = vadd.f32 0.0, %v565
  %567 = vmatmul.f32.gmra.mxu0 %v141
  %v568 = vpop.f32.mrf.mxu0
  %v569 = vadd.f32 0.0, %v568
  %570 = vmatmul.f32.gmra.mxu0 %v145
  %v571 = vpop.f32.mrf.mxu0
  %v572 = vadd.f32 0.0, %v571
  %573 = vmatmul.f32.gmra.mxu0 %v149
  %v574 = vpop.f32.mrf.mxu0
  %v575 = vadd.f32 0.0, %v574
  %576 = vmatmul.f32.gmra.mxu0 %v153
  %v577 = vpop.f32.mrf.mxu0
  %v578 = vadd.f32 0.0, %v577
  %579 = vmatmul.f32.gmra.mxu0 %v157
  %v580 = vpop.f32.mrf.mxu0
  %v581 = vadd.f32 0.0, %v580
  %582 = vmatmul.f32.gmra.mxu0 %v161
  %v583 = vpop.f32.mrf.mxu0
  %v584 = vadd.f32 0.0, %v583
  %585 = vmatmul.f32.gmra.mxu0 %v165
  %v586 = vpop.f32.mrf.mxu0
  %v587 = vadd.f32 0.0, %v586
  %588 = vmatmul.f32.gmra.mxu0 %v169
  %v589 = vpop.f32.mrf.mxu0
  %v590 = vadd.f32 0.0, %v589
  %591 = vmatmul.f32.gmra.mxu0 %v173
  %v592 = vpop.f32.mrf.mxu0
  %v593 = vadd.f32 0.0, %v592
  %594 = vmatmul.f32.gmra.mxu0 %v177
  %v595 = vpop.f32.mrf.mxu0
  %v596 = vadd.f32 0.0, %v595
  %597 = vmatmul.f32.gmra.mxu0 %v181
  %v598 = vpop.f32.mrf.mxu0
  %v599 = vadd.f32 0.0, %v598
  %600 = vmatmul.f32.gmra.mxu0 %v185
  %v601 = vpop.f32.mrf.mxu0
  %v602 = vadd.f32 0.0, %v601
  %603 = vmatmul.f32.gmra.mxu0 %v189
  %v604 = vpop.f32.mrf.mxu0
  %v605 = vadd.f32 0.0, %v604
  %606 = vmatmul.f32.gmra.mxu0 %v193
  %v607 = vpop.f32.mrf.mxu0
  %v608 = vadd.f32 0.0, %v607
  %609 = vmatmul.f32.gmra.mxu0 %v197
  %v610 = vpop.f32.mrf.mxu0
  %v611 = vadd.f32 0.0, %v610
  %612 = vmatmul.f32.gmra.mxu0 %v201
  %v613 = vpop.f32.mrf.mxu0
  %v614 = vadd.f32 0.0, %v613
  %615 = vmatmul.f32.gmra.mxu0 %v205
  %v616 = vpop.f32.mrf.mxu0
  %v617 = vadd.f32 0.0, %v616
  %618 = vmatmul.f32.gmra.mxu0 %v209
  %v619 = vpop.f32.mrf.mxu0
  %v620 = vadd.f32 0.0, %v619
  %621 = vmatmul.f32.gmra.mxu0 %v213
  %v622 = vpop.f32.mrf.mxu0
  %v623 = vadd.f32 0.0, %v622
  %624 = vmatmul.f32.gmra.mxu0 %v217
  %v625 = vpop.f32.mrf.mxu0
  %v626 = vadd.f32 0.0, %v625
  %627 = vmatmul.f32.gmra.mxu0 %v221
  %v628 = vpop.f32.mrf.mxu0
  %v629 = vadd.f32 0.0, %v628
  %630 = vmatmul.f32.gmra.mxu0 %v225
  %v631 = vpop.f32.mrf.mxu0
  %v632 = vadd.f32 0.0, %v631
  %633 = vmatmul.f32.gmra.mxu0 %v229
  %v634 = vpop.f32.mrf.mxu0
  %v635 = vadd.f32 0.0, %v634
  %636 = vmatmul.f32.gmra.mxu0 %v233
  %v637 = vpop.f32.mrf.mxu0
  %v638 = vadd.f32 0.0, %v637
  %639 = vdwg.mxu0
  %640 = vmatpush.msra.mxu0 %v268
  %641 = vmatpush.msra.mxu0 %v267
  %642 = vmatpush.msra.mxu0 %v266
  %643 = vmatpush.msra.mxu0 %v265
  %644 = vmatpush.msra.mxu0 %v264
  %645 = vmatpush.msra.mxu0 %v263
  %646 = vmatpush.msra.mxu0 %v262
  %647 = vmatpush.msra.mxu0 %v261
  %648 = vmatpush.msra.mxu0 %v260
  %649 = vmatpush.msra.mxu0 %v259
  %650 = vmatpush.msra.mxu0 %v258
  %651 = vmatpush.msra.mxu0 %v257
  %652 = vmatpush.msra.mxu0 %v256
  %653 = vmatpush.msra.mxu0 %v255
  %654 = vmatpush.msra.mxu0 %v254
  %655 = vmatpush.msra.mxu0 %v253
  %656 = vmatmul.f32.gmra.mxu0 %v18
  %v657 = vpop.f32.mrf.mxu0
  %v658 = vadd.f32 %v476, %v657
  %659 = vmatmul.f32.gmra.mxu0 %v22
  %v660 = vpop.f32.mrf.mxu0
  %v661 = vadd.f32 %v479, %v660
  %662 = vmatmul.f32.gmra.mxu0 %v26
  %v663 = vpop.f32.mrf.mxu0
  %v664 = vadd.f32 %v482, %v663
  %665 = vmatmul.f32.gmra.mxu0 %v30
  %v666 = vpop.f32.mrf.mxu0
  %v667 = vadd.f32 %v485, %v666
  %668 = vmatmul.f32.gmra.mxu0 %v34
  %v669 = vpop.f32.mrf.mxu0
  %v670 = vadd.f32 %v488, %v669
  %671 = vmatmul.f32.gmra.mxu0 %v38
  %v672 = vpop.f32.mrf.mxu0
  %v673 = vadd.f32 %v491, %v672
  %674 = vmatmul.f32.gmra.mxu0 %v42
  %v675 = vpop.f32.mrf.mxu0
  %v676 = vadd.f32 %v494, %v675
  %677 = vmatmul.f32.gmra.mxu0 %v46
  %v678 = vpop.f32.mrf.mxu0
  %v679 = vadd.f32 %v497, %v678
  %680 = vmatmul.f32.gmra.mxu0 %v50
  %v681 = vpop.f32.mrf.mxu0
  %v682 = vadd.f32 %v500, %v681
  %683 = vmatmul.f32.gmra.mxu0 %v54
  %v684 = vpop.f32.mrf.mxu0
  %v685 = vadd.f32 %v503, %v684
  %686 = vmatmul.f32.gmra.mxu0 %v58
  %v687 = vpop.f32.mrf.mxu0
  %v688 = vadd.f32 %v506, %v687
  %689 = vmatmul.f32.gmra.mxu0 %v62
  %v690 = vpop.f32.mrf.mxu0
  %v691 = vadd.f32 %v509, %v690
  %692 = vmatmul.f32.gmra.mxu0 %v66
  %v693 = vpop.f32.mrf.mxu0
  %v694 = vadd.f32 %v512, %v693
  %695 = vmatmul.f32.gmra.mxu0 %v70
  %v696 = vpop.f32.mrf.mxu0
  %v697 = vadd.f32 %v515, %v696
  %698 = vmatmul.f32.gmra.mxu0 %v74
  %v699 = vpop.f32.mrf.mxu0
  %v700 = vadd.f32 %v518, %v699
  %701 = vmatmul.f32.gmra.mxu0 %v78
  %v702 = vpop.f32.mrf.mxu0
  %v703 = vadd.f32 %v521, %v702
  %704 = vmatmul.f32.gmra.mxu0 %v82
  %v705 = vpop.f32.mrf.mxu0
  %v706 = vadd.f32 %v524, %v705
  %707 = vmatmul.f32.gmra.mxu0 %v86
  %v708 = vpop.f32.mrf.mxu0
  %v709 = vadd.f32 %v527, %v708
  %710 = vmatmul.f32.gmra.mxu0 %v90
  %v711 = vpop.f32.mrf.mxu0
  %v712 = vadd.f32 %v530, %v711
  %713 = vmatmul.f32.gmra.mxu0 %v94
  %v714 = vpop.f32.mrf.mxu0
  %v715 = vadd.f32 %v533, %v714
  %716 = vmatmul.f32.gmra.mxu0 %v98
  %v717 = vpop.f32.mrf.mxu0
  %v718 = vadd.f32 %v536, %v717
  %719 = vmatmul.f32.gmra.mxu0 %v102
  %v720 = vpop.f32.mrf.mxu0
  %v721 = vadd.f32 %v539, %v720
  %722 = vmatmul.f32.gmra.mxu0 %v106
  %v723 = vpop.f32.mrf.mxu0
  %v724 = vadd.f32 %v542, %v723
  %725 = vmatmul.f32.gmra.mxu0 %v110
  %v726 = vpop.f32.mrf.mxu0
  %v727 = vadd.f32 %v545, %v726
  %728 = vmatmul.f32.gmra.mxu0 %v114
  %v729 = vpop.f32.mrf.mxu0
  %v730 = vadd.f32 %v548, %v729
  %731 = vmatmul.f32.gmra.mxu0 %v118
  %v732 = vpop.f32.mrf.mxu0
  %v733 = vadd.f32 %v551, %v732
  %734 = vmatmul.f32.gmra.mxu0 %v122
  %v735 = vpop.f32.mrf.mxu0
  %v736 = vadd.f32 %v554, %v735
  %737 = vmatmul.f32.gmra.mxu0 %v126
  %v738 = vpop.f32.mrf.mxu0
  %v739 = vadd.f32 %v557, %v738
  %740 = vmatmul.f32.gmra.mxu0 %v130
  %v741 = vpop.f32.mrf.mxu0
  %v742 = vadd.f32 %v560, %v741
  %743 = vmatmul.f32.gmra.mxu0 %v134
  %v744 = vpop.f32.mrf.mxu0
  %v745 = vadd.f32 %v563, %v744
  %746 = vmatmul.f32.gmra.mxu0 %v138
  %v747 = vpop.f32.mrf.mxu0
  %v748 = vadd.f32 %v566, %v747
  %749 = vmatmul.f32.gmra.mxu0 %v142
  %v750 = vpop.f32.mrf.mxu0
  %v751 = vadd.f32 %v569, %v750
  %752 = vmatmul.f32.gmra.mxu0 %v146
  %v753 = vpop.f32.mrf.mxu0
  %v754 = vadd.f32 %v572, %v753
  %755 = vmatmul.f32.gmra.mxu0 %v150
  %v756 = vpop.f32.mrf.mxu0
  %v757 = vadd.f32 %v575, %v756
  %758 = vmatmul.f32.gmra.mxu0 %v154
  %v759 = vpop.f32.mrf.mxu0
  %v760 = vadd.f32 %v578, %v759
  %761 = vmatmul.f32.gmra.mxu0 %v158
  %v762 = vpop.f32.mrf.mxu0
  %v763 = vadd.f32 %v581, %v762
  %764 = vmatmul.f32.gmra.mxu0 %v162
  %v765 = vpop.f32.mrf.mxu0
  %v766 = vadd.f32 %v584, %v765
  %767 = vmatmul.f32.gmra.mxu0 %v166
  %v768 = vpop.f32.mrf.mxu0
  %v769 = vadd.f32 %v587, %v768
  %770 = vmatmul.f32.gmra.mxu0 %v170
  %v771 = vpop.f32.mrf.mxu0
  %v772 = vadd.f32 %v590, %v771
  %773 = vmatmul.f32.gmra.mxu0 %v174
  %v774 = vpop.f32.mrf.mxu0
  %v775 = vadd.f32 %v593, %v774
  %776 = vmatmul.f32.gmra.mxu0 %v178
  %v777 = vpop.f32.mrf.mxu0
  %v778 = vadd.f32 %v596, %v777
  %779 = vmatmul.f32.gmra.mxu0 %v182
  %v780 = vpop.f32.mrf.mxu0
  %v781 = vadd.f32 %v599, %v780
  %782 = vmatmul.f32.gmra.mxu0 %v186
  %v783 = vpop.f32.mrf.mxu0
  %v784 = vadd.f32 %v602, %v783
  %785 = vmatmul.f32.gmra.mxu0 %v190
  %v786 = vpop.f32.mrf.mxu0
  %v787 = vadd.f32 %v605, %v786
  %788 = vmatmul.f32.gmra.mxu0 %v194
  %v789 = vpop.f32.mrf.mxu0
  %v790 = vadd.f32 %v608, %v789
  %791 = vmatmul.f32.gmra.mxu0 %v198
  %v792 = vpop.f32.mrf.mxu0
  %v793 = vadd.f32 %v611, %v792
  %794 = vmatmul.f32.gmra.mxu0 %v202
  %v795 = vpop.f32.mrf.mxu0
  %v796 = vadd.f32 %v614, %v795
  %797 = vmatmul.f32.gmra.mxu0 %v206
  %v798 = vpop.f32.mrf.mxu0
  %v799 = vadd.f32 %v617, %v798
  %800 = vmatmul.f32.gmra.mxu0 %v210
  %v801 = vpop.f32.mrf.mxu0
  %v802 = vadd.f32 %v620, %v801
  %803 = vmatmul.f32.gmra.mxu0 %v214
  %v804 = vpop.f32.mrf.mxu0
  %v805 = vadd.f32 %v623, %v804
  %806 = vmatmul.f32.gmra.mxu0 %v218
  %v807 = vpop.f32.mrf.mxu0
  %v808 = vadd.f32 %v626, %v807
  %809 = vmatmul.f32.gmra.mxu0 %v222
  %v810 = vpop.f32.mrf.mxu0
  %v811 = vadd.f32 %v629, %v810
  %812 = vmatmul.f32.gmra.mxu0 %v226
  %v813 = vpop.f32.mrf.mxu0
  %v814 = vadd.f32 %v632, %v813
  %815 = vmatmul.f32.gmra.mxu0 %v230
  %v816 = vpop.f32.mrf.mxu0
  %v817 = vadd.f32 %v635, %v816
  %818 = vmatmul.f32.gmra.mxu0 %v234
  %v819 = vpop.f32.mrf.mxu0
  %v820 = vadd.f32 %v638, %v819
  %821 = vdwg.mxu0
  %822 = vmatpush.msra.mxu0 %v284
  %823 = vmatpush.msra.mxu0 %v283
  %824 = vmatpush.msra.mxu0 %v282
  %825 = vmatpush.msra.mxu0 %v281
  %826 = vmatpush.msra.mxu0 %v280
  %827 = vmatpush.msra.mxu0 %v279
  %828 = vmatpush.msra.mxu0 %v278
  %829 = vmatpush.msra.mxu0 %v277
  %830 = vmatpush.msra.mxu0 %v276
  %831 = vmatpush.msra.mxu0 %v275
  %832 = vmatpush.msra.mxu0 %v274
  %833 = vmatpush.msra.mxu0 %v273
  %834 = vmatpush.msra.mxu0 %v272
  %835 = vmatpush.msra.mxu0 %v271
  %836 = vmatpush.msra.mxu0 %v270
  %837 = vmatpush.msra.mxu0 %v269
  %838 = vmatmul.f32.gmra.mxu0 %v19
  %v839 = vpop.f32.mrf.mxu0
  %v840 = vadd.f32 %v658, %v839
  %841 = vmatmul.f32.gmra.mxu0 %v23
  %v842 = vpop.f32.mrf.mxu0
  %v843 = vadd.f32 %v661, %v842
  %844 = vmatmul.f32.gmra.mxu0 %v27
  %v845 = vpop.f32.mrf.mxu0
  %v846 = vadd.f32 %v664, %v845
  %847 = vmatmul.f32.gmra.mxu0 %v31
  %v848 = vpop.f32.mrf.mxu0
  %v849 = vadd.f32 %v667, %v848
  %850 = vmatmul.f32.gmra.mxu0 %v35
  %v851 = vpop.f32.mrf.mxu0
  %v852 = vadd.f32 %v670, %v851
  %853 = vmatmul.f32.gmra.mxu0 %v39
  %v854 = vpop.f32.mrf.mxu0
  %v855 = vadd.f32 %v673, %v854
  %856 = vmatmul.f32.gmra.mxu0 %v43
  %v857 = vpop.f32.mrf.mxu0
  %v858 = vadd.f32 %v676, %v857
  %859 = vmatmul.f32.gmra.mxu0 %v47
  %v860 = vpop.f32.mrf.mxu0
  %v861 = vadd.f32 %v679, %v860
  %862 = vmatmul.f32.gmra.mxu0 %v51
  %v863 = vpop.f32.mrf.mxu0
  %v864 = vadd.f32 %v682, %v863
  %865 = vmatmul.f32.gmra.mxu0 %v55
  %v866 = vpop.f32.mrf.mxu0
  %v867 = vadd.f32 %v685, %v866
  %868 = vmatmul.f32.gmra.mxu0 %v59
  %v869 = vpop.f32.mrf.mxu0
  %v870 = vadd.f32 %v688, %v869
  %871 = vmatmul.f32.gmra.mxu0 %v63
  %v872 = vpop.f32.mrf.mxu0
  %v873 = vadd.f32 %v691, %v872
  %874 = vmatmul.f32.gmra.mxu0 %v67
  %v875 = vpop.f32.mrf.mxu0
  %v876 = vadd.f32 %v694, %v875
  %877 = vmatmul.f32.gmra.mxu0 %v71
  %v878 = vpop.f32.mrf.mxu0
  %v879 = vadd.f32 %v697, %v878
  %880 = vmatmul.f32.gmra.mxu0 %v75
  %v881 = vpop.f32.mrf.mxu0
  %v882 = vadd.f32 %v700, %v881
  %883 = vmatmul.f32.gmra.mxu0 %v79
  %v884 = vpop.f32.mrf.mxu0
  %v885 = vadd.f32 %v703, %v884
  %886 = vmatmul.f32.gmra.mxu0 %v83
  %v887 = vpop.f32.mrf.mxu0
  %v888 = vadd.f32 %v706, %v887
  %889 = vmatmul.f32.gmra.mxu0 %v87
  %v890 = vpop.f32.mrf.mxu0
  %v891 = vadd.f32 %v709, %v890
  %892 = vmatmul.f32.gmra.mxu0 %v91
  %v893 = vpop.f32.mrf.mxu0
  %v894 = vadd.f32 %v712, %v893
  %895 = vmatmul.f32.gmra.mxu0 %v95
  %v896 = vpop.f32.mrf.mxu0
  %v897 = vadd.f32 %v715, %v896
  %898 = vmatmul.f32.gmra.mxu0 %v99
  %v899 = vpop.f32.mrf.mxu0
  %v900 = vadd.f32 %v718, %v899
  %901 = vmatmul.f32.gmra.mxu0 %v103
  %v902 = vpop.f32.mrf.mxu0
  %v903 = vadd.f32 %v721, %v902
  %904 = vmatmul.f32.gmra.mxu0 %v107
  %v905 = vpop.f32.mrf.mxu0
  %v906 = vadd.f32 %v724, %v905
  %907 = vmatmul.f32.gmra.mxu0 %v111
  %v908 = vpop.f32.mrf.mxu0
  %v909 = vadd.f32 %v727, %v908
  %910 = vmatmul.f32.gmra.mxu0 %v115
  %v911 = vpop.f32.mrf.mxu0
  %v912 = vadd.f32 %v730, %v911
  %913 = vmatmul.f32.gmra.mxu0 %v119
  %v914 = vpop.f32.mrf.mxu0
  %v915 = vadd.f32 %v733, %v914
  %916 = vmatmul.f32.gmra.mxu0 %v123
  %v917 = vpop.f32.mrf.mxu0
  %v918 = vadd.f32 %v736, %v917
  %919 = vmatmul.f32.gmra.mxu0 %v127
  %v920 = vpop.f32.mrf.mxu0
  %v921 = vadd.f32 %v739, %v920
  %922 = vmatmul.f32.gmra.mxu0 %v131
  %v923 = vpop.f32.mrf.mxu0
  %v924 = vadd.f32 %v742, %v923
  %925 = vmatmul.f32.gmra.mxu0 %v135
  %v926 = vpop.f32.mrf.mxu0
  %v927 = vadd.f32 %v745, %v926
  %928 = vmatmul.f32.gmra.mxu0 %v139
  %v929 = vpop.f32.mrf.mxu0
  %v930 = vadd.f32 %v748, %v929
  %931 = vmatmul.f32.gmra.mxu0 %v143
  %v932 = vpop.f32.mrf.mxu0
  %v933 = vadd.f32 %v751, %v932
  %934 = vmatmul.f32.gmra.mxu0 %v147
  %v935 = vpop.f32.mrf.mxu0
  %v936 = vadd.f32 %v754, %v935
  %937 = vmatmul.f32.gmra.mxu0 %v151
  %v938 = vpop.f32.mrf.mxu0
  %v939 = vadd.f32 %v757, %v938
  %940 = vmatmul.f32.gmra.mxu0 %v155
  %v941 = vpop.f32.mrf.mxu0
  %v942 = vadd.f32 %v760, %v941
  %943 = vmatmul.f32.gmra.mxu0 %v159
  %v944 = vpop.f32.mrf.mxu0
  %v945 = vadd.f32 %v763, %v944
  %946 = vmatmul.f32.gmra.mxu0 %v163
  %v947 = vpop.f32.mrf.mxu0
  %v948 = vadd.f32 %v766, %v947
  %949 = vmatmul.f32.gmra.mxu0 %v167
  %v950 = vpop.f32.mrf.mxu0
  %v951 = vadd.f32 %v769, %v950
  %952 = vmatmul.f32.gmra.mxu0 %v171
  %v953 = vpop.f32.mrf.mxu0
  %v954 = vadd.f32 %v772, %v953
  %955 = vmatmul.f32.gmra.mxu0 %v175
  %v956 = vpop.f32.mrf.mxu0
  %v957 = vadd.f32 %v775, %v956
  %958 = vmatmul.f32.gmra.mxu0 %v179
  %v959 = vpop.f32.mrf.mxu0
  %v960 = vadd.f32 %v778, %v959
  %961 = vmatmul.f32.gmra.mxu0 %v183
  %v962 = vpop.f32.mrf.mxu0
  %v963 = vadd.f32 %v781, %v962
  %964 = vmatmul.f32.gmra.mxu0 %v187
  %v965 = vpop.f32.mrf.mxu0
  %v966 = vadd.f32 %v784, %v965
  %967 = vmatmul.f32.gmra.mxu0 %v191
  %v968 = vpop.f32.mrf.mxu0
  %v969 = vadd.f32 %v787, %v968
  %970 = vmatmul.f32.gmra.mxu0 %v195
  %v971 = vpop.f32.mrf.mxu0
  %v972 = vadd.f32 %v790, %v971
  %973 = vmatmul.f32.gmra.mxu0 %v199
  %v974 = vpop.f32.mrf.mxu0
  %v975 = vadd.f32 %v793, %v974
  %976 = vmatmul.f32.gmra.mxu0 %v203
  %v977 = vpop.f32.mrf.mxu0
  %v978 = vadd.f32 %v796, %v977
  %979 = vmatmul.f32.gmra.mxu0 %v207
  %v980 = vpop.f32.mrf.mxu0
  %v981 = vadd.f32 %v799, %v980
  %982 = vmatmul.f32.gmra.mxu0 %v211
  %v983 = vpop.f32.mrf.mxu0
  %v984 = vadd.f32 %v802, %v983
  %985 = vmatmul.f32.gmra.mxu0 %v215
  %v986 = vpop.f32.mrf.mxu0
  %v987 = vadd.f32 %v805, %v986
  %988 = vmatmul.f32.gmra.mxu0 %v219
  %v989 = vpop.f32.mrf.mxu0
  %v990 = vadd.f32 %v808, %v989
  %991 = vmatmul.f32.gmra.mxu0 %v223
  %v992 = vpop.f32.mrf.mxu0
  %v993 = vadd.f32 %v811, %v992
  %994 = vmatmul.f32.gmra.mxu0 %v227
  %v995 = vpop.f32.mrf.mxu0
  %v996 = vadd.f32 %v814, %v995
  %997 = vmatmul.f32.gmra.mxu0 %v231
  %v998 = vpop.f32.mrf.mxu0
  %v999 = vadd.f32 %v817, %v998
  %1000 = vmatmul.f32.gmra.mxu0 %v235
  %v1001 = vpop.f32.mrf.mxu0
  %v1002 = vadd.f32 %v820, %v1001
  %1003 = vdwg.mxu0
  %1004 = vmatpush.msra.mxu0 0.0
  %1005 = vmatpush.msra.mxu0 0.0
  %1006 = vmatpush.msra.mxu0 0.0
  %1007 = vmatpush.msra.mxu0 0.0
  %1008 = vmatpush.msra.mxu0 0.0
  %1009 = vmatpush.msra.mxu0 0.0
  %1010 = vmatpush.msra.mxu0 0.0
  %1011 = vmatpush.msra.mxu0 0.0
  %1012 = vmatpush.msra.mxu0 0.0
  %1013 = vmatpush.msra.mxu0 %v291
  %1014 = vmatpush.msra.mxu0 %v290
  %1015 = vmatpush.msra.mxu0 %v289
  %1016 = vmatpush.msra.mxu0 %v288
  %1017 = vmatpush.msra.mxu0 %v287
  %1018 = vmatpush.msra.mxu0 %v286
  %1019 = vmatpush.msra.mxu0 %v285
  %1020 = vmatmul.f32.gmra.mxu0 %v294
  %v1021 = vpop.f32.mrf.mxu0
  %v1022 = vadd.f32 %v840, %v1021
  %1023 = vmatmul.f32.gmra.mxu0 %v297
  %v1024 = vpop.f32.mrf.mxu0
  %v1025 = vadd.f32 %v843, %v1024
  %1026 = vmatmul.f32.gmra.mxu0 %v300
  %v1027 = vpop.f32.mrf.mxu0
  %v1028 = vadd.f32 %v846, %v1027
  %1029 = vmatmul.f32.gmra.mxu0 %v303
  %v1030 = vpop.f32.mrf.mxu0
  %v1031 = vadd.f32 %v849, %v1030
  %1032 = vmatmul.f32.gmra.mxu0 %v306
  %v1033 = vpop.f32.mrf.mxu0
  %v1034 = vadd.f32 %v852, %v1033
  %1035 = vmatmul.f32.gmra.mxu0 %v309
  %v1036 = vpop.f32.mrf.mxu0
  %v1037 = vadd.f32 %v855, %v1036
  %1038 = vmatmul.f32.gmra.mxu0 %v312
  %v1039 = vpop.f32.mrf.mxu0
  %v1040 = vadd.f32 %v858, %v1039
  %1041 = vmatmul.f32.gmra.mxu0 %v315
  %v1042 = vpop.f32.mrf.mxu0
  %v1043 = vadd.f32 %v861, %v1042
  %1044 = vmatmul.f32.gmra.mxu0 %v318
  %v1045 = vpop.f32.mrf.mxu0
  %v1046 = vadd.f32 %v864, %v1045
  %1047 = vmatmul.f32.gmra.mxu0 %v321
  %v1048 = vpop.f32.mrf.mxu0
  %v1049 = vadd.f32 %v867, %v1048
  %1050 = vmatmul.f32.gmra.mxu0 %v324
  %v1051 = vpop.f32.mrf.mxu0
  %v1052 = vadd.f32 %v870, %v1051
  %1053 = vmatmul.f32.gmra.mxu0 %v327
  %v1054 = vpop.f32.mrf.mxu0
  %v1055 = vadd.f32 %v873, %v1054
  %1056 = vmatmul.f32.gmra.mxu0 %v330
  %v1057 = vpop.f32.mrf.mxu0
  %v1058 = vadd.f32 %v876, %v1057
  %1059 = vmatmul.f32.gmra.mxu0 %v333
  %v1060 = vpop.f32.mrf.mxu0
  %v1061 = vadd.f32 %v879, %v1060
  %1062 = vmatmul.f32.gmra.mxu0 %v336
  %v1063 = vpop.f32.mrf.mxu0
  %v1064 = vadd.f32 %v882, %v1063
  %1065 = vmatmul.f32.gmra.mxu0 %v339
  %v1066 = vpop.f32.mrf.mxu0
  %v1067 = vadd.f32 %v885, %v1066
  %1068 = vmatmul.f32.gmra.mxu0 %v342
  %v1069 = vpop.f32.mrf.mxu0
  %v1070 = vadd.f32 %v888, %v1069
  %1071 = vmatmul.f32.gmra.mxu0 %v345
  %v1072 = vpop.f32.mrf.mxu0
  %v1073 = vadd.f32 %v891, %v1072
  %1074 = vmatmul.f32.gmra.mxu0 %v348
  %v1075 = vpop.f32.mrf.mxu0
  %v1076 = vadd.f32 %v894, %v1075
  %1077 = vmatmul.f32.gmra.mxu0 %v351
  %v1078 = vpop.f32.mrf.mxu0
  %v1079 = vadd.f32 %v897, %v1078
  %1080 = vmatmul.f32.gmra.mxu0 %v354
  %v1081 = vpop.f32.mrf.mxu0
  %v1082 = vadd.f32 %v900, %v1081
  %1083 = vmatmul.f32.gmra.mxu0 %v357
  %v1084 = vpop.f32.mrf.mxu0
  %v1085 = vadd.f32 %v903, %v1084
  %1086 = vmatmul.f32.gmra.mxu0 %v360
  %v1087 = vpop.f32.mrf.mxu0
  %v1088 = vadd.f32 %v906, %v1087
  %1089 = vmatmul.f32.gmra.mxu0 %v363
  %v1090 = vpop.f32.mrf.mxu0
  %v1091 = vadd.f32 %v909, %v1090
  %1092 = vmatmul.f32.gmra.mxu0 %v366
  %v1093 = vpop.f32.mrf.mxu0
  %v1094 = vadd.f32 %v912, %v1093
  %1095 = vmatmul.f32.gmra.mxu0 %v369
  %v1096 = vpop.f32.mrf.mxu0
  %v1097 = vadd.f32 %v915, %v1096
  %1098 = vmatmul.f32.gmra.mxu0 %v372
  %v1099 = vpop.f32.mrf.mxu0
  %v1100 = vadd.f32 %v918, %v1099
  %1101 = vmatmul.f32.gmra.mxu0 %v375
  %v1102 = vpop.f32.mrf.mxu0
  %v1103 = vadd.f32 %v921, %v1102
  %1104 = vmatmul.f32.gmra.mxu0 %v378
  %v1105 = vpop.f32.mrf.mxu0
  %v1106 = vadd.f32 %v924, %v1105
  %1107 = vmatmul.f32.gmra.mxu0 %v381
  %v1108 = vpop.f32.mrf.mxu0
  %v1109 = vadd.f32 %v927, %v1108
  %1110 = vmatmul.f32.gmra.mxu0 %v384
  %v1111 = vpop.f32.mrf.mxu0
  %v1112 = vadd.f32 %v930, %v1111
  %1113 = vmatmul.f32.gmra.mxu0 %v387
  %v1114 = vpop.f32.mrf.mxu0
  %v1115 = vadd.f32 %v933, %v1114
  %1116 = vmatmul.f32.gmra.mxu0 %v390
  %v1117 = vpop.f32.mrf.mxu0
  %v1118 = vadd.f32 %v936, %v1117
  %1119 = vmatmul.f32.gmra.mxu0 %v393
  %v1120 = vpop.f32.mrf.mxu0
  %v1121 = vadd.f32 %v939, %v1120
  %1122 = vmatmul.f32.gmra.mxu0 %v396
  %v1123 = vpop.f32.mrf.mxu0
  %v1124 = vadd.f32 %v942, %v1123
  %1125 = vmatmul.f32.gmra.mxu0 %v399
  %v1126 = vpop.f32.mrf.mxu0
  %v1127 = vadd.f32 %v945, %v1126
  %1128 = vmatmul.f32.gmra.mxu0 %v402
  %v1129 = vpop.f32.mrf.mxu0
  %v1130 = vadd.f32 %v948, %v1129
  %1131 = vmatmul.f32.gmra.mxu0 %v405
  %v1132 = vpop.f32.mrf.mxu0
  %v1133 = vadd.f32 %v951, %v1132
  %1134 = vmatmul.f32.gmra.mxu0 %v408
  %v1135 = vpop.f32.mrf.mxu0
  %v1136 = vadd.f32 %v954, %v1135
  %1137 = vmatmul.f32.gmra.mxu0 %v411
  %v1138 = vpop.f32.mrf.mxu0
  %v1139 = vadd.f32 %v957, %v1138
  %1140 = vmatmul.f32.gmra.mxu0 %v414
  %v1141 = vpop.f32.mrf.mxu0
  %v1142 = vadd.f32 %v960, %v1141
  %1143 = vmatmul.f32.gmra.mxu0 %v417
  %v1144 = vpop.f32.mrf.mxu0
  %v1145 = vadd.f32 %v963, %v1144
  %1146 = vmatmul.f32.gmra.mxu0 %v420
  %v1147 = vpop.f32.mrf.mxu0
  %v1148 = vadd.f32 %v966, %v1147
  %1149 = vmatmul.f32.gmra.mxu0 %v423
  %v1150 = vpop.f32.mrf.mxu0
  %v1151 = vadd.f32 %v969, %v1150
  %1152 = vmatmul.f32.gmra.mxu0 %v426
  %v1153 = vpop.f32.mrf.mxu0
  %v1154 = vadd.f32 %v972, %v1153
  %1155 = vmatmul.f32.gmra.mxu0 %v429
  %v1156 = vpop.f32.mrf.mxu0
  %v1157 = vadd.f32 %v975, %v1156
  %1158 = vmatmul.f32.gmra.mxu0 %v432
  %v1159 = vpop.f32.mrf.mxu0
  %v1160 = vadd.f32 %v978, %v1159
  %1161 = vmatmul.f32.gmra.mxu0 %v435
  %v1162 = vpop.f32.mrf.mxu0
  %v1163 = vadd.f32 %v981, %v1162
  %1164 = vmatmul.f32.gmra.mxu0 %v438
  %v1165 = vpop.f32.mrf.mxu0
  %v1166 = vadd.f32 %v984, %v1165
  %1167 = vmatmul.f32.gmra.mxu0 %v441
  %v1168 = vpop.f32.mrf.mxu0
  %v1169 = vadd.f32 %v987, %v1168
  %1170 = vmatmul.f32.gmra.mxu0 %v444
  %v1171 = vpop.f32.mrf.mxu0
  %v1172 = vadd.f32 %v990, %v1171
  %1173 = vmatmul.f32.gmra.mxu0 %v447
  %v1174 = vpop.f32.mrf.mxu0
  %v1175 = vadd.f32 %v993, %v1174
  %1176 = vmatmul.f32.gmra.mxu0 %v450
  %v1177 = vpop.f32.mrf.mxu0
  %v1178 = vadd.f32 %v996, %v1177
  %1179 = vmatmul.f32.gmra.mxu0 %v453
  %v1180 = vpop.f32.mrf.mxu0
  %v1181 = vadd.f32 %v999, %v1180
  %1182 = vmatmul.f32.gmra.mxu0 %v456
  %v1183 = vpop.f32.mrf.mxu0
  %v1184 = vadd.f32 %v1002, %v1183
  %1185 = vdwg.mxu0
  %vm1186 = vcmask 400384
  %v1187 = vsel %vm1186, %v1022, 0.0
  %1188 = vadd.xlane.f32.xlu0 %v1187
  %v1189 = vpop.xlane.xlu0 %1188
  %v1190 = vsel %vm1186, %v1025, 0.0
  %1191 = vadd.xlane.f32.xlu0 %v1190
  %v1192 = vpop.xlane.xlu0 %1191
  %v1193 = vsel %vm1186, %v1028, 0.0
  %1194 = vadd.xlane.f32.xlu0 %v1193
  %v1195 = vpop.xlane.xlu0 %1194
  %v1196 = vsel %vm1186, %v1031, 0.0
  %1197 = vadd.xlane.f32.xlu0 %v1196
  %v1198 = vpop.xlane.xlu0 %1197
  %v1199 = vsel %vm1186, %v1034, 0.0
  %1200 = vadd.xlane.f32.xlu0 %v1199
  %v1201 = vpop.xlane.xlu0 %1200
  %v1202 = vsel %vm1186, %v1037, 0.0
  %1203 = vadd.xlane.f32.xlu0 %v1202
  %v1204 = vpop.xlane.xlu0 %1203
  %v1205 = vsel %vm1186, %v1040, 0.0
  %1206 = vadd.xlane.f32.xlu0 %v1205
  %v1207 = vpop.xlane.xlu0 %1206
  %v1208 = vsel %vm1186, %v1043, 0.0
  %1209 = vadd.xlane.f32.xlu0 %v1208
  %v1210 = vpop.xlane.xlu0 %1209
  %v1211 = vsel %vm1186, %v1046, 0.0
  %1212 = vadd.xlane.f32.xlu0 %v1211
  %v1213 = vpop.xlane.xlu0 %1212
  %v1214 = vsel %vm1186, %v1049, 0.0
  %1215 = vadd.xlane.f32.xlu0 %v1214
  %v1216 = vpop.xlane.xlu0 %1215
  %v1217 = vsel %vm1186, %v1052, 0.0
  %1218 = vadd.xlane.f32.xlu0 %v1217
  %v1219 = vpop.xlane.xlu0 %1218
  %v1220 = vsel %vm1186, %v1055, 0.0
  %1221 = vadd.xlane.f32.xlu0 %v1220
  %v1222 = vpop.xlane.xlu0 %1221
  %v1223 = vsel %vm1186, %v1058, 0.0
  %1224 = vadd.xlane.f32.xlu0 %v1223
  %v1225 = vpop.xlane.xlu0 %1224
  %v1226 = vsel %vm1186, %v1061, 0.0
  %1227 = vadd.xlane.f32.xlu0 %v1226
  %v1228 = vpop.xlane.xlu0 %1227
  %v1229 = vsel %vm1186, %v1064, 0.0
  %1230 = vadd.xlane.f32.xlu0 %v1229
  %v1231 = vpop.xlane.xlu0 %1230
  %v1232 = vsel %vm1186, %v1067, 0.0
  %1233 = vadd.xlane.f32.xlu0 %v1232
  %v1234 = vpop.xlane.xlu0 %1233
  %v1235 = vsel %vm1186, %v1070, 0.0
  %1236 = vadd.xlane.f32.xlu0 %v1235
  %v1237 = vpop.xlane.xlu0 %1236
  %v1238 = vsel %vm1186, %v1073, 0.0
  %1239 = vadd.xlane.f32.xlu0 %v1238
  %v1240 = vpop.xlane.xlu0 %1239
  %v1241 = vsel %vm1186, %v1076, 0.0
  %1242 = vadd.xlane.f32.xlu0 %v1241
  %v1243 = vpop.xlane.xlu0 %1242
  %v1244 = vsel %vm1186, %v1079, 0.0
  %1245 = vadd.xlane.f32.xlu0 %v1244
  %v1246 = vpop.xlane.xlu0 %1245
  %v1247 = vsel %vm1186, %v1082, 0.0
  %1248 = vadd.xlane.f32.xlu0 %v1247
  %v1249 = vpop.xlane.xlu0 %1248
  %v1250 = vsel %vm1186, %v1085, 0.0
  %1251 = vadd.xlane.f32.xlu0 %v1250
  %v1252 = vpop.xlane.xlu0 %1251
  %v1253 = vsel %vm1186, %v1088, 0.0
  %1254 = vadd.xlane.f32.xlu0 %v1253
  %v1255 = vpop.xlane.xlu0 %1254
  %v1256 = vsel %vm1186, %v1091, 0.0
  %1257 = vadd.xlane.f32.xlu0 %v1256
  %v1258 = vpop.xlane.xlu0 %1257
  %v1259 = vsel %vm1186, %v1094, 0.0
  %1260 = vadd.xlane.f32.xlu0 %v1259
  %v1261 = vpop.xlane.xlu0 %1260
  %v1262 = vsel %vm1186, %v1097, 0.0
  %1263 = vadd.xlane.f32.xlu0 %v1262
  %v1264 = vpop.xlane.xlu0 %1263
  %v1265 = vsel %vm1186, %v1100, 0.0
  %1266 = vadd.xlane.f32.xlu0 %v1265
  %v1267 = vpop.xlane.xlu0 %1266
  %v1268 = vsel %vm1186, %v1103, 0.0
  %1269 = vadd.xlane.f32.xlu0 %v1268
  %v1270 = vpop.xlane.xlu0 %1269
  %v1271 = vsel %vm1186, %v1106, 0.0
  %1272 = vadd.xlane.f32.xlu0 %v1271
  %v1273 = vpop.xlane.xlu0 %1272
  %v1274 = vsel %vm1186, %v1109, 0.0
  %1275 = vadd.xlane.f32.xlu0 %v1274
  %v1276 = vpop.xlane.xlu0 %1275
  %v1277 = vsel %vm1186, %v1112, 0.0
  %1278 = vadd.xlane.f32.xlu0 %v1277
  %v1279 = vpop.xlane.xlu0 %1278
  %v1280 = vsel %vm1186, %v1115, 0.0
  %1281 = vadd.xlane.f32.xlu0 %v1280
  %v1282 = vpop.xlane.xlu0 %1281
  %v1283 = vsel %vm1186, %v1118, 0.0
  %1284 = vadd.xlane.f32.xlu0 %v1283
  %v1285 = vpop.xlane.xlu0 %1284
  %v1286 = vsel %vm1186, %v1121, 0.0
  %1287 = vadd.xlane.f32.xlu0 %v1286
  %v1288 = vpop.xlane.xlu0 %1287
  %v1289 = vsel %vm1186, %v1124, 0.0
  %1290 = vadd.xlane.f32.xlu0 %v1289
  %v1291 = vpop.xlane.xlu0 %1290
  %v1292 = vsel %vm1186, %v1127, 0.0
  %1293 = vadd.xlane.f32.xlu0 %v1292
  %v1294 = vpop.xlane.xlu0 %1293
  %v1295 = vsel %vm1186, %v1130, 0.0
  %1296 = vadd.xlane.f32.xlu0 %v1295
  %v1297 = vpop.xlane.xlu0 %1296
  %v1298 = vsel %vm1186, %v1133, 0.0
  %1299 = vadd.xlane.f32.xlu0 %v1298
  %v1300 = vpop.xlane.xlu0 %1299
  %v1301 = vsel %vm1186, %v1136, 0.0
  %1302 = vadd.xlane.f32.xlu0 %v1301
  %v1303 = vpop.xlane.xlu0 %1302
  %v1304 = vsel %vm1186, %v1139, 0.0
  %1305 = vadd.xlane.f32.xlu0 %v1304
  %v1306 = vpop.xlane.xlu0 %1305
  %v1307 = vsel %vm1186, %v1142, 0.0
  %1308 = vadd.xlane.f32.xlu0 %v1307
  %v1309 = vpop.xlane.xlu0 %1308
  %v1310 = vsel %vm1186, %v1145, 0.0
  %1311 = vadd.xlane.f32.xlu0 %v1310
  %v1312 = vpop.xlane.xlu0 %1311
  %v1313 = vsel %vm1186, %v1148, 0.0
  %1314 = vadd.xlane.f32.xlu0 %v1313
  %v1315 = vpop.xlane.xlu0 %1314
  %v1316 = vsel %vm1186, %v1151, 0.0
  %1317 = vadd.xlane.f32.xlu0 %v1316
  %v1318 = vpop.xlane.xlu0 %1317
  %v1319 = vsel %vm1186, %v1154, 0.0
  %1320 = vadd.xlane.f32.xlu0 %v1319
  %v1321 = vpop.xlane.xlu0 %1320
  %v1322 = vsel %vm1186, %v1157, 0.0
  %1323 = vadd.xlane.f32.xlu0 %v1322
  %v1324 = vpop.xlane.xlu0 %1323
  %v1325 = vsel %vm1186, %v1160, 0.0
  %1326 = vadd.xlane.f32.xlu0 %v1325
  %v1327 = vpop.xlane.xlu0 %1326
  %v1328 = vsel %vm1186, %v1163, 0.0
  %1329 = vadd.xlane.f32.xlu0 %v1328
  %v1330 = vpop.xlane.xlu0 %1329
  %v1331 = vsel %vm1186, %v1166, 0.0
  %1332 = vadd.xlane.f32.xlu0 %v1331
  %v1333 = vpop.xlane.xlu0 %1332
  %v1334 = vsel %vm1186, %v1169, 0.0
  %1335 = vadd.xlane.f32.xlu0 %v1334
  %v1336 = vpop.xlane.xlu0 %1335
  %v1337 = vsel %vm1186, %v1172, 0.0
  %1338 = vadd.xlane.f32.xlu0 %v1337
  %v1339 = vpop.xlane.xlu0 %1338
  %v1340 = vsel %vm1186, %v1175, 0.0
  %1341 = vadd.xlane.f32.xlu0 %v1340
  %v1342 = vpop.xlane.xlu0 %1341
  %v1343 = vsel %vm1186, %v1178, 0.0
  %1344 = vadd.xlane.f32.xlu0 %v1343
  %v1345 = vpop.xlane.xlu0 %1344
  %v1346 = vsel %vm1186, %v1181, 0.0
  %1347 = vadd.xlane.f32.xlu0 %v1346
  %v1348 = vpop.xlane.xlu0 %1347
  %v1349 = vsel %vm1186, %v1184, 0.0
  %1350 = vadd.xlane.f32.xlu0 %v1349
  %v1351 = vpop.xlane.xlu0 %1350
  %v1352 = vmul.f32 %v1022, %v1022
  %v1353 = vmul.f32 %v1025, %v1025
  %v1354 = vmul.f32 %v1028, %v1028
  %v1355 = vmul.f32 %v1031, %v1031
  %v1356 = vmul.f32 %v1034, %v1034
  %v1357 = vmul.f32 %v1037, %v1037
  %v1358 = vmul.f32 %v1040, %v1040
  %v1359 = vmul.f32 %v1043, %v1043
  %v1360 = vmul.f32 %v1046, %v1046
  %v1361 = vmul.f32 %v1049, %v1049
  %v1362 = vmul.f32 %v1052, %v1052
  %v1363 = vmul.f32 %v1055, %v1055
  %v1364 = vmul.f32 %v1058, %v1058
  %v1365 = vmul.f32 %v1061, %v1061
  %v1366 = vmul.f32 %v1064, %v1064
  %v1367 = vmul.f32 %v1067, %v1067
  %v1368 = vmul.f32 %v1070, %v1070
  %v1369 = vmul.f32 %v1073, %v1073
  %v1370 = vmul.f32 %v1076, %v1076
  %v1371 = vmul.f32 %v1079, %v1079
  %v1372 = vmul.f32 %v1082, %v1082
  %v1373 = vmul.f32 %v1085, %v1085
  %v1374 = vmul.f32 %v1088, %v1088
  %v1375 = vmul.f32 %v1091, %v1091
  %v1376 = vmul.f32 %v1094, %v1094
  %v1377 = vmul.f32 %v1097, %v1097
  %v1378 = vmul.f32 %v1100, %v1100
  %v1379 = vmul.f32 %v1103, %v1103
  %v1380 = vmul.f32 %v1106, %v1106
  %v1381 = vmul.f32 %v1109, %v1109
  %v1382 = vmul.f32 %v1112, %v1112
  %v1383 = vmul.f32 %v1115, %v1115
  %v1384 = vmul.f32 %v1118, %v1118
  %v1385 = vmul.f32 %v1121, %v1121
  %v1386 = vmul.f32 %v1124, %v1124
  %v1387 = vmul.f32 %v1127, %v1127
  %v1388 = vmul.f32 %v1130, %v1130
  %v1389 = vmul.f32 %v1133, %v1133
  %v1390 = vmul.f32 %v1136, %v1136
  %v1391 = vmul.f32 %v1139, %v1139
  %v1392 = vmul.f32 %v1142, %v1142
  %v1393 = vmul.f32 %v1145, %v1145
  %v1394 = vmul.f32 %v1148, %v1148
  %v1395 = vmul.f32 %v1151, %v1151
  %v1396 = vmul.f32 %v1154, %v1154
  %v1397 = vmul.f32 %v1157, %v1157
  %v1398 = vmul.f32 %v1160, %v1160
  %v1399 = vmul.f32 %v1163, %v1163
  %v1400 = vmul.f32 %v1166, %v1166
  %v1401 = vmul.f32 %v1169, %v1169
  %v1402 = vmul.f32 %v1172, %v1172
  %v1403 = vmul.f32 %v1175, %v1175
  %v1404 = vmul.f32 %v1178, %v1178
  %v1405 = vmul.f32 %v1181, %v1181
  %v1406 = vmul.f32 %v1184, %v1184
  %v1407 = vsel %vm1186, %v1352, 0.0
  %1408 = vadd.xlane.f32.xlu0 %v1407
  %v1409 = vpop.xlane.xlu0 %1408
  %v1410 = vsel %vm1186, %v1353, 0.0
  %1411 = vadd.xlane.f32.xlu0 %v1410
  %v1412 = vpop.xlane.xlu0 %1411
  %v1413 = vsel %vm1186, %v1354, 0.0
  %1414 = vadd.xlane.f32.xlu0 %v1413
  %v1415 = vpop.xlane.xlu0 %1414
  %v1416 = vsel %vm1186, %v1355, 0.0
  %1417 = vadd.xlane.f32.xlu0 %v1416
  %v1418 = vpop.xlane.xlu0 %1417
  %v1419 = vsel %vm1186, %v1356, 0.0
  %1420 = vadd.xlane.f32.xlu0 %v1419
  %v1421 = vpop.xlane.xlu0 %1420
  %v1422 = vsel %vm1186, %v1357, 0.0
  %1423 = vadd.xlane.f32.xlu0 %v1422
  %v1424 = vpop.xlane.xlu0 %1423
  %v1425 = vsel %vm1186, %v1358, 0.0
  %1426 = vadd.xlane.f32.xlu0 %v1425
  %v1427 = vpop.xlane.xlu0 %1426
  %v1428 = vsel %vm1186, %v1359, 0.0
  %1429 = vadd.xlane.f32.xlu0 %v1428
  %v1430 = vpop.xlane.xlu0 %1429
  %v1431 = vsel %vm1186, %v1360, 0.0
  %1432 = vadd.xlane.f32.xlu0 %v1431
  %v1433 = vpop.xlane.xlu0 %1432
  %v1434 = vsel %vm1186, %v1361, 0.0
  %1435 = vadd.xlane.f32.xlu0 %v1434
  %v1436 = vpop.xlane.xlu0 %1435
  %v1437 = vsel %vm1186, %v1362, 0.0
  %1438 = vadd.xlane.f32.xlu0 %v1437
  %v1439 = vpop.xlane.xlu0 %1438
  %v1440 = vsel %vm1186, %v1363, 0.0
  %1441 = vadd.xlane.f32.xlu0 %v1440
  %v1442 = vpop.xlane.xlu0 %1441
  %v1443 = vsel %vm1186, %v1364, 0.0
  %1444 = vadd.xlane.f32.xlu0 %v1443
  %v1445 = vpop.xlane.xlu0 %1444
  %v1446 = vsel %vm1186, %v1365, 0.0
  %1447 = vadd.xlane.f32.xlu0 %v1446
  %v1448 = vpop.xlane.xlu0 %1447
  %v1449 = vsel %vm1186, %v1366, 0.0
  %1450 = vadd.xlane.f32.xlu0 %v1449
  %v1451 = vpop.xlane.xlu0 %1450
  %v1452 = vsel %vm1186, %v1367, 0.0
  %1453 = vadd.xlane.f32.xlu0 %v1452
  %v1454 = vpop.xlane.xlu0 %1453
  %v1455 = vsel %vm1186, %v1368, 0.0
  %1456 = vadd.xlane.f32.xlu0 %v1455
  %v1457 = vpop.xlane.xlu0 %1456
  %v1458 = vsel %vm1186, %v1369, 0.0
  %1459 = vadd.xlane.f32.xlu0 %v1458
  %v1460 = vpop.xlane.xlu0 %1459
  %v1461 = vsel %vm1186, %v1370, 0.0
  %1462 = vadd.xlane.f32.xlu0 %v1461
  %v1463 = vpop.xlane.xlu0 %1462
  %v1464 = vsel %vm1186, %v1371, 0.0
  %1465 = vadd.xlane.f32.xlu0 %v1464
  %v1466 = vpop.xlane.xlu0 %1465
  %v1467 = vsel %vm1186, %v1372, 0.0
  %1468 = vadd.xlane.f32.xlu0 %v1467
  %v1469 = vpop.xlane.xlu0 %1468
  %v1470 = vsel %vm1186, %v1373, 0.0
  %1471 = vadd.xlane.f32.xlu0 %v1470
  %v1472 = vpop.xlane.xlu0 %1471
  %v1473 = vsel %vm1186, %v1374, 0.0
  %1474 = vadd.xlane.f32.xlu0 %v1473
  %v1475 = vpop.xlane.xlu0 %1474
  %v1476 = vsel %vm1186, %v1375, 0.0
  %1477 = vadd.xlane.f32.xlu0 %v1476
  %v1478 = vpop.xlane.xlu0 %1477
  %v1479 = vsel %vm1186, %v1376, 0.0
  %1480 = vadd.xlane.f32.xlu0 %v1479
  %v1481 = vpop.xlane.xlu0 %1480
  %v1482 = vsel %vm1186, %v1377, 0.0
  %1483 = vadd.xlane.f32.xlu0 %v1482
  %v1484 = vpop.xlane.xlu0 %1483
  %v1485 = vsel %vm1186, %v1378, 0.0
  %1486 = vadd.xlane.f32.xlu0 %v1485
  %v1487 = vpop.xlane.xlu0 %1486
  %v1488 = vsel %vm1186, %v1379, 0.0
  %1489 = vadd.xlane.f32.xlu0 %v1488
  %v1490 = vpop.xlane.xlu0 %1489
  %v1491 = vsel %vm1186, %v1380, 0.0
  %1492 = vadd.xlane.f32.xlu0 %v1491
  %v1493 = vpop.xlane.xlu0 %1492
  %v1494 = vsel %vm1186, %v1381, 0.0
  %1495 = vadd.xlane.f32.xlu0 %v1494
  %v1496 = vpop.xlane.xlu0 %1495
  %v1497 = vsel %vm1186, %v1382, 0.0
  %1498 = vadd.xlane.f32.xlu0 %v1497
  %v1499 = vpop.xlane.xlu0 %1498
  %v1500 = vsel %vm1186, %v1383, 0.0
  %1501 = vadd.xlane.f32.xlu0 %v1500
  %v1502 = vpop.xlane.xlu0 %1501
  %v1503 = vsel %vm1186, %v1384, 0.0
  %1504 = vadd.xlane.f32.xlu0 %v1503
  %v1505 = vpop.xlane.xlu0 %1504
  %v1506 = vsel %vm1186, %v1385, 0.0
  %1507 = vadd.xlane.f32.xlu0 %v1506
  %v1508 = vpop.xlane.xlu0 %1507
  %v1509 = vsel %vm1186, %v1386, 0.0
  %1510 = vadd.xlane.f32.xlu0 %v1509
  %v1511 = vpop.xlane.xlu0 %1510
  %v1512 = vsel %vm1186, %v1387, 0.0
  %1513 = vadd.xlane.f32.xlu0 %v1512
  %v1514 = vpop.xlane.xlu0 %1513
  %v1515 = vsel %vm1186, %v1388, 0.0
  %1516 = vadd.xlane.f32.xlu0 %v1515
  %v1517 = vpop.xlane.xlu0 %1516
  %v1518 = vsel %vm1186, %v1389, 0.0
  %1519 = vadd.xlane.f32.xlu0 %v1518
  %v1520 = vpop.xlane.xlu0 %1519
  %v1521 = vsel %vm1186, %v1390, 0.0
  %1522 = vadd.xlane.f32.xlu0 %v1521
  %v1523 = vpop.xlane.xlu0 %1522
  %v1524 = vsel %vm1186, %v1391, 0.0
  %1525 = vadd.xlane.f32.xlu0 %v1524
  %v1526 = vpop.xlane.xlu0 %1525
  %v1527 = vsel %vm1186, %v1392, 0.0
  %1528 = vadd.xlane.f32.xlu0 %v1527
  %v1529 = vpop.xlane.xlu0 %1528
  %v1530 = vsel %vm1186, %v1393, 0.0
  %1531 = vadd.xlane.f32.xlu0 %v1530
  %v1532 = vpop.xlane.xlu0 %1531
  %v1533 = vsel %vm1186, %v1394, 0.0
  %1534 = vadd.xlane.f32.xlu0 %v1533
  %v1535 = vpop.xlane.xlu0 %1534
  %v1536 = vsel %vm1186, %v1395, 0.0
  %1537 = vadd.xlane.f32.xlu0 %v1536
  %v1538 = vpop.xlane.xlu0 %1537
  %v1539 = vsel %vm1186, %v1396, 0.0
  %1540 = vadd.xlane.f32.xlu0 %v1539
  %v1541 = vpop.xlane.xlu0 %1540
  %v1542 = vsel %vm1186, %v1397, 0.0
  %1543 = vadd.xlane.f32.xlu0 %v1542
  %v1544 = vpop.xlane.xlu0 %1543
  %v1545 = vsel %vm1186, %v1398, 0.0
  %1546 = vadd.xlane.f32.xlu0 %v1545
  %v1547 = vpop.xlane.xlu0 %1546
  %v1548 = vsel %vm1186, %v1399, 0.0
  %1549 = vadd.xlane.f32.xlu0 %v1548
  %v1550 = vpop.xlane.xlu0 %1549
  %v1551 = vsel %vm1186, %v1400, 0.0
  %1552 = vadd.xlane.f32.xlu0 %v1551
  %v1553 = vpop.xlane.xlu0 %1552
  %v1554 = vsel %vm1186, %v1401, 0.0
  %1555 = vadd.xlane.f32.xlu0 %v1554
  %v1556 = vpop.xlane.xlu0 %1555
  %v1557 = vsel %vm1186, %v1402, 0.0
  %1558 = vadd.xlane.f32.xlu0 %v1557
  %v1559 = vpop.xlane.xlu0 %1558
  %v1560 = vsel %vm1186, %v1403, 0.0
  %1561 = vadd.xlane.f32.xlu0 %v1560
  %v1562 = vpop.xlane.xlu0 %1561
  %v1563 = vsel %vm1186, %v1404, 0.0
  %1564 = vadd.xlane.f32.xlu0 %v1563
  %v1565 = vpop.xlane.xlu0 %1564
  %v1566 = vsel %vm1186, %v1405, 0.0
  %1567 = vadd.xlane.f32.xlu0 %v1566
  %v1568 = vpop.xlane.xlu0 %1567
  %v1569 = vsel %vm1186, %v1406, 0.0
  %1570 = vadd.xlane.f32.xlu0 %v1569
  %v1571 = vpop.xlane.xlu0 %1570
  %v1572 = vmul.f32 %v1189, 0.020408163
  %v1573 = vmul.f32 %v1192, 0.020408163
  %v1574 = vmul.f32 %v1195, 0.020408163
  %v1575 = vmul.f32 %v1198, 0.020408163
  %v1576 = vmul.f32 %v1201, 0.020408163
  %v1577 = vmul.f32 %v1204, 0.020408163
  %v1578 = vmul.f32 %v1207, 0.020408163
  %v1579 = vmul.f32 %v1210, 0.020408163
  %v1580 = vmul.f32 %v1213, 0.020408163
  %v1581 = vmul.f32 %v1216, 0.020408163
  %v1582 = vmul.f32 %v1219, 0.020408163
  %v1583 = vmul.f32 %v1222, 0.020408163
  %v1584 = vmul.f32 %v1225, 0.020408163
  %v1585 = vmul.f32 %v1228, 0.020408163
  %v1586 = vmul.f32 %v1231, 0.020408163
  %v1587 = vmul.f32 %v1234, 0.020408163
  %v1588 = vmul.f32 %v1237, 0.020408163
  %v1589 = vmul.f32 %v1240, 0.020408163
  %v1590 = vmul.f32 %v1243, 0.020408163
  %v1591 = vmul.f32 %v1246, 0.020408163
  %v1592 = vmul.f32 %v1249, 0.020408163
  %v1593 = vmul.f32 %v1252, 0.020408163
  %v1594 = vmul.f32 %v1255, 0.020408163
  %v1595 = vmul.f32 %v1258, 0.020408163
  %v1596 = vmul.f32 %v1261, 0.020408163
  %v1597 = vmul.f32 %v1264, 0.020408163
  %v1598 = vmul.f32 %v1267, 0.020408163
  %v1599 = vmul.f32 %v1270, 0.020408163
  %v1600 = vmul.f32 %v1273, 0.020408163
  %v1601 = vmul.f32 %v1276, 0.020408163
  %v1602 = vmul.f32 %v1279, 0.020408163
  %v1603 = vmul.f32 %v1282, 0.020408163
  %v1604 = vmul.f32 %v1285, 0.020408163
  %v1605 = vmul.f32 %v1288, 0.020408163
  %v1606 = vmul.f32 %v1291, 0.020408163
  %v1607 = vmul.f32 %v1294, 0.020408163
  %v1608 = vmul.f32 %v1297, 0.020408163
  %v1609 = vmul.f32 %v1300, 0.020408163
  %v1610 = vmul.f32 %v1303, 0.020408163
  %v1611 = vmul.f32 %v1306, 0.020408163
  %v1612 = vmul.f32 %v1309, 0.020408163
  %v1613 = vmul.f32 %v1312, 0.020408163
  %v1614 = vmul.f32 %v1315, 0.020408163
  %v1615 = vmul.f32 %v1318, 0.020408163
  %v1616 = vmul.f32 %v1321, 0.020408163
  %v1617 = vmul.f32 %v1324, 0.020408163
  %v1618 = vmul.f32 %v1327, 0.020408163
  %v1619 = vmul.f32 %v1330, 0.020408163
  %v1620 = vmul.f32 %v1333, 0.020408163
  %v1621 = vmul.f32 %v1336, 0.020408163
  %v1622 = vmul.f32 %v1339, 0.020408163
  %v1623 = vmul.f32 %v1342, 0.020408163
  %v1624 = vmul.f32 %v1345, 0.020408163
  %v1625 = vmul.f32 %v1348, 0.020408163
  %v1626 = vmul.f32 %v1351, 0.020408163
  %v1627 = vmul.f32 %v1409, 0.020408163
  %v1628 = vmul.f32 %v1412, 0.020408163
  %v1629 = vmul.f32 %v1415, 0.020408163
  %v1630 = vmul.f32 %v1418, 0.020408163
  %v1631 = vmul.f32 %v1421, 0.020408163
  %v1632 = vmul.f32 %v1424, 0.020408163
  %v1633 = vmul.f32 %v1427, 0.020408163
  %v1634 = vmul.f32 %v1430, 0.020408163
  %v1635 = vmul.f32 %v1433, 0.020408163
  %v1636 = vmul.f32 %v1436, 0.020408163
  %v1637 = vmul.f32 %v1439, 0.020408163
  %v1638 = vmul.f32 %v1442, 0.020408163
  %v1639 = vmul.f32 %v1445, 0.020408163
  %v1640 = vmul.f32 %v1448, 0.020408163
  %v1641 = vmul.f32 %v1451, 0.020408163
  %v1642 = vmul.f32 %v1454, 0.020408163
  %v1643 = vmul.f32 %v1457, 0.020408163
  %v1644 = vmul.f32 %v1460, 0.020408163
  %v1645 = vmul.f32 %v1463, 0.020408163
  %v1646 = vmul.f32 %v1466, 0.020408163
  %v1647 = vmul.f32 %v1469, 0.020408163
  %v1648 = vmul.f32 %v1472, 0.020408163
  %v1649 = vmul.f32 %v1475, 0.020408163
  %v1650 = vmul.f32 %v1478, 0.020408163
  %v1651 = vmul.f32 %v1481, 0.020408163
  %v1652 = vmul.f32 %v1484, 0.020408163
  %v1653 = vmul.f32 %v1487, 0.020408163
  %v1654 = vmul.f32 %v1490, 0.020408163
  %v1655 = vmul.f32 %v1493, 0.020408163
  %v1656 = vmul.f32 %v1496, 0.020408163
  %v1657 = vmul.f32 %v1499, 0.020408163
  %v1658 = vmul.f32 %v1502, 0.020408163
  %v1659 = vmul.f32 %v1505, 0.020408163
  %v1660 = vmul.f32 %v1508, 0.020408163
  %v1661 = vmul.f32 %v1511, 0.020408163
  %v1662 = vmul.f32 %v1514, 0.020408163
  %v1663 = vmul.f32 %v1517, 0.020408163
  %v1664 = vmul.f32 %v1520, 0.020408163
  %v1665 = vmul.f32 %v1523, 0.020408163
  %v1666 = vmul.f32 %v1526, 0.020408163
  %v1667 = vmul.f32 %v1529, 0.020408163
  %v1668 = vmul.f32 %v1532, 0.020408163
  %v1669 = vmul.f32 %v1535, 0.020408163
  %v1670 = vmul.f32 %v1538, 0.020408163
  %v1671 = vmul.f32 %v1541, 0.020408163
  %v1672 = vmul.f32 %v1544, 0.020408163
  %v1673 = vmul.f32 %v1547, 0.020408163
  %v1674 = vmul.f32 %v1550, 0.020408163
  %v1675 = vmul.f32 %v1553, 0.020408163
  %v1676 = vmul.f32 %v1556, 0.020408163
  %v1677 = vmul.f32 %v1559, 0.020408163
  %v1678 = vmul.f32 %v1562, 0.020408163
  %v1679 = vmul.f32 %v1565, 0.020408163
  %v1680 = vmul.f32 %v1568, 0.020408163
  %v1681 = vmul.f32 %v1571, 0.020408163
  %v1682 = vmul.f32 %v1572, %v1572
  %v1683 = vmul.f32 %v1573, %v1573
  %v1684 = vmul.f32 %v1574, %v1574
  %v1685 = vmul.f32 %v1575, %v1575
  %v1686 = vmul.f32 %v1576, %v1576
  %v1687 = vmul.f32 %v1577, %v1577
  %v1688 = vmul.f32 %v1578, %v1578
  %v1689 = vmul.f32 %v1579, %v1579
  %v1690 = vmul.f32 %v1580, %v1580
  %v1691 = vmul.f32 %v1581, %v1581
  %v1692 = vmul.f32 %v1582, %v1582
  %v1693 = vmul.f32 %v1583, %v1583
  %v1694 = vmul.f32 %v1584, %v1584
  %v1695 = vmul.f32 %v1585, %v1585
  %v1696 = vmul.f32 %v1586, %v1586
  %v1697 = vmul.f32 %v1587, %v1587
  %v1698 = vmul.f32 %v1588, %v1588
  %v1699 = vmul.f32 %v1589, %v1589
  %v1700 = vmul.f32 %v1590, %v1590
  %v1701 = vmul.f32 %v1591, %v1591
  %v1702 = vmul.f32 %v1592, %v1592
  %v1703 = vmul.f32 %v1593, %v1593
  %v1704 = vmul.f32 %v1594, %v1594
  %v1705 = vmul.f32 %v1595, %v1595
  %v1706 = vmul.f32 %v1596, %v1596
  %v1707 = vmul.f32 %v1597, %v1597
  %v1708 = vmul.f32 %v1598, %v1598
  %v1709 = vmul.f32 %v1599, %v1599
  %v1710 = vmul.f32 %v1600, %v1600
  %v1711 = vmul.f32 %v1601, %v1601
  %v1712 = vmul.f32 %v1602, %v1602
  %v1713 = vmul.f32 %v1603, %v1603
  %v1714 = vmul.f32 %v1604, %v1604
  %v1715 = vmul.f32 %v1605, %v1605
  %v1716 = vmul.f32 %v1606, %v1606
  %v1717 = vmul.f32 %v1607, %v1607
  %v1718 = vmul.f32 %v1608, %v1608
  %v1719 = vmul.f32 %v1609, %v1609
  %v1720 = vmul.f32 %v1610, %v1610
  %v1721 = vmul.f32 %v1611, %v1611
  %v1722 = vmul.f32 %v1612, %v1612
  %v1723 = vmul.f32 %v1613, %v1613
  %v1724 = vmul.f32 %v1614, %v1614
  %v1725 = vmul.f32 %v1615, %v1615
  %v1726 = vmul.f32 %v1616, %v1616
  %v1727 = vmul.f32 %v1617, %v1617
  %v1728 = vmul.f32 %v1618, %v1618
  %v1729 = vmul.f32 %v1619, %v1619
  %v1730 = vmul.f32 %v1620, %v1620
  %v1731 = vmul.f32 %v1621, %v1621
  %v1732 = vmul.f32 %v1622, %v1622
  %v1733 = vmul.f32 %v1623, %v1623
  %v1734 = vmul.f32 %v1624, %v1624
  %v1735 = vmul.f32 %v1625, %v1625
  %v1736 = vmul.f32 %v1626, %v1626
  %v1737 = vsub.f32 %v1627, %v1682
  %v1738 = vsub.f32 %v1628, %v1683
  %v1739 = vsub.f32 %v1629, %v1684
  %v1740 = vsub.f32 %v1630, %v1685
  %v1741 = vsub.f32 %v1631, %v1686
  %v1742 = vsub.f32 %v1632, %v1687
  %v1743 = vsub.f32 %v1633, %v1688
  %v1744 = vsub.f32 %v1634, %v1689
  %v1745 = vsub.f32 %v1635, %v1690
  %v1746 = vsub.f32 %v1636, %v1691
  %v1747 = vsub.f32 %v1637, %v1692
  %v1748 = vsub.f32 %v1638, %v1693
  %v1749 = vsub.f32 %v1639, %v1694
  %v1750 = vsub.f32 %v1640, %v1695
  %v1751 = vsub.f32 %v1641, %v1696
  %v1752 = vsub.f32 %v1642, %v1697
  %v1753 = vsub.f32 %v1643, %v1698
  %v1754 = vsub.f32 %v1644, %v1699
  %v1755 = vsub.f32 %v1645, %v1700
  %v1756 = vsub.f32 %v1646, %v1701
  %v1757 = vsub.f32 %v1647, %v1702
  %v1758 = vsub.f32 %v1648, %v1703
  %v1759 = vsub.f32 %v1649, %v1704
  %v1760 = vsub.f32 %v1650, %v1705
  %v1761 = vsub.f32 %v1651, %v1706
  %v1762 = vsub.f32 %v1652, %v1707
  %v1763 = vsub.f32 %v1653, %v1708
  %v1764 = vsub.f32 %v1654, %v1709
  %v1765 = vsub.f32 %v1655, %v1710
  %v1766 = vsub.f32 %v1656, %v1711
  %v1767 = vsub.f32 %v1657, %v1712
  %v1768 = vsub.f32 %v1658, %v1713
  %v1769 = vsub.f32 %v1659, %v1714
  %v1770 = vsub.f32 %v1660, %v1715
  %v1771 = vsub.f32 %v1661, %v1716
  %v1772 = vsub.f32 %v1662, %v1717
  %v1773 = vsub.f32 %v1663, %v1718
  %v1774 = vsub.f32 %v1664, %v1719
  %v1775 = vsub.f32 %v1665, %v1720
  %v1776 = vsub.f32 %v1666, %v1721
  %v1777 = vsub.f32 %v1667, %v1722
  %v1778 = vsub.f32 %v1668, %v1723
  %v1779 = vsub.f32 %v1669, %v1724
  %v1780 = vsub.f32 %v1670, %v1725
  %v1781 = vsub.f32 %v1671, %v1726
  %v1782 = vsub.f32 %v1672, %v1727
  %v1783 = vsub.f32 %v1673, %v1728
  %v1784 = vsub.f32 %v1674, %v1729
  %v1785 = vsub.f32 %v1675, %v1730
  %v1786 = vsub.f32 %v1676, %v1731
  %v1787 = vsub.f32 %v1677, %v1732
  %v1788 = vsub.f32 %v1678, %v1733
  %v1789 = vsub.f32 %v1679, %v1734
  %v1790 = vsub.f32 %v1680, %v1735
  %v1791 = vsub.f32 %v1681, %v1736
  %v1792 = vmax.f32 %v1737, 0.0
  %v1793 = vmax.f32 %v1738, 0.0
  %v1794 = vmax.f32 %v1739, 0.0
  %v1795 = vmax.f32 %v1740, 0.0
  %v1796 = vmax.f32 %v1741, 0.0
  %v1797 = vmax.f32 %v1742, 0.0
  %v1798 = vmax.f32 %v1743, 0.0
  %v1799 = vmax.f32 %v1744, 0.0
  %v1800 = vmax.f32 %v1745, 0.0
  %v1801 = vmax.f32 %v1746, 0.0
  %v1802 = vmax.f32 %v1747, 0.0
  %v1803 = vmax.f32 %v1748, 0.0
  %v1804 = vmax.f32 %v1749, 0.0
  %v1805 = vmax.f32 %v1750, 0.0
  %v1806 = vmax.f32 %v1751, 0.0
  %v1807 = vmax.f32 %v1752, 0.0
  %v1808 = vmax.f32 %v1753, 0.0
  %v1809 = vmax.f32 %v1754, 0.0
  %v1810 = vmax.f32 %v1755, 0.0
  %v1811 = vmax.f32 %v1756, 0.0
  %v1812 = vmax.f32 %v1757, 0.0
  %v1813 = vmax.f32 %v1758, 0.0
  %v1814 = vmax.f32 %v1759, 0.0
  %v1815 = vmax.f32 %v1760, 0.0
  %v1816 = vmax.f32 %v1761, 0.0
  %v1817 = vmax.f32 %v1762, 0.0
  %v1818 = vmax.f32 %v1763, 0.0
  %v1819 = vmax.f32 %v1764, 0.0
  %v1820 = vmax.f32 %v1765, 0.0
  %v1821 = vmax.f32 %v1766, 0.0
  %v1822 = vmax.f32 %v1767, 0.0
  %v1823 = vmax.f32 %v1768, 0.0
  %v1824 = vmax.f32 %v1769, 0.0
  %v1825 = vmax.f32 %v1770, 0.0
  %v1826 = vmax.f32 %v1771, 0.0
  %v1827 = vmax.f32 %v1772, 0.0
  %v1828 = vmax.f32 %v1773, 0.0
  %v1829 = vmax.f32 %v1774, 0.0
  %v1830 = vmax.f32 %v1775, 0.0
  %v1831 = vmax.f32 %v1776, 0.0
  %v1832 = vmax.f32 %v1777, 0.0
  %v1833 = vmax.f32 %v1778, 0.0
  %v1834 = vmax.f32 %v1779, 0.0
  %v1835 = vmax.f32 %v1780, 0.0
  %v1836 = vmax.f32 %v1781, 0.0
  %v1837 = vmax.f32 %v1782, 0.0
  %v1838 = vmax.f32 %v1783, 0.0
  %v1839 = vmax.f32 %v1784, 0.0
  %v1840 = vmax.f32 %v1785, 0.0
  %v1841 = vmax.f32 %v1786, 0.0
  %v1842 = vmax.f32 %v1787, 0.0
  %v1843 = vmax.f32 %v1788, 0.0
  %v1844 = vmax.f32 %v1789, 0.0
  %v1845 = vmax.f32 %v1790, 0.0
  %v1846 = vmax.f32 %v1791, 0.0
  %v1847 = vadd.f32 %v1792, 1e-05
  %v1848 = vadd.f32 %v1793, 1e-05
  %v1849 = vadd.f32 %v1794, 1e-05
  %v1850 = vadd.f32 %v1795, 1e-05
  %v1851 = vadd.f32 %v1796, 1e-05
  %v1852 = vadd.f32 %v1797, 1e-05
  %v1853 = vadd.f32 %v1798, 1e-05
  %v1854 = vadd.f32 %v1799, 1e-05
  %v1855 = vadd.f32 %v1800, 1e-05
  %v1856 = vadd.f32 %v1801, 1e-05
  %v1857 = vadd.f32 %v1802, 1e-05
  %v1858 = vadd.f32 %v1803, 1e-05
  %v1859 = vadd.f32 %v1804, 1e-05
  %v1860 = vadd.f32 %v1805, 1e-05
  %v1861 = vadd.f32 %v1806, 1e-05
  %v1862 = vadd.f32 %v1807, 1e-05
  %v1863 = vadd.f32 %v1808, 1e-05
  %v1864 = vadd.f32 %v1809, 1e-05
  %v1865 = vadd.f32 %v1810, 1e-05
  %v1866 = vadd.f32 %v1811, 1e-05
  %v1867 = vadd.f32 %v1812, 1e-05
  %v1868 = vadd.f32 %v1813, 1e-05
  %v1869 = vadd.f32 %v1814, 1e-05
  %v1870 = vadd.f32 %v1815, 1e-05
  %v1871 = vadd.f32 %v1816, 1e-05
  %v1872 = vadd.f32 %v1817, 1e-05
  %v1873 = vadd.f32 %v1818, 1e-05
  %v1874 = vadd.f32 %v1819, 1e-05
  %v1875 = vadd.f32 %v1820, 1e-05
  %v1876 = vadd.f32 %v1821, 1e-05
  %v1877 = vadd.f32 %v1822, 1e-05
  %v1878 = vadd.f32 %v1823, 1e-05
  %v1879 = vadd.f32 %v1824, 1e-05
  %v1880 = vadd.f32 %v1825, 1e-05
  %v1881 = vadd.f32 %v1826, 1e-05
  %v1882 = vadd.f32 %v1827, 1e-05
  %v1883 = vadd.f32 %v1828, 1e-05
  %v1884 = vadd.f32 %v1829, 1e-05
  %v1885 = vadd.f32 %v1830, 1e-05
  %v1886 = vadd.f32 %v1831, 1e-05
  %v1887 = vadd.f32 %v1832, 1e-05
  %v1888 = vadd.f32 %v1833, 1e-05
  %v1889 = vadd.f32 %v1834, 1e-05
  %v1890 = vadd.f32 %v1835, 1e-05
  %v1891 = vadd.f32 %v1836, 1e-05
  %v1892 = vadd.f32 %v1837, 1e-05
  %v1893 = vadd.f32 %v1838, 1e-05
  %v1894 = vadd.f32 %v1839, 1e-05
  %v1895 = vadd.f32 %v1840, 1e-05
  %v1896 = vadd.f32 %v1841, 1e-05
  %v1897 = vadd.f32 %v1842, 1e-05
  %v1898 = vadd.f32 %v1843, 1e-05
  %v1899 = vadd.f32 %v1844, 1e-05
  %v1900 = vadd.f32 %v1845, 1e-05
  %v1901 = vadd.f32 %v1846, 1e-05
  %v1902 = vrsqrt.pop %v1847
  %v1903 = vmul.f32 %v1902, %v1847
  %v1904 = vmul.f32 %v1903, %v1902
  %v1905 = vmul.f32 0.5, %v1904
  %v1906 = vsub.f32 1.5, %v1905
  %v1907 = vmul.f32 %v1902, %v1906
  %vm1908 = vweird.f32 %v1847
  %vm1909 = vweird.f32 %v1902
  %vm1910 = vmor %vm1908, %vm1909
  %v1911 = vsel %vm1910, %v1902, %v1907
  %v1912 = vrsqrt.pop %v1848
  %v1913 = vmul.f32 %v1912, %v1848
  %v1914 = vmul.f32 %v1913, %v1912
  %v1915 = vmul.f32 0.5, %v1914
  %v1916 = vsub.f32 1.5, %v1915
  %v1917 = vmul.f32 %v1912, %v1916
  %vm1918 = vweird.f32 %v1848
  %vm1919 = vweird.f32 %v1912
  %vm1920 = vmor %vm1918, %vm1919
  %v1921 = vsel %vm1920, %v1912, %v1917
  %v1922 = vrsqrt.pop %v1849
  %v1923 = vmul.f32 %v1922, %v1849
  %v1924 = vmul.f32 %v1923, %v1922
  %v1925 = vmul.f32 0.5, %v1924
  %v1926 = vsub.f32 1.5, %v1925
  %v1927 = vmul.f32 %v1922, %v1926
  %vm1928 = vweird.f32 %v1849
  %vm1929 = vweird.f32 %v1922
  %vm1930 = vmor %vm1928, %vm1929
  %v1931 = vsel %vm1930, %v1922, %v1927
  %v1932 = vrsqrt.pop %v1850
  %v1933 = vmul.f32 %v1932, %v1850
  %v1934 = vmul.f32 %v1933, %v1932
  %v1935 = vmul.f32 0.5, %v1934
  %v1936 = vsub.f32 1.5, %v1935
  %v1937 = vmul.f32 %v1932, %v1936
  %vm1938 = vweird.f32 %v1850
  %vm1939 = vweird.f32 %v1932
  %vm1940 = vmor %vm1938, %vm1939
  %v1941 = vsel %vm1940, %v1932, %v1937
  %v1942 = vrsqrt.pop %v1851
  %v1943 = vmul.f32 %v1942, %v1851
  %v1944 = vmul.f32 %v1943, %v1942
  %v1945 = vmul.f32 0.5, %v1944
  %v1946 = vsub.f32 1.5, %v1945
  %v1947 = vmul.f32 %v1942, %v1946
  %vm1948 = vweird.f32 %v1851
  %vm1949 = vweird.f32 %v1942
  %vm1950 = vmor %vm1948, %vm1949
  %v1951 = vsel %vm1950, %v1942, %v1947
  %v1952 = vrsqrt.pop %v1852
  %v1953 = vmul.f32 %v1952, %v1852
  %v1954 = vmul.f32 %v1953, %v1952
  %v1955 = vmul.f32 0.5, %v1954
  %v1956 = vsub.f32 1.5, %v1955
  %v1957 = vmul.f32 %v1952, %v1956
  %vm1958 = vweird.f32 %v1852
  %vm1959 = vweird.f32 %v1952
  %vm1960 = vmor %vm1958, %vm1959
  %v1961 = vsel %vm1960, %v1952, %v1957
  %v1962 = vrsqrt.pop %v1853
  %v1963 = vmul.f32 %v1962, %v1853
  %v1964 = vmul.f32 %v1963, %v1962
  %v1965 = vmul.f32 0.5, %v1964
  %v1966 = vsub.f32 1.5, %v1965
  %v1967 = vmul.f32 %v1962, %v1966
  %vm1968 = vweird.f32 %v1853
  %vm1969 = vweird.f32 %v1962
  %vm1970 = vmor %vm1968, %vm1969
  %v1971 = vsel %vm1970, %v1962, %v1967
  %v1972 = vrsqrt.pop %v1854
  %v1973 = vmul.f32 %v1972, %v1854
  %v1974 = vmul.f32 %v1973, %v1972
  %v1975 = vmul.f32 0.5, %v1974
  %v1976 = vsub.f32 1.5, %v1975
  %v1977 = vmul.f32 %v1972, %v1976
  %vm1978 = vweird.f32 %v1854
  %vm1979 = vweird.f32 %v1972
  %vm1980 = vmor %vm1978, %vm1979
  %v1981 = vsel %vm1980, %v1972, %v1977
  %v1982 = vrsqrt.pop %v1855
  %v1983 = vmul.f32 %v1982, %v1855
  %v1984 = vmul.f32 %v1983, %v1982
  %v1985 = vmul.f32 0.5, %v1984
  %v1986 = vsub.f32 1.5, %v1985
  %v1987 = vmul.f32 %v1982, %v1986
  %vm1988 = vweird.f32 %v1855
  %vm1989 = vweird.f32 %v1982
  %vm1990 = vmor %vm1988, %vm1989
  %v1991 = vsel %vm1990, %v1982, %v1987
  %v1992 = vrsqrt.pop %v1856
  %v1993 = vmul.f32 %v1992, %v1856
  %v1994 = vmul.f32 %v1993, %v1992
  %v1995 = vmul.f32 0.5, %v1994
  %v1996 = vsub.f32 1.5, %v1995
  %v1997 = vmul.f32 %v1992, %v1996
  %vm1998 = vweird.f32 %v1856
  %vm1999 = vweird.f32 %v1992
  %vm2000 = vmor %vm1998, %vm1999
  %v2001 = vsel %vm2000, %v1992, %v1997
  %v2002 = vrsqrt.pop %v1857
  %v2003 = vmul.f32 %v2002, %v1857
  %v2004 = vmul.f32 %v2003, %v2002
  %v2005 = vmul.f32 0.5, %v2004
  %v2006 = vsub.f32 1.5, %v2005
  %v2007 = vmul.f32 %v2002, %v2006
  %vm2008 = vweird.f32 %v1857
  %vm2009 = vweird.f32 %v2002
  %vm2010 = vmor %vm2008, %vm2009
  %v2011 = vsel %vm2010, %v2002, %v2007
  %v2012 = vrsqrt.pop %v1858
  %v2013 = vmul.f32 %v2012, %v1858
  %v2014 = vmul.f32 %v2013, %v2012
  %v2015 = vmul.f32 0.5, %v2014
  %v2016 = vsub.f32 1.5, %v2015
  %v2017 = vmul.f32 %v2012, %v2016
  %vm2018 = vweird.f32 %v1858
  %vm2019 = vweird.f32 %v2012
  %vm2020 = vmor %vm2018, %vm2019
  %v2021 = vsel %vm2020, %v2012, %v2017
  %v2022 = vrsqrt.pop %v1859
  %v2023 = vmul.f32 %v2022, %v1859
  %v2024 = vmul.f32 %v2023, %v2022
  %v2025 = vmul.f32 0.5, %v2024
  %v2026 = vsub.f32 1.5, %v2025
  %v2027 = vmul.f32 %v2022, %v2026
  %vm2028 = vweird.f32 %v1859
  %vm2029 = vweird.f32 %v2022
  %vm2030 = vmor %vm2028, %vm2029
  %v2031 = vsel %vm2030, %v2022, %v2027
  %v2032 = vrsqrt.pop %v1860
  %v2033 = vmul.f32 %v2032, %v1860
  %v2034 = vmul.f32 %v2033, %v2032
  %v2035 = vmul.f32 0.5, %v2034
  %v2036 = vsub.f32 1.5, %v2035
  %v2037 = vmul.f32 %v2032, %v2036
  %vm2038 = vweird.f32 %v1860
  %vm2039 = vweird.f32 %v2032
  %vm2040 = vmor %vm2038, %vm2039
  %v2041 = vsel %vm2040, %v2032, %v2037
  %v2042 = vrsqrt.pop %v1861
  %v2043 = vmul.f32 %v2042, %v1861
  %v2044 = vmul.f32 %v2043, %v2042
  %v2045 = vmul.f32 0.5, %v2044
  %v2046 = vsub.f32 1.5, %v2045
  %v2047 = vmul.f32 %v2042, %v2046
  %vm2048 = vweird.f32 %v1861
  %vm2049 = vweird.f32 %v2042
  %vm2050 = vmor %vm2048, %vm2049
  %v2051 = vsel %vm2050, %v2042, %v2047
  %v2052 = vrsqrt.pop %v1862
  %v2053 = vmul.f32 %v2052, %v1862
  %v2054 = vmul.f32 %v2053, %v2052
  %v2055 = vmul.f32 0.5, %v2054
  %v2056 = vsub.f32 1.5, %v2055
  %v2057 = vmul.f32 %v2052, %v2056
  %vm2058 = vweird.f32 %v1862
  %vm2059 = vweird.f32 %v2052
  %vm2060 = vmor %vm2058, %vm2059
  %v2061 = vsel %vm2060, %v2052, %v2057
  %v2062 = vrsqrt.pop %v1863
  %v2063 = vmul.f32 %v2062, %v1863
  %v2064 = vmul.f32 %v2063, %v2062
  %v2065 = vmul.f32 0.5, %v2064
  %v2066 = vsub.f32 1.5, %v2065
  %v2067 = vmul.f32 %v2062, %v2066
  %vm2068 = vweird.f32 %v1863
  %vm2069 = vweird.f32 %v2062
  %vm2070 = vmor %vm2068, %vm2069
  %v2071 = vsel %vm2070, %v2062, %v2067
  %v2072 = vrsqrt.pop %v1864
  %v2073 = vmul.f32 %v2072, %v1864
  %v2074 = vmul.f32 %v2073, %v2072
  %v2075 = vmul.f32 0.5, %v2074
  %v2076 = vsub.f32 1.5, %v2075
  %v2077 = vmul.f32 %v2072, %v2076
  %vm2078 = vweird.f32 %v1864
  %vm2079 = vweird.f32 %v2072
  %vm2080 = vmor %vm2078, %vm2079
  %v2081 = vsel %vm2080, %v2072, %v2077
  %v2082 = vrsqrt.pop %v1865
  %v2083 = vmul.f32 %v2082, %v1865
  %v2084 = vmul.f32 %v2083, %v2082
  %v2085 = vmul.f32 0.5, %v2084
  %v2086 = vsub.f32 1.5, %v2085
  %v2087 = vmul.f32 %v2082, %v2086
  %vm2088 = vweird.f32 %v1865
  %vm2089 = vweird.f32 %v2082
  %vm2090 = vmor %vm2088, %vm2089
  %v2091 = vsel %vm2090, %v2082, %v2087
  %v2092 = vrsqrt.pop %v1866
  %v2093 = vmul.f32 %v2092, %v1866
  %v2094 = vmul.f32 %v2093, %v2092
  %v2095 = vmul.f32 0.5, %v2094
  %v2096 = vsub.f32 1.5, %v2095
  %v2097 = vmul.f32 %v2092, %v2096
  %vm2098 = vweird.f32 %v1866
  %vm2099 = vweird.f32 %v2092
  %vm2100 = vmor %vm2098, %vm2099
  %v2101 = vsel %vm2100, %v2092, %v2097
  %v2102 = vrsqrt.pop %v1867
  %v2103 = vmul.f32 %v2102, %v1867
  %v2104 = vmul.f32 %v2103, %v2102
  %v2105 = vmul.f32 0.5, %v2104
  %v2106 = vsub.f32 1.5, %v2105
  %v2107 = vmul.f32 %v2102, %v2106
  %vm2108 = vweird.f32 %v1867
  %vm2109 = vweird.f32 %v2102
  %vm2110 = vmor %vm2108, %vm2109
  %v2111 = vsel %vm2110, %v2102, %v2107
  %v2112 = vrsqrt.pop %v1868
  %v2113 = vmul.f32 %v2112, %v1868
  %v2114 = vmul.f32 %v2113, %v2112
  %v2115 = vmul.f32 0.5, %v2114
  %v2116 = vsub.f32 1.5, %v2115
  %v2117 = vmul.f32 %v2112, %v2116
  %vm2118 = vweird.f32 %v1868
  %vm2119 = vweird.f32 %v2112
  %vm2120 = vmor %vm2118, %vm2119
  %v2121 = vsel %vm2120, %v2112, %v2117
  %v2122 = vrsqrt.pop %v1869
  %v2123 = vmul.f32 %v2122, %v1869
  %v2124 = vmul.f32 %v2123, %v2122
  %v2125 = vmul.f32 0.5, %v2124
  %v2126 = vsub.f32 1.5, %v2125
  %v2127 = vmul.f32 %v2122, %v2126
  %vm2128 = vweird.f32 %v1869
  %vm2129 = vweird.f32 %v2122
  %vm2130 = vmor %vm2128, %vm2129
  %v2131 = vsel %vm2130, %v2122, %v2127
  %v2132 = vrsqrt.pop %v1870
  %v2133 = vmul.f32 %v2132, %v1870
  %v2134 = vmul.f32 %v2133, %v2132
  %v2135 = vmul.f32 0.5, %v2134
  %v2136 = vsub.f32 1.5, %v2135
  %v2137 = vmul.f32 %v2132, %v2136
  %vm2138 = vweird.f32 %v1870
  %vm2139 = vweird.f32 %v2132
  %vm2140 = vmor %vm2138, %vm2139
  %v2141 = vsel %vm2140, %v2132, %v2137
  %v2142 = vrsqrt.pop %v1871
  %v2143 = vmul.f32 %v2142, %v1871
  %v2144 = vmul.f32 %v2143, %v2142
  %v2145 = vmul.f32 0.5, %v2144
  %v2146 = vsub.f32 1.5, %v2145
  %v2147 = vmul.f32 %v2142, %v2146
  %vm2148 = vweird.f32 %v1871
  %vm2149 = vweird.f32 %v2142
  %vm2150 = vmor %vm2148, %vm2149
  %v2151 = vsel %vm2150, %v2142, %v2147
  %v2152 = vrsqrt.pop %v1872
  %v2153 = vmul.f32 %v2152, %v1872
  %v2154 = vmul.f32 %v2153, %v2152
  %v2155 = vmul.f32 0.5, %v2154
  %v2156 = vsub.f32 1.5, %v2155
  %v2157 = vmul.f32 %v2152, %v2156
  %vm2158 = vweird.f32 %v1872
  %vm2159 = vweird.f32 %v2152
  %vm2160 = vmor %vm2158, %vm2159
  %v2161 = vsel %vm2160, %v2152, %v2157
  %v2162 = vrsqrt.pop %v1873
  %v2163 = vmul.f32 %v2162, %v1873
  %v2164 = vmul.f32 %v2163, %v2162
  %v2165 = vmul.f32 0.5, %v2164
  %v2166 = vsub.f32 1.5, %v2165
  %v2167 = vmul.f32 %v2162, %v2166
  %vm2168 = vweird.f32 %v1873
  %vm2169 = vweird.f32 %v2162
  %vm2170 = vmor %vm2168, %vm2169
  %v2171 = vsel %vm2170, %v2162, %v2167
  %v2172 = vrsqrt.pop %v1874
  %v2173 = vmul.f32 %v2172, %v1874
  %v2174 = vmul.f32 %v2173, %v2172
  %v2175 = vmul.f32 0.5, %v2174
  %v2176 = vsub.f32 1.5, %v2175
  %v2177 = vmul.f32 %v2172, %v2176
  %vm2178 = vweird.f32 %v1874
  %vm2179 = vweird.f32 %v2172
  %vm2180 = vmor %vm2178, %vm2179
  %v2181 = vsel %vm2180, %v2172, %v2177
  %v2182 = vrsqrt.pop %v1875
  %v2183 = vmul.f32 %v2182, %v1875
  %v2184 = vmul.f32 %v2183, %v2182
  %v2185 = vmul.f32 0.5, %v2184
  %v2186 = vsub.f32 1.5, %v2185
  %v2187 = vmul.f32 %v2182, %v2186
  %vm2188 = vweird.f32 %v1875
  %vm2189 = vweird.f32 %v2182
  %vm2190 = vmor %vm2188, %vm2189
  %v2191 = vsel %vm2190, %v2182, %v2187
  %v2192 = vrsqrt.pop %v1876
  %v2193 = vmul.f32 %v2192, %v1876
  %v2194 = vmul.f32 %v2193, %v2192
  %v2195 = vmul.f32 0.5, %v2194
  %v2196 = vsub.f32 1.5, %v2195
  %v2197 = vmul.f32 %v2192, %v2196
  %vm2198 = vweird.f32 %v1876
  %vm2199 = vweird.f32 %v2192
  %vm2200 = vmor %vm2198, %vm2199
  %v2201 = vsel %vm2200, %v2192, %v2197
  %v2202 = vrsqrt.pop %v1877
  %v2203 = vmul.f32 %v2202, %v1877
  %v2204 = vmul.f32 %v2203, %v2202
  %v2205 = vmul.f32 0.5, %v2204
  %v2206 = vsub.f32 1.5, %v2205
  %v2207 = vmul.f32 %v2202, %v2206
  %vm2208 = vweird.f32 %v1877
  %vm2209 = vweird.f32 %v2202
  %vm2210 = vmor %vm2208, %vm2209
  %v2211 = vsel %vm2210, %v2202, %v2207
  %v2212 = vrsqrt.pop %v1878
  %v2213 = vmul.f32 %v2212, %v1878
  %v2214 = vmul.f32 %v2213, %v2212
  %v2215 = vmul.f32 0.5, %v2214
  %v2216 = vsub.f32 1.5, %v2215
  %v2217 = vmul.f32 %v2212, %v2216
  %vm2218 = vweird.f32 %v1878
  %vm2219 = vweird.f32 %v2212
  %vm2220 = vmor %vm2218, %vm2219
  %v2221 = vsel %vm2220, %v2212, %v2217
  %v2222 = vrsqrt.pop %v1879
  %v2223 = vmul.f32 %v2222, %v1879
  %v2224 = vmul.f32 %v2223, %v2222
  %v2225 = vmul.f32 0.5, %v2224
  %v2226 = vsub.f32 1.5, %v2225
  %v2227 = vmul.f32 %v2222, %v2226
  %vm2228 = vweird.f32 %v1879
  %vm2229 = vweird.f32 %v2222
  %vm2230 = vmor %vm2228, %vm2229
  %v2231 = vsel %vm2230, %v2222, %v2227
  %v2232 = vrsqrt.pop %v1880
  %v2233 = vmul.f32 %v2232, %v1880
  %v2234 = vmul.f32 %v2233, %v2232
  %v2235 = vmul.f32 0.5, %v2234
  %v2236 = vsub.f32 1.5, %v2235
  %v2237 = vmul.f32 %v2232, %v2236
  %vm2238 = vweird.f32 %v1880
  %vm2239 = vweird.f32 %v2232
  %vm2240 = vmor %vm2238, %vm2239
  %v2241 = vsel %vm2240, %v2232, %v2237
  %v2242 = vrsqrt.pop %v1881
  %v2243 = vmul.f32 %v2242, %v1881
  %v2244 = vmul.f32 %v2243, %v2242
  %v2245 = vmul.f32 0.5, %v2244
  %v2246 = vsub.f32 1.5, %v2245
  %v2247 = vmul.f32 %v2242, %v2246
  %vm2248 = vweird.f32 %v1881
  %vm2249 = vweird.f32 %v2242
  %vm2250 = vmor %vm2248, %vm2249
  %v2251 = vsel %vm2250, %v2242, %v2247
  %v2252 = vrsqrt.pop %v1882
  %v2253 = vmul.f32 %v2252, %v1882
  %v2254 = vmul.f32 %v2253, %v2252
  %v2255 = vmul.f32 0.5, %v2254
  %v2256 = vsub.f32 1.5, %v2255
  %v2257 = vmul.f32 %v2252, %v2256
  %vm2258 = vweird.f32 %v1882
  %vm2259 = vweird.f32 %v2252
  %vm2260 = vmor %vm2258, %vm2259
  %v2261 = vsel %vm2260, %v2252, %v2257
  %v2262 = vrsqrt.pop %v1883
  %v2263 = vmul.f32 %v2262, %v1883
  %v2264 = vmul.f32 %v2263, %v2262
  %v2265 = vmul.f32 0.5, %v2264
  %v2266 = vsub.f32 1.5, %v2265
  %v2267 = vmul.f32 %v2262, %v2266
  %vm2268 = vweird.f32 %v1883
  %vm2269 = vweird.f32 %v2262
  %vm2270 = vmor %vm2268, %vm2269
  %v2271 = vsel %vm2270, %v2262, %v2267
  %v2272 = vrsqrt.pop %v1884
  %v2273 = vmul.f32 %v2272, %v1884
  %v2274 = vmul.f32 %v2273, %v2272
  %v2275 = vmul.f32 0.5, %v2274
  %v2276 = vsub.f32 1.5, %v2275
  %v2277 = vmul.f32 %v2272, %v2276
  %vm2278 = vweird.f32 %v1884
  %vm2279 = vweird.f32 %v2272
  %vm2280 = vmor %vm2278, %vm2279
  %v2281 = vsel %vm2280, %v2272, %v2277
  %v2282 = vrsqrt.pop %v1885
  %v2283 = vmul.f32 %v2282, %v1885
  %v2284 = vmul.f32 %v2283, %v2282
  %v2285 = vmul.f32 0.5, %v2284
  %v2286 = vsub.f32 1.5, %v2285
  %v2287 = vmul.f32 %v2282, %v2286
  %vm2288 = vweird.f32 %v1885
  %vm2289 = vweird.f32 %v2282
  %vm2290 = vmor %vm2288, %vm2289
  %v2291 = vsel %vm2290, %v2282, %v2287
  %v2292 = vrsqrt.pop %v1886
  %v2293 = vmul.f32 %v2292, %v1886
  %v2294 = vmul.f32 %v2293, %v2292
  %v2295 = vmul.f32 0.5, %v2294
  %v2296 = vsub.f32 1.5, %v2295
  %v2297 = vmul.f32 %v2292, %v2296
  %vm2298 = vweird.f32 %v1886
  %vm2299 = vweird.f32 %v2292
  %vm2300 = vmor %vm2298, %vm2299
  %v2301 = vsel %vm2300, %v2292, %v2297
  %v2302 = vrsqrt.pop %v1887
  %v2303 = vmul.f32 %v2302, %v1887
  %v2304 = vmul.f32 %v2303, %v2302
  %v2305 = vmul.f32 0.5, %v2304
  %v2306 = vsub.f32 1.5, %v2305
  %v2307 = vmul.f32 %v2302, %v2306
  %vm2308 = vweird.f32 %v1887
  %vm2309 = vweird.f32 %v2302
  %vm2310 = vmor %vm2308, %vm2309
  %v2311 = vsel %vm2310, %v2302, %v2307
  %v2312 = vrsqrt.pop %v1888
  %v2313 = vmul.f32 %v2312, %v1888
  %v2314 = vmul.f32 %v2313, %v2312
  %v2315 = vmul.f32 0.5, %v2314
  %v2316 = vsub.f32 1.5, %v2315
  %v2317 = vmul.f32 %v2312, %v2316
  %vm2318 = vweird.f32 %v1888
  %vm2319 = vweird.f32 %v2312
  %vm2320 = vmor %vm2318, %vm2319
  %v2321 = vsel %vm2320, %v2312, %v2317
  %v2322 = vrsqrt.pop %v1889
  %v2323 = vmul.f32 %v2322, %v1889
  %v2324 = vmul.f32 %v2323, %v2322
  %v2325 = vmul.f32 0.5, %v2324
  %v2326 = vsub.f32 1.5, %v2325
  %v2327 = vmul.f32 %v2322, %v2326
  %vm2328 = vweird.f32 %v1889
  %vm2329 = vweird.f32 %v2322
  %vm2330 = vmor %vm2328, %vm2329
  %v2331 = vsel %vm2330, %v2322, %v2327
  %v2332 = vrsqrt.pop %v1890
  %v2333 = vmul.f32 %v2332, %v1890
  %v2334 = vmul.f32 %v2333, %v2332
  %v2335 = vmul.f32 0.5, %v2334
  %v2336 = vsub.f32 1.5, %v2335
  %v2337 = vmul.f32 %v2332, %v2336
  %vm2338 = vweird.f32 %v1890
  %vm2339 = vweird.f32 %v2332
  %vm2340 = vmor %vm2338, %vm2339
  %v2341 = vsel %vm2340, %v2332, %v2337
  %v2342 = vrsqrt.pop %v1891
  %v2343 = vmul.f32 %v2342, %v1891
  %v2344 = vmul.f32 %v2343, %v2342
  %v2345 = vmul.f32 0.5, %v2344
  %v2346 = vsub.f32 1.5, %v2345
  %v2347 = vmul.f32 %v2342, %v2346
  %vm2348 = vweird.f32 %v1891
  %vm2349 = vweird.f32 %v2342
  %vm2350 = vmor %vm2348, %vm2349
  %v2351 = vsel %vm2350, %v2342, %v2347
  %v2352 = vrsqrt.pop %v1892
  %v2353 = vmul.f32 %v2352, %v1892
  %v2354 = vmul.f32 %v2353, %v2352
  %v2355 = vmul.f32 0.5, %v2354
  %v2356 = vsub.f32 1.5, %v2355
  %v2357 = vmul.f32 %v2352, %v2356
  %vm2358 = vweird.f32 %v1892
  %vm2359 = vweird.f32 %v2352
  %vm2360 = vmor %vm2358, %vm2359
  %v2361 = vsel %vm2360, %v2352, %v2357
  %v2362 = vrsqrt.pop %v1893
  %v2363 = vmul.f32 %v2362, %v1893
  %v2364 = vmul.f32 %v2363, %v2362
  %v2365 = vmul.f32 0.5, %v2364
  %v2366 = vsub.f32 1.5, %v2365
  %v2367 = vmul.f32 %v2362, %v2366
  %vm2368 = vweird.f32 %v1893
  %vm2369 = vweird.f32 %v2362
  %vm2370 = vmor %vm2368, %vm2369
  %v2371 = vsel %vm2370, %v2362, %v2367
  %v2372 = vrsqrt.pop %v1894
  %v2373 = vmul.f32 %v2372, %v1894
  %v2374 = vmul.f32 %v2373, %v2372
  %v2375 = vmul.f32 0.5, %v2374
  %v2376 = vsub.f32 1.5, %v2375
  %v2377 = vmul.f32 %v2372, %v2376
  %vm2378 = vweird.f32 %v1894
  %vm2379 = vweird.f32 %v2372
  %vm2380 = vmor %vm2378, %vm2379
  %v2381 = vsel %vm2380, %v2372, %v2377
  %v2382 = vrsqrt.pop %v1895
  %v2383 = vmul.f32 %v2382, %v1895
  %v2384 = vmul.f32 %v2383, %v2382
  %v2385 = vmul.f32 0.5, %v2384
  %v2386 = vsub.f32 1.5, %v2385
  %v2387 = vmul.f32 %v2382, %v2386
  %vm2388 = vweird.f32 %v1895
  %vm2389 = vweird.f32 %v2382
  %vm2390 = vmor %vm2388, %vm2389
  %v2391 = vsel %vm2390, %v2382, %v2387
  %v2392 = vrsqrt.pop %v1896
  %v2393 = vmul.f32 %v2392, %v1896
  %v2394 = vmul.f32 %v2393, %v2392
  %v2395 = vmul.f32 0.5, %v2394
  %v2396 = vsub.f32 1.5, %v2395
  %v2397 = vmul.f32 %v2392, %v2396
  %vm2398 = vweird.f32 %v1896
  %vm2399 = vweird.f32 %v2392
  %vm2400 = vmor %vm2398, %vm2399
  %v2401 = vsel %vm2400, %v2392, %v2397
  %v2402 = vrsqrt.pop %v1897
  %v2403 = vmul.f32 %v2402, %v1897
  %v2404 = vmul.f32 %v2403, %v2402
  %v2405 = vmul.f32 0.5, %v2404
  %v2406 = vsub.f32 1.5, %v2405
  %v2407 = vmul.f32 %v2402, %v2406
  %vm2408 = vweird.f32 %v1897
  %vm2409 = vweird.f32 %v2402
  %vm2410 = vmor %vm2408, %vm2409
  %v2411 = vsel %vm2410, %v2402, %v2407
  %v2412 = vrsqrt.pop %v1898
  %v2413 = vmul.f32 %v2412, %v1898
  %v2414 = vmul.f32 %v2413, %v2412
  %v2415 = vmul.f32 0.5, %v2414
  %v2416 = vsub.f32 1.5, %v2415
  %v2417 = vmul.f32 %v2412, %v2416
  %vm2418 = vweird.f32 %v1898
  %vm2419 = vweird.f32 %v2412
  %vm2420 = vmor %vm2418, %vm2419
  %v2421 = vsel %vm2420, %v2412, %v2417
  %v2422 = vrsqrt.pop %v1899
  %v2423 = vmul.f32 %v2422, %v1899
  %v2424 = vmul.f32 %v2423, %v2422
  %v2425 = vmul.f32 0.5, %v2424
  %v2426 = vsub.f32 1.5, %v2425
  %v2427 = vmul.f32 %v2422, %v2426
  %vm2428 = vweird.f32 %v1899
  %vm2429 = vweird.f32 %v2422
  %vm2430 = vmor %vm2428, %vm2429
  %v2431 = vsel %vm2430, %v2422, %v2427
  %v2432 = vrsqrt.pop %v1900
  %v2433 = vmul.f32 %v2432, %v1900
  %v2434 = vmul.f32 %v2433, %v2432
  %v2435 = vmul.f32 0.5, %v2434
  %v2436 = vsub.f32 1.5, %v2435
  %v2437 = vmul.f32 %v2432, %v2436
  %vm2438 = vweird.f32 %v1900
  %vm2439 = vweird.f32 %v2432
  %vm2440 = vmor %vm2438, %vm2439
  %v2441 = vsel %vm2440, %v2432, %v2437
  %v2442 = vrsqrt.pop %v1901
  %v2443 = vmul.f32 %v2442, %v1901
  %v2444 = vmul.f32 %v2443, %v2442
  %v2445 = vmul.f32 0.5, %v2444
  %v2446 = vsub.f32 1.5, %v2445
  %v2447 = vmul.f32 %v2442, %v2446
  %vm2448 = vweird.f32 %v1901
  %vm2449 = vweird.f32 %v2442
  %vm2450 = vmor %vm2448, %vm2449
  %v2451 = vsel %vm2450, %v2442, %v2447
  %v2452 = vld [vmem:[%s2] sm:$0xff]
  %v2453 = vld [vmem:[%s2 + $0x8] sm:$0xff]
  %v2454 = vld [vmem:[%s2 + $0x10] sm:$0xff]
  %v2455 = vld [vmem:[%s2 + $0x18] sm:$0xff]
  %v2456 = vld [vmem:[%s2 + $0x20] sm:$0xff]
  %v2457 = vld [vmem:[%s2 + $0x28] sm:$0xff]
  %v2458 = vld [vmem:[%s2 + $0x30] sm:$0xff]
  %v2459 = vld [vmem:[%s2 + $0x38] sm:$0xff]
  %v2460 = vld [vmem:[%s2 + $0x40] sm:$0xff]
  %v2461 = vld [vmem:[%s2 + $0x48] sm:$0xff]
  %v2462 = vld [vmem:[%s2 + $0x50] sm:$0xff]
  %v2463 = vld [vmem:[%s2 + $0x58] sm:$0xff]
  %v2464 = vld [vmem:[%s2 + $0x60] sm:$0xff]
  %v2465 = vld [vmem:[%s2 + $0x68] sm:$0xff]
  %v2466 = vld [vmem:[%s2 + $0x70] sm:$0xff]
  %v2467 = vld [vmem:[%s2 + $0x78] sm:$0xff]
  %v2468 = vld [vmem:[%s2 + $0x80] sm:$0xff]
  %v2469 = vld [vmem:[%s2 + $0x88] sm:$0xff]
  %v2470 = vld [vmem:[%s2 + $0x90] sm:$0xff]
  %v2471 = vld [vmem:[%s2 + $0x98] sm:$0xff]
  %v2472 = vld [vmem:[%s2 + $0xa0] sm:$0xff]
  %v2473 = vld [vmem:[%s2 + $0xa8] sm:$0xff]
  %v2474 = vld [vmem:[%s2 + $0xb0] sm:$0xff]
  %v2475 = vld [vmem:[%s2 + $0xb8] sm:$0xff]
  %v2476 = vld [vmem:[%s2 + $0xc0] sm:$0xff]
  %v2477 = vld [vmem:[%s2 + $0xc8] sm:$0xff]
  %v2478 = vld [vmem:[%s2 + $0xd0] sm:$0xff]
  %v2479 = vld [vmem:[%s2 + $0xd8] sm:$0xff]
  %v2480 = vld [vmem:[%s2 + $0xe0] sm:$0xff]
  %v2481 = vld [vmem:[%s2 + $0xe8] sm:$0xff]
  %v2482 = vld [vmem:[%s2 + $0xf0] sm:$0xff]
  %v2483 = vld [vmem:[%s2 + $0xf8] sm:$0xff]
  %v2484 = vld [vmem:[%s2 + $0x100] sm:$0xff]
  %v2485 = vld [vmem:[%s2 + $0x108] sm:$0xff]
  %v2486 = vld [vmem:[%s2 + $0x110] sm:$0xff]
  %v2487 = vld [vmem:[%s2 + $0x118] sm:$0xff]
  %v2488 = vld [vmem:[%s2 + $0x120] sm:$0xff]
  %v2489 = vld [vmem:[%s2 + $0x128] sm:$0xff]
  %v2490 = vld [vmem:[%s2 + $0x130] sm:$0xff]
  %v2491 = vld [vmem:[%s2 + $0x138] sm:$0xff]
  %v2492 = vld [vmem:[%s2 + $0x140] sm:$0xff]
  %v2493 = vld [vmem:[%s2 + $0x148] sm:$0xff]
  %v2494 = vld [vmem:[%s2 + $0x150] sm:$0xff]
  %v2495 = vld [vmem:[%s2 + $0x158] sm:$0xff]
  %v2496 = vld [vmem:[%s2 + $0x160] sm:$0xff]
  %v2497 = vld [vmem:[%s2 + $0x168] sm:$0xff]
  %v2498 = vld [vmem:[%s2 + $0x170] sm:$0xff]
  %v2499 = vld [vmem:[%s2 + $0x178] sm:$0xff]
  %v2500 = vld [vmem:[%s2 + $0x180] sm:$0xff]
  %v2501 = vld [vmem:[%s2 + $0x188] sm:$0xff]
  %v2502 = vld [vmem:[%s2 + $0x190] sm:$0xff]
  %v2503 = vld [vmem:[%s2 + $0x198] sm:$0xff]
  %v2504 = vld [vmem:[%s2 + $0x1a0] sm:$0xff]
  %v2505 = vld [vmem:[%s2 + $0x1a8] sm:$0xff]
  %v2506 = vld [vmem:[%s2 + $0x1b0] sm:$0xff]
  %v2507 = vmul.f32 %v2452, %v1911
  %v2508 = vmul.f32 %v2453, %v1921
  %v2509 = vmul.f32 %v2454, %v1931
  %v2510 = vmul.f32 %v2455, %v1941
  %v2511 = vmul.f32 %v2456, %v1951
  %v2512 = vmul.f32 %v2457, %v1961
  %v2513 = vmul.f32 %v2458, %v1971
  %v2514 = vmul.f32 %v2459, %v1981
  %v2515 = vmul.f32 %v2460, %v1991
  %v2516 = vmul.f32 %v2461, %v2001
  %v2517 = vmul.f32 %v2462, %v2011
  %v2518 = vmul.f32 %v2463, %v2021
  %v2519 = vmul.f32 %v2464, %v2031
  %v2520 = vmul.f32 %v2465, %v2041
  %v2521 = vmul.f32 %v2466, %v2051
  %v2522 = vmul.f32 %v2467, %v2061
  %v2523 = vmul.f32 %v2468, %v2071
  %v2524 = vmul.f32 %v2469, %v2081
  %v2525 = vmul.f32 %v2470, %v2091
  %v2526 = vmul.f32 %v2471, %v2101
  %v2527 = vmul.f32 %v2472, %v2111
  %v2528 = vmul.f32 %v2473, %v2121
  %v2529 = vmul.f32 %v2474, %v2131
  %v2530 = vmul.f32 %v2475, %v2141
  %v2531 = vmul.f32 %v2476, %v2151
  %v2532 = vmul.f32 %v2477, %v2161
  %v2533 = vmul.f32 %v2478, %v2171
  %v2534 = vmul.f32 %v2479, %v2181
  %v2535 = vmul.f32 %v2480, %v2191
  %v2536 = vmul.f32 %v2481, %v2201
  %v2537 = vmul.f32 %v2482, %v2211
  %v2538 = vmul.f32 %v2483, %v2221
  %v2539 = vmul.f32 %v2484, %v2231
  %v2540 = vmul.f32 %v2485, %v2241
  %v2541 = vmul.f32 %v2486, %v2251
  %v2542 = vmul.f32 %v2487, %v2261
  %v2543 = vmul.f32 %v2488, %v2271
  %v2544 = vmul.f32 %v2489, %v2281
  %v2545 = vmul.f32 %v2490, %v2291
  %v2546 = vmul.f32 %v2491, %v2301
  %v2547 = vmul.f32 %v2492, %v2311
  %v2548 = vmul.f32 %v2493, %v2321
  %v2549 = vmul.f32 %v2494, %v2331
  %v2550 = vmul.f32 %v2495, %v2341
  %v2551 = vmul.f32 %v2496, %v2351
  %v2552 = vmul.f32 %v2497, %v2361
  %v2553 = vmul.f32 %v2498, %v2371
  %v2554 = vmul.f32 %v2499, %v2381
  %v2555 = vmul.f32 %v2500, %v2391
  %v2556 = vmul.f32 %v2501, %v2401
  %v2557 = vmul.f32 %v2502, %v2411
  %v2558 = vmul.f32 %v2503, %v2421
  %v2559 = vmul.f32 %v2504, %v2431
  %v2560 = vmul.f32 %v2505, %v2441
  %v2561 = vmul.f32 %v2506, %v2451
  %v2562 = vmul.f32 %v1572, %v2507
  %v2563 = vmul.f32 %v1573, %v2508
  %v2564 = vmul.f32 %v1574, %v2509
  %v2565 = vmul.f32 %v1575, %v2510
  %v2566 = vmul.f32 %v1576, %v2511
  %v2567 = vmul.f32 %v1577, %v2512
  %v2568 = vmul.f32 %v1578, %v2513
  %v2569 = vmul.f32 %v1579, %v2514
  %v2570 = vmul.f32 %v1580, %v2515
  %v2571 = vmul.f32 %v1581, %v2516
  %v2572 = vmul.f32 %v1582, %v2517
  %v2573 = vmul.f32 %v1583, %v2518
  %v2574 = vmul.f32 %v1584, %v2519
  %v2575 = vmul.f32 %v1585, %v2520
  %v2576 = vmul.f32 %v1586, %v2521
  %v2577 = vmul.f32 %v1587, %v2522
  %v2578 = vmul.f32 %v1588, %v2523
  %v2579 = vmul.f32 %v1589, %v2524
  %v2580 = vmul.f32 %v1590, %v2525
  %v2581 = vmul.f32 %v1591, %v2526
  %v2582 = vmul.f32 %v1592, %v2527
  %v2583 = vmul.f32 %v1593, %v2528
  %v2584 = vmul.f32 %v1594, %v2529
  %v2585 = vmul.f32 %v1595, %v2530
  %v2586 = vmul.f32 %v1596, %v2531
  %v2587 = vmul.f32 %v1597, %v2532
  %v2588 = vmul.f32 %v1598, %v2533
  %v2589 = vmul.f32 %v1599, %v2534
  %v2590 = vmul.f32 %v1600, %v2535
  %v2591 = vmul.f32 %v1601, %v2536
  %v2592 = vmul.f32 %v1602, %v2537
  %v2593 = vmul.f32 %v1603, %v2538
  %v2594 = vmul.f32 %v1604, %v2539
  %v2595 = vmul.f32 %v1605, %v2540
  %v2596 = vmul.f32 %v1606, %v2541
  %v2597 = vmul.f32 %v1607, %v2542
  %v2598 = vmul.f32 %v1608, %v2543
  %v2599 = vmul.f32 %v1609, %v2544
  %v2600 = vmul.f32 %v1610, %v2545
  %v2601 = vmul.f32 %v1611, %v2546
  %v2602 = vmul.f32 %v1612, %v2547
  %v2603 = vmul.f32 %v1613, %v2548
  %v2604 = vmul.f32 %v1614, %v2549
  %v2605 = vmul.f32 %v1615, %v2550
  %v2606 = vmul.f32 %v1616, %v2551
  %v2607 = vmul.f32 %v1617, %v2552
  %v2608 = vmul.f32 %v1618, %v2553
  %v2609 = vmul.f32 %v1619, %v2554
  %v2610 = vmul.f32 %v1620, %v2555
  %v2611 = vmul.f32 %v1621, %v2556
  %v2612 = vmul.f32 %v1622, %v2557
  %v2613 = vmul.f32 %v1623, %v2558
  %v2614 = vmul.f32 %v1624, %v2559
  %v2615 = vmul.f32 %v1625, %v2560
  %v2616 = vmul.f32 %v1626, %v2561
  %2672 = vrot.lane.b32.xlu0 %v2562, 1
  %v2673 = vpop.permute.xlu0 %2672
  %2674 = vrot.lane.b32.xlu0 %v2563, 1
  %v2675 = vpop.permute.xlu0 %2674
  %2676 = vrot.lane.b32.xlu0 %v2564, 1
  %v2677 = vpop.permute.xlu0 %2676
  %2678 = vrot.lane.b32.xlu0 %v2565, 1
  %v2679 = vpop.permute.xlu0 %2678
  %2680 = vrot.lane.b32.xlu0 %v2566, 1
  %v2681 = vpop.permute.xlu0 %2680
  %2682 = vrot.lane.b32.xlu0 %v2567, 1
  %v2683 = vpop.permute.xlu0 %2682
  %2684 = vrot.lane.b32.xlu0 %v2568, 1
  %v2685 = vpop.permute.xlu0 %2684
  %2686 = vrot.lane.b32.xlu0 %v2569, 1
  %v2687 = vpop.permute.xlu0 %2686
  %2688 = vrot.lane.b32.xlu0 %v2570, 1
  %v2689 = vpop.permute.xlu0 %2688
  %2690 = vrot.lane.b32.xlu0 %v2571, 1
  %v2691 = vpop.permute.xlu0 %2690
  %2692 = vrot.lane.b32.xlu0 %v2572, 1
  %v2693 = vpop.permute.xlu0 %2692
  %2694 = vrot.lane.b32.xlu0 %v2573, 1
  %v2695 = vpop.permute.xlu0 %2694
  %2696 = vrot.lane.b32.xlu0 %v2574, 1
  %v2697 = vpop.permute.xlu0 %2696
  %2698 = vrot.lane.b32.xlu0 %v2575, 1
  %v2699 = vpop.permute.xlu0 %2698
  %2700 = vrot.lane.b32.xlu0 %v2576, 1
  %v2701 = vpop.permute.xlu0 %2700
  %2702 = vrot.lane.b32.xlu0 %v2577, 1
  %v2703 = vpop.permute.xlu0 %2702
  %2704 = vrot.lane.b32.xlu0 %v2578, 1
  %v2705 = vpop.permute.xlu0 %2704
  %2706 = vrot.lane.b32.xlu0 %v2579, 1
  %v2707 = vpop.permute.xlu0 %2706
  %2708 = vrot.lane.b32.xlu0 %v2580, 1
  %v2709 = vpop.permute.xlu0 %2708
  %2710 = vrot.lane.b32.xlu0 %v2581, 1
  %v2711 = vpop.permute.xlu0 %2710
  %2712 = vrot.lane.b32.xlu0 %v2582, 1
  %v2713 = vpop.permute.xlu0 %2712
  %2714 = vrot.lane.b32.xlu0 %v2583, 1
  %v2715 = vpop.permute.xlu0 %2714
  %2716 = vrot.lane.b32.xlu0 %v2584, 1
  %v2717 = vpop.permute.xlu0 %2716
  %2718 = vrot.lane.b32.xlu0 %v2585, 1
  %v2719 = vpop.permute.xlu0 %2718
  %2720 = vrot.lane.b32.xlu0 %v2586, 1
  %v2721 = vpop.permute.xlu0 %2720
  %2722 = vrot.lane.b32.xlu0 %v2587, 1
  %v2723 = vpop.permute.xlu0 %2722
  %2724 = vrot.lane.b32.xlu0 %v2588, 1
  %v2725 = vpop.permute.xlu0 %2724
  %2726 = vrot.lane.b32.xlu0 %v2589, 1
  %v2727 = vpop.permute.xlu0 %2726
  %2728 = vrot.lane.b32.xlu0 %v2590, 1
  %v2729 = vpop.permute.xlu0 %2728
  %2730 = vrot.lane.b32.xlu0 %v2591, 1
  %v2731 = vpop.permute.xlu0 %2730
  %2732 = vrot.lane.b32.xlu0 %v2592, 1
  %v2733 = vpop.permute.xlu0 %2732
  %2734 = vrot.lane.b32.xlu0 %v2593, 1
  %v2735 = vpop.permute.xlu0 %2734
  %2736 = vrot.lane.b32.xlu0 %v2594, 1
  %v2737 = vpop.permute.xlu0 %2736
  %2738 = vrot.lane.b32.xlu0 %v2595, 1
  %v2739 = vpop.permute.xlu0 %2738
  %2740 = vrot.lane.b32.xlu0 %v2596, 1
  %v2741 = vpop.permute.xlu0 %2740
  %2742 = vrot.lane.b32.xlu0 %v2597, 1
  %v2743 = vpop.permute.xlu0 %2742
  %2744 = vrot.lane.b32.xlu0 %v2598, 1
  %v2745 = vpop.permute.xlu0 %2744
  %2746 = vrot.lane.b32.xlu0 %v2599, 1
  %v2747 = vpop.permute.xlu0 %2746
  %2748 = vrot.lane.b32.xlu0 %v2600, 1
  %v2749 = vpop.permute.xlu0 %2748
  %2750 = vrot.lane.b32.xlu0 %v2601, 1
  %v2751 = vpop.permute.xlu0 %2750
  %2752 = vrot.lane.b32.xlu0 %v2602, 1
  %v2753 = vpop.permute.xlu0 %2752
  %2754 = vrot.lane.b32.xlu0 %v2603, 1
  %v2755 = vpop.permute.xlu0 %2754
  %2756 = vrot.lane.b32.xlu0 %v2604, 1
  %v2757 = vpop.permute.xlu0 %2756
  %2758 = vrot.lane.b32.xlu0 %v2605, 1
  %v2759 = vpop.permute.xlu0 %2758
  %2760 = vrot.lane.b32.xlu0 %v2606, 1
  %v2761 = vpop.permute.xlu0 %2760
  %2762 = vrot.lane.b32.xlu0 %v2607, 1
  %v2763 = vpop.permute.xlu0 %2762
  %2764 = vrot.lane.b32.xlu0 %v2608, 1
  %v2765 = vpop.permute.xlu0 %2764
  %2766 = vrot.lane.b32.xlu0 %v2609, 1
  %v2767 = vpop.permute.xlu0 %2766
  %2768 = vrot.lane.b32.xlu0 %v2610, 1
  %v2769 = vpop.permute.xlu0 %2768
  %2770 = vrot.lane.b32.xlu0 %v2611, 1
  %v2771 = vpop.permute.xlu0 %2770
  %2772 = vrot.lane.b32.xlu0 %v2612, 1
  %v2773 = vpop.permute.xlu0 %2772
  %2774 = vrot.lane.b32.xlu0 %v2613, 1
  %v2775 = vpop.permute.xlu0 %2774
  %2776 = vrot.lane.b32.xlu0 %v2614, 1
  %v2777 = vpop.permute.xlu0 %2776
  %2778 = vrot.lane.b32.xlu0 %v2615, 1
  %v2779 = vpop.permute.xlu0 %2778
  %2780 = vrot.lane.b32.xlu0 %v2616, 1
  %v2781 = vpop.permute.xlu0 %2780
  %v2837 = vsub.f32 %v2452, %v2673
  %v2838 = vsub.f32 %v2453, %v2675
  %v2839 = vsub.f32 %v2454, %v2677
  %v2840 = vsub.f32 %v2455, %v2679
  %v2841 = vsub.f32 %v2456, %v2681
  %v2842 = vsub.f32 %v2457, %v2683
  %v2843 = vsub.f32 %v2458, %v2685
  %v2844 = vsub.f32 %v2459, %v2687
  %v2845 = vsub.f32 %v2460, %v2689
  %v2846 = vsub.f32 %v2461, %v2691
  %v2847 = vsub.f32 %v2462, %v2693
  %v2848 = vsub.f32 %v2463, %v2695
  %v2849 = vsub.f32 %v2464, %v2697
  %v2850 = vsub.f32 %v2465, %v2699
  %v2851 = vsub.f32 %v2466, %v2701
  %v2852 = vsub.f32 %v2467, %v2703
  %v2853 = vsub.f32 %v2468, %v2705
  %v2854 = vsub.f32 %v2469, %v2707
  %v2855 = vsub.f32 %v2470, %v2709
  %v2856 = vsub.f32 %v2471, %v2711
  %v2857 = vsub.f32 %v2472, %v2713
  %v2858 = vsub.f32 %v2473, %v2715
  %v2859 = vsub.f32 %v2474, %v2717
  %v2860 = vsub.f32 %v2475, %v2719
  %v2861 = vsub.f32 %v2476, %v2721
  %v2862 = vsub.f32 %v2477, %v2723
  %v2863 = vsub.f32 %v2478, %v2725
  %v2864 = vsub.f32 %v2479, %v2727
  %v2865 = vsub.f32 %v2480, %v2729
  %v2866 = vsub.f32 %v2481, %v2731
  %v2867 = vsub.f32 %v2482, %v2733
  %v2868 = vsub.f32 %v2483, %v2735
  %v2869 = vsub.f32 %v2484, %v2737
  %v2870 = vsub.f32 %v2485, %v2739
  %v2871 = vsub.f32 %v2486, %v2741
  %v2872 = vsub.f32 %v2487, %v2743
  %v2873 = vsub.f32 %v2488, %v2745
  %v2874 = vsub.f32 %v2489, %v2747
  %v2875 = vsub.f32 %v2490, %v2749
  %v2876 = vsub.f32 %v2491, %v2751
  %v2877 = vsub.f32 %v2492, %v2753
  %v2878 = vsub.f32 %v2493, %v2755
  %v2879 = vsub.f32 %v2494, %v2757
  %v2880 = vsub.f32 %v2495, %v2759
  %v2881 = vsub.f32 %v2496, %v2761
  %v2882 = vsub.f32 %v2497, %v2763
  %v2883 = vsub.f32 %v2498, %v2765
  %v2884 = vsub.f32 %v2499, %v2767
  %v2885 = vsub.f32 %v2500, %v2769
  %v2886 = vsub.f32 %v2501, %v2771
  %v2887 = vsub.f32 %v2502, %v2773
  %v2888 = vsub.f32 %v2503, %v2775
  %v2889 = vsub.f32 %v2504, %v2777
  %v2890 = vsub.f32 %v2505, %v2779
  %v2891 = vsub.f32 %v2506, %v2781
  %v2892 = vld [vmem:[%s3] sm:$0xff]
  %v2893 = vld [vmem:[%s3 + $0x8] sm:$0xff]
  %v2894 = vld [vmem:[%s3 + $0x10] sm:$0xff]
  %v2895 = vld [vmem:[%s3 + $0x18] sm:$0xff]
  %v2896 = vld [vmem:[%s3 + $0x20] sm:$0xff]
  %v2897 = vld [vmem:[%s3 + $0x28] sm:$0xff]
  %v2898 = vld [vmem:[%s3 + $0x30] sm:$0xff]
  %v2899 = vld [vmem:[%s3 + $0x38] sm:$0xff]
  %v2900 = vld [vmem:[%s3 + $0x40] sm:$0xff]
  %v2901 = vld [vmem:[%s3 + $0x48] sm:$0xff]
  %v2902 = vld [vmem:[%s3 + $0x50] sm:$0xff]
  %v2903 = vld [vmem:[%s3 + $0x58] sm:$0xff]
  %v2904 = vld [vmem:[%s3 + $0x60] sm:$0xff]
  %v2905 = vld [vmem:[%s3 + $0x68] sm:$0xff]
  %v2906 = vld [vmem:[%s3 + $0x70] sm:$0xff]
  %v2907 = vld [vmem:[%s3 + $0x78] sm:$0xff]
  %v2908 = vld [vmem:[%s3 + $0x80] sm:$0xff]
  %v2909 = vld [vmem:[%s3 + $0x88] sm:$0xff]
  %v2910 = vld [vmem:[%s3 + $0x90] sm:$0xff]
  %v2911 = vld [vmem:[%s3 + $0x98] sm:$0xff]
  %v2912 = vld [vmem:[%s3 + $0xa0] sm:$0xff]
  %v2913 = vld [vmem:[%s3 + $0xa8] sm:$0xff]
  %v2914 = vld [vmem:[%s3 + $0xb0] sm:$0xff]
  %v2915 = vld [vmem:[%s3 + $0xb8] sm:$0xff]
  %v2916 = vld [vmem:[%s3 + $0xc0] sm:$0xff]
  %v2917 = vld [vmem:[%s3 + $0xc8] sm:$0xff]
  %v2918 = vld [vmem:[%s3 + $0xd0] sm:$0xff]
  %v2919 = vld [vmem:[%s3 + $0xd8] sm:$0xff]
  %v2920 = vld [vmem:[%s3 + $0xe0] sm:$0xff]
  %v2921 = vld [vmem:[%s3 + $0xe8] sm:$0xff]
  %v2922 = vld [vmem:[%s3 + $0xf0] sm:$0xff]
  %v2923 = vld [vmem:[%s3 + $0xf8] sm:$0xff]
  %v2924 = vld [vmem:[%s3 + $0x100] sm:$0xff]
  %v2925 = vld [vmem:[%s3 + $0x108] sm:$0xff]
  %v2926 = vld [vmem:[%s3 + $0x110] sm:$0xff]
  %v2927 = vld [vmem:[%s3 + $0x118] sm:$0xff]
  %v2928 = vld [vmem:[%s3 + $0x120] sm:$0xff]
  %v2929 = vld [vmem:[%s3 + $0x128] sm:$0xff]
  %v2930 = vld [vmem:[%s3 + $0x130] sm:$0xff]
  %v2931 = vld [vmem:[%s3 + $0x138] sm:$0xff]
  %v2932 = vld [vmem:[%s3 + $0x140] sm:$0xff]
  %v2933 = vld [vmem:[%s3 + $0x148] sm:$0xff]
  %v2934 = vld [vmem:[%s3 + $0x150] sm:$0xff]
  %v2935 = vld [vmem:[%s3 + $0x158] sm:$0xff]
  %v2936 = vld [vmem:[%s3 + $0x160] sm:$0xff]
  %v2937 = vld [vmem:[%s3 + $0x168] sm:$0xff]
  %v2938 = vld [vmem:[%s3 + $0x170] sm:$0xff]
  %v2939 = vld [vmem:[%s3 + $0x178] sm:$0xff]
  %v2940 = vld [vmem:[%s3 + $0x180] sm:$0xff]
  %v2941 = vld [vmem:[%s3 + $0x188] sm:$0xff]
  %v2942 = vld [vmem:[%s3 + $0x190] sm:$0xff]
  %v2943 = vld [vmem:[%s3 + $0x198] sm:$0xff]
  %v2944 = vld [vmem:[%s3 + $0x1a0] sm:$0xff]
  %v2945 = vld [vmem:[%s3 + $0x1a8] sm:$0xff]
  %v2946 = vld [vmem:[%s3 + $0x1b0] sm:$0xff]
  %2948 = vset.pattern.permute.xlu0 0
  %2949 = vperm.xlu0 %2948, %v2507
  %v2950 = vpop.permute.xlu0 %2949
  %2953 = vset.pattern.permute.xlu0 0
  %2954 = vperm.xlu0 %2953, %v2508
  %v2955 = vpop.permute.xlu0 %2954
  %2958 = vset.pattern.permute.xlu0 0
  %2959 = vperm.xlu0 %2958, %v2509
  %v2960 = vpop.permute.xlu0 %2959
  %2963 = vset.pattern.permute.xlu0 0
  %2964 = vperm.xlu0 %2963, %v2510
  %v2965 = vpop.permute.xlu0 %2964
  %2968 = vset.pattern.permute.xlu0 0
  %2969 = vperm.xlu0 %2968, %v2511
  %v2970 = vpop.permute.xlu0 %2969
  %2973 = vset.pattern.permute.xlu0 0
  %2974 = vperm.xlu0 %2973, %v2512
  %v2975 = vpop.permute.xlu0 %2974
  %2978 = vset.pattern.permute.xlu0 0
  %2979 = vperm.xlu0 %2978, %v2513
  %v2980 = vpop.permute.xlu0 %2979
  %2983 = vset.pattern.permute.xlu0 0
  %2984 = vperm.xlu0 %2983, %v2514
  %v2985 = vpop.permute.xlu0 %2984
  %2988 = vset.pattern.permute.xlu0 0
  %2989 = vperm.xlu0 %2988, %v2515
  %v2990 = vpop.permute.xlu0 %2989
  %2993 = vset.pattern.permute.xlu0 0
  %2994 = vperm.xlu0 %2993, %v2516
  %v2995 = vpop.permute.xlu0 %2994
  %2998 = vset.pattern.permute.xlu0 0
  %2999 = vperm.xlu0 %2998, %v2517
  %v3000 = vpop.permute.xlu0 %2999
  %3003 = vset.pattern.permute.xlu0 0
  %3004 = vperm.xlu0 %3003, %v2518
  %v3005 = vpop.permute.xlu0 %3004
  %3008 = vset.pattern.permute.xlu0 0
  %3009 = vperm.xlu0 %3008, %v2519
  %v3010 = vpop.permute.xlu0 %3009
  %3013 = vset.pattern.permute.xlu0 0
  %3014 = vperm.xlu0 %3013, %v2520
  %v3015 = vpop.permute.xlu0 %3014
  %3018 = vset.pattern.permute.xlu0 0
  %3019 = vperm.xlu0 %3018, %v2521
  %v3020 = vpop.permute.xlu0 %3019
  %3023 = vset.pattern.permute.xlu0 0
  %3024 = vperm.xlu0 %3023, %v2522
  %v3025 = vpop.permute.xlu0 %3024
  %3028 = vset.pattern.permute.xlu0 0
  %3029 = vperm.xlu0 %3028, %v2523
  %v3030 = vpop.permute.xlu0 %3029
  %3033 = vset.pattern.permute.xlu0 0
  %3034 = vperm.xlu0 %3033, %v2524
  %v3035 = vpop.permute.xlu0 %3034
  %3038 = vset.pattern.permute.xlu0 0
  %3039 = vperm.xlu0 %3038, %v2525
  %v3040 = vpop.permute.xlu0 %3039
  %3043 = vset.pattern.permute.xlu0 0
  %3044 = vperm.xlu0 %3043, %v2526
  %v3045 = vpop.permute.xlu0 %3044
  %3048 = vset.pattern.permute.xlu0 0
  %3049 = vperm.xlu0 %3048, %v2527
  %v3050 = vpop.permute.xlu0 %3049
  %3053 = vset.pattern.permute.xlu0 0
  %3054 = vperm.xlu0 %3053, %v2528
  %v3055 = vpop.permute.xlu0 %3054
  %3058 = vset.pattern.permute.xlu0 0
  %3059 = vperm.xlu0 %3058, %v2529
  %v3060 = vpop.permute.xlu0 %3059
  %3063 = vset.pattern.permute.xlu0 0
  %3064 = vperm.xlu0 %3063, %v2530
  %v3065 = vpop.permute.xlu0 %3064
  %3068 = vset.pattern.permute.xlu0 0
  %3069 = vperm.xlu0 %3068, %v2531
  %v3070 = vpop.permute.xlu0 %3069
  %3073 = vset.pattern.permute.xlu0 0
  %3074 = vperm.xlu0 %3073, %v2532
  %v3075 = vpop.permute.xlu0 %3074
  %3078 = vset.pattern.permute.xlu0 0
  %3079 = vperm.xlu0 %3078, %v2533
  %v3080 = vpop.permute.xlu0 %3079
  %3083 = vset.pattern.permute.xlu0 0
  %3084 = vperm.xlu0 %3083, %v2534
  %v3085 = vpop.permute.xlu0 %3084
  %3088 = vset.pattern.permute.xlu0 0
  %3089 = vperm.xlu0 %3088, %v2535
  %v3090 = vpop.permute.xlu0 %3089
  %3093 = vset.pattern.permute.xlu0 0
  %3094 = vperm.xlu0 %3093, %v2536
  %v3095 = vpop.permute.xlu0 %3094
  %3098 = vset.pattern.permute.xlu0 0
  %3099 = vperm.xlu0 %3098, %v2537
  %v3100 = vpop.permute.xlu0 %3099
  %3103 = vset.pattern.permute.xlu0 0
  %3104 = vperm.xlu0 %3103, %v2538
  %v3105 = vpop.permute.xlu0 %3104
  %3108 = vset.pattern.permute.xlu0 0
  %3109 = vperm.xlu0 %3108, %v2539
  %v3110 = vpop.permute.xlu0 %3109
  %3113 = vset.pattern.permute.xlu0 0
  %3114 = vperm.xlu0 %3113, %v2540
  %v3115 = vpop.permute.xlu0 %3114
  %3118 = vset.pattern.permute.xlu0 0
  %3119 = vperm.xlu0 %3118, %v2541
  %v3120 = vpop.permute.xlu0 %3119
  %3123 = vset.pattern.permute.xlu0 0
  %3124 = vperm.xlu0 %3123, %v2542
  %v3125 = vpop.permute.xlu0 %3124
  %3128 = vset.pattern.permute.xlu0 0
  %3129 = vperm.xlu0 %3128, %v2543
  %v3130 = vpop.permute.xlu0 %3129
  %3133 = vset.pattern.permute.xlu0 0
  %3134 = vperm.xlu0 %3133, %v2544
  %v3135 = vpop.permute.xlu0 %3134
  %3138 = vset.pattern.permute.xlu0 0
  %3139 = vperm.xlu0 %3138, %v2545
  %v3140 = vpop.permute.xlu0 %3139
  %3143 = vset.pattern.permute.xlu0 0
  %3144 = vperm.xlu0 %3143, %v2546
  %v3145 = vpop.permute.xlu0 %3144
  %3148 = vset.pattern.permute.xlu0 0
  %3149 = vperm.xlu0 %3148, %v2547
  %v3150 = vpop.permute.xlu0 %3149
  %3153 = vset.pattern.permute.xlu0 0
  %3154 = vperm.xlu0 %3153, %v2548
  %v3155 = vpop.permute.xlu0 %3154
  %3158 = vset.pattern.permute.xlu0 0
  %3159 = vperm.xlu0 %3158, %v2549
  %v3160 = vpop.permute.xlu0 %3159
  %3163 = vset.pattern.permute.xlu0 0
  %3164 = vperm.xlu0 %3163, %v2550
  %v3165 = vpop.permute.xlu0 %3164
  %3168 = vset.pattern.permute.xlu0 0
  %3169 = vperm.xlu0 %3168, %v2551
  %v3170 = vpop.permute.xlu0 %3169
  %3173 = vset.pattern.permute.xlu0 0
  %3174 = vperm.xlu0 %3173, %v2552
  %v3175 = vpop.permute.xlu0 %3174
  %3178 = vset.pattern.permute.xlu0 0
  %3179 = vperm.xlu0 %3178, %v2553
  %v3180 = vpop.permute.xlu0 %3179
  %3183 = vset.pattern.permute.xlu0 0
  %3184 = vperm.xlu0 %3183, %v2554
  %v3185 = vpop.permute.xlu0 %3184
  %3188 = vset.pattern.permute.xlu0 0
  %3189 = vperm.xlu0 %3188, %v2555
  %v3190 = vpop.permute.xlu0 %3189
  %3193 = vset.pattern.permute.xlu0 0
  %3194 = vperm.xlu0 %3193, %v2556
  %v3195 = vpop.permute.xlu0 %3194
  %3198 = vset.pattern.permute.xlu0 0
  %3199 = vperm.xlu0 %3198, %v2557
  %v3200 = vpop.permute.xlu0 %3199
  %3203 = vset.pattern.permute.xlu0 0
  %3204 = vperm.xlu0 %3203, %v2558
  %v3205 = vpop.permute.xlu0 %3204
  %3208 = vset.pattern.permute.xlu0 0
  %3209 = vperm.xlu0 %3208, %v2559
  %v3210 = vpop.permute.xlu0 %3209
  %3213 = vset.pattern.permute.xlu0 0
  %3214 = vperm.xlu0 %3213, %v2560
  %v3215 = vpop.permute.xlu0 %3214
  %3218 = vset.pattern.permute.xlu0 0
  %3219 = vperm.xlu0 %3218, %v2561
  %v3220 = vpop.permute.xlu0 %3219
  %v3222 = vmul.f32 %v1022, %v2950
  %v3223 = vmul.f32 %v1025, %v2955
  %v3224 = vmul.f32 %v1028, %v2960
  %v3225 = vmul.f32 %v1031, %v2965
  %v3226 = vmul.f32 %v1034, %v2970
  %v3227 = vmul.f32 %v1037, %v2975
  %v3228 = vmul.f32 %v1040, %v2980
  %v3229 = vmul.f32 %v1043, %v2985
  %v3230 = vmul.f32 %v1046, %v2990
  %v3231 = vmul.f32 %v1049, %v2995
  %v3232 = vmul.f32 %v1052, %v3000
  %v3233 = vmul.f32 %v1055, %v3005
  %v3234 = vmul.f32 %v1058, %v3010
  %v3235 = vmul.f32 %v1061, %v3015
  %v3236 = vmul.f32 %v1064, %v3020
  %v3237 = vmul.f32 %v1067, %v3025
  %v3238 = vmul.f32 %v1070, %v3030
  %v3239 = vmul.f32 %v1073, %v3035
  %v3240 = vmul.f32 %v1076, %v3040
  %v3241 = vmul.f32 %v1079, %v3045
  %v3242 = vmul.f32 %v1082, %v3050
  %v3243 = vmul.f32 %v1085, %v3055
  %v3244 = vmul.f32 %v1088, %v3060
  %v3245 = vmul.f32 %v1091, %v3065
  %v3246 = vmul.f32 %v1094, %v3070
  %v3247 = vmul.f32 %v1097, %v3075
  %v3248 = vmul.f32 %v1100, %v3080
  %v3249 = vmul.f32 %v1103, %v3085
  %v3250 = vmul.f32 %v1106, %v3090
  %v3251 = vmul.f32 %v1109, %v3095
  %v3252 = vmul.f32 %v1112, %v3100
  %v3253 = vmul.f32 %v1115, %v3105
  %v3254 = vmul.f32 %v1118, %v3110
  %v3255 = vmul.f32 %v1121, %v3115
  %v3256 = vmul.f32 %v1124, %v3120
  %v3257 = vmul.f32 %v1127, %v3125
  %v3258 = vmul.f32 %v1130, %v3130
  %v3259 = vmul.f32 %v1133, %v3135
  %v3260 = vmul.f32 %v1136, %v3140
  %v3261 = vmul.f32 %v1139, %v3145
  %v3262 = vmul.f32 %v1142, %v3150
  %v3263 = vmul.f32 %v1145, %v3155
  %v3264 = vmul.f32 %v1148, %v3160
  %v3265 = vmul.f32 %v1151, %v3165
  %v3266 = vmul.f32 %v1154, %v3170
  %v3267 = vmul.f32 %v1157, %v3175
  %v3268 = vmul.f32 %v1160, %v3180
  %v3269 = vmul.f32 %v1163, %v3185
  %v3270 = vmul.f32 %v1166, %v3190
  %v3271 = vmul.f32 %v1169, %v3195
  %v3272 = vmul.f32 %v1172, %v3200
  %v3273 = vmul.f32 %v1175, %v3205
  %v3274 = vmul.f32 %v1178, %v3210
  %v3275 = vmul.f32 %v1181, %v3215
  %v3276 = vmul.f32 %v1184, %v3220
  %v3277 = vadd.f32 %v2892, %v3222
  %v3278 = vadd.f32 %v2893, %v3223
  %v3279 = vadd.f32 %v2894, %v3224
  %v3280 = vadd.f32 %v2895, %v3225
  %v3281 = vadd.f32 %v2896, %v3226
  %v3282 = vadd.f32 %v2897, %v3227
  %v3283 = vadd.f32 %v2898, %v3228
  %v3284 = vadd.f32 %v2899, %v3229
  %v3285 = vadd.f32 %v2900, %v3230
  %v3286 = vadd.f32 %v2901, %v3231
  %v3287 = vadd.f32 %v2902, %v3232
  %v3288 = vadd.f32 %v2903, %v3233
  %v3289 = vadd.f32 %v2904, %v3234
  %v3290 = vadd.f32 %v2905, %v3235
  %v3291 = vadd.f32 %v2906, %v3236
  %v3292 = vadd.f32 %v2907, %v3237
  %v3293 = vadd.f32 %v2908, %v3238
  %v3294 = vadd.f32 %v2909, %v3239
  %v3295 = vadd.f32 %v2910, %v3240
  %v3296 = vadd.f32 %v2911, %v3241
  %v3297 = vadd.f32 %v2912, %v3242
  %v3298 = vadd.f32 %v2913, %v3243
  %v3299 = vadd.f32 %v2914, %v3244
  %v3300 = vadd.f32 %v2915, %v3245
  %v3301 = vadd.f32 %v2916, %v3246
  %v3302 = vadd.f32 %v2917, %v3247
  %v3303 = vadd.f32 %v2918, %v3248
  %v3304 = vadd.f32 %v2919, %v3249
  %v3305 = vadd.f32 %v2920, %v3250
  %v3306 = vadd.f32 %v2921, %v3251
  %v3307 = vadd.f32 %v2922, %v3252
  %v3308 = vadd.f32 %v2923, %v3253
  %v3309 = vadd.f32 %v2924, %v3254
  %v3310 = vadd.f32 %v2925, %v3255
  %v3311 = vadd.f32 %v2926, %v3256
  %v3312 = vadd.f32 %v2927, %v3257
  %v3313 = vadd.f32 %v2928, %v3258
  %v3314 = vadd.f32 %v2929, %v3259
  %v3315 = vadd.f32 %v2930, %v3260
  %v3316 = vadd.f32 %v2931, %v3261
  %v3317 = vadd.f32 %v2932, %v3262
  %v3318 = vadd.f32 %v2933, %v3263
  %v3319 = vadd.f32 %v2934, %v3264
  %v3320 = vadd.f32 %v2935, %v3265
  %v3321 = vadd.f32 %v2936, %v3266
  %v3322 = vadd.f32 %v2937, %v3267
  %v3323 = vadd.f32 %v2938, %v3268
  %v3324 = vadd.f32 %v2939, %v3269
  %v3325 = vadd.f32 %v2940, %v3270
  %v3326 = vadd.f32 %v2941, %v3271
  %v3327 = vadd.f32 %v2942, %v3272
  %v3328 = vadd.f32 %v2943, %v3273
  %v3329 = vadd.f32 %v2944, %v3274
  %v3330 = vadd.f32 %v2945, %v3275
  %v3331 = vadd.f32 %v2946, %v3276
  %3333 = vset.pattern.permute.xlu0 1
  %3334 = vperm.xlu0 %3333, %v2837
  %v3335 = vpop.permute.xlu0 %3334
  %3338 = vset.pattern.permute.xlu0 1
  %3339 = vperm.xlu0 %3338, %v2838
  %v3340 = vpop.permute.xlu0 %3339
  %3343 = vset.pattern.permute.xlu0 1
  %3344 = vperm.xlu0 %3343, %v2839
  %v3345 = vpop.permute.xlu0 %3344
  %3348 = vset.pattern.permute.xlu0 1
  %3349 = vperm.xlu0 %3348, %v2840
  %v3350 = vpop.permute.xlu0 %3349
  %3353 = vset.pattern.permute.xlu0 1
  %3354 = vperm.xlu0 %3353, %v2841
  %v3355 = vpop.permute.xlu0 %3354
  %3358 = vset.pattern.permute.xlu0 1
  %3359 = vperm.xlu0 %3358, %v2842
  %v3360 = vpop.permute.xlu0 %3359
  %3363 = vset.pattern.permute.xlu0 1
  %3364 = vperm.xlu0 %3363, %v2843
  %v3365 = vpop.permute.xlu0 %3364
  %3368 = vset.pattern.permute.xlu0 1
  %3369 = vperm.xlu0 %3368, %v2844
  %v3370 = vpop.permute.xlu0 %3369
  %3373 = vset.pattern.permute.xlu0 1
  %3374 = vperm.xlu0 %3373, %v2845
  %v3375 = vpop.permute.xlu0 %3374
  %3378 = vset.pattern.permute.xlu0 1
  %3379 = vperm.xlu0 %3378, %v2846
  %v3380 = vpop.permute.xlu0 %3379
  %3383 = vset.pattern.permute.xlu0 1
  %3384 = vperm.xlu0 %3383, %v2847
  %v3385 = vpop.permute.xlu0 %3384
  %3388 = vset.pattern.permute.xlu0 1
  %3389 = vperm.xlu0 %3388, %v2848
  %v3390 = vpop.permute.xlu0 %3389
  %3393 = vset.pattern.permute.xlu0 1
  %3394 = vperm.xlu0 %3393, %v2849
  %v3395 = vpop.permute.xlu0 %3394
  %3398 = vset.pattern.permute.xlu0 1
  %3399 = vperm.xlu0 %3398, %v2850
  %v3400 = vpop.permute.xlu0 %3399
  %3403 = vset.pattern.permute.xlu0 1
  %3404 = vperm.xlu0 %3403, %v2851
  %v3405 = vpop.permute.xlu0 %3404
  %3408 = vset.pattern.permute.xlu0 1
  %3409 = vperm.xlu0 %3408, %v2852
  %v3410 = vpop.permute.xlu0 %3409
  %3413 = vset.pattern.permute.xlu0 1
  %3414 = vperm.xlu0 %3413, %v2853
  %v3415 = vpop.permute.xlu0 %3414
  %3418 = vset.pattern.permute.xlu0 1
  %3419 = vperm.xlu0 %3418, %v2854
  %v3420 = vpop.permute.xlu0 %3419
  %3423 = vset.pattern.permute.xlu0 1
  %3424 = vperm.xlu0 %3423, %v2855
  %v3425 = vpop.permute.xlu0 %3424
  %3428 = vset.pattern.permute.xlu0 1
  %3429 = vperm.xlu0 %3428, %v2856
  %v3430 = vpop.permute.xlu0 %3429
  %3433 = vset.pattern.permute.xlu0 1
  %3434 = vperm.xlu0 %3433, %v2857
  %v3435 = vpop.permute.xlu0 %3434
  %3438 = vset.pattern.permute.xlu0 1
  %3439 = vperm.xlu0 %3438, %v2858
  %v3440 = vpop.permute.xlu0 %3439
  %3443 = vset.pattern.permute.xlu0 1
  %3444 = vperm.xlu0 %3443, %v2859
  %v3445 = vpop.permute.xlu0 %3444
  %3448 = vset.pattern.permute.xlu0 1
  %3449 = vperm.xlu0 %3448, %v2860
  %v3450 = vpop.permute.xlu0 %3449
  %3453 = vset.pattern.permute.xlu0 1
  %3454 = vperm.xlu0 %3453, %v2861
  %v3455 = vpop.permute.xlu0 %3454
  %3458 = vset.pattern.permute.xlu0 1
  %3459 = vperm.xlu0 %3458, %v2862
  %v3460 = vpop.permute.xlu0 %3459
  %3463 = vset.pattern.permute.xlu0 1
  %3464 = vperm.xlu0 %3463, %v2863
  %v3465 = vpop.permute.xlu0 %3464
  %3468 = vset.pattern.permute.xlu0 1
  %3469 = vperm.xlu0 %3468, %v2864
  %v3470 = vpop.permute.xlu0 %3469
  %3473 = vset.pattern.permute.xlu0 1
  %3474 = vperm.xlu0 %3473, %v2865
  %v3475 = vpop.permute.xlu0 %3474
  %3478 = vset.pattern.permute.xlu0 1
  %3479 = vperm.xlu0 %3478, %v2866
  %v3480 = vpop.permute.xlu0 %3479
  %3483 = vset.pattern.permute.xlu0 1
  %3484 = vperm.xlu0 %3483, %v2867
  %v3485 = vpop.permute.xlu0 %3484
  %3488 = vset.pattern.permute.xlu0 1
  %3489 = vperm.xlu0 %3488, %v2868
  %v3490 = vpop.permute.xlu0 %3489
  %3493 = vset.pattern.permute.xlu0 1
  %3494 = vperm.xlu0 %3493, %v2869
  %v3495 = vpop.permute.xlu0 %3494
  %3498 = vset.pattern.permute.xlu0 1
  %3499 = vperm.xlu0 %3498, %v2870
  %v3500 = vpop.permute.xlu0 %3499
  %3503 = vset.pattern.permute.xlu0 1
  %3504 = vperm.xlu0 %3503, %v2871
  %v3505 = vpop.permute.xlu0 %3504
  %3508 = vset.pattern.permute.xlu0 1
  %3509 = vperm.xlu0 %3508, %v2872
  %v3510 = vpop.permute.xlu0 %3509
  %3513 = vset.pattern.permute.xlu0 1
  %3514 = vperm.xlu0 %3513, %v2873
  %v3515 = vpop.permute.xlu0 %3514
  %3518 = vset.pattern.permute.xlu0 1
  %3519 = vperm.xlu0 %3518, %v2874
  %v3520 = vpop.permute.xlu0 %3519
  %3523 = vset.pattern.permute.xlu0 1
  %3524 = vperm.xlu0 %3523, %v2875
  %v3525 = vpop.permute.xlu0 %3524
  %3528 = vset.pattern.permute.xlu0 1
  %3529 = vperm.xlu0 %3528, %v2876
  %v3530 = vpop.permute.xlu0 %3529
  %3533 = vset.pattern.permute.xlu0 1
  %3534 = vperm.xlu0 %3533, %v2877
  %v3535 = vpop.permute.xlu0 %3534
  %3538 = vset.pattern.permute.xlu0 1
  %3539 = vperm.xlu0 %3538, %v2878
  %v3540 = vpop.permute.xlu0 %3539
  %3543 = vset.pattern.permute.xlu0 1
  %3544 = vperm.xlu0 %3543, %v2879
  %v3545 = vpop.permute.xlu0 %3544
  %3548 = vset.pattern.permute.xlu0 1
  %3549 = vperm.xlu0 %3548, %v2880
  %v3550 = vpop.permute.xlu0 %3549
  %3553 = vset.pattern.permute.xlu0 1
  %3554 = vperm.xlu0 %3553, %v2881
  %v3555 = vpop.permute.xlu0 %3554
  %3558 = vset.pattern.permute.xlu0 1
  %3559 = vperm.xlu0 %3558, %v2882
  %v3560 = vpop.permute.xlu0 %3559
  %3563 = vset.pattern.permute.xlu0 1
  %3564 = vperm.xlu0 %3563, %v2883
  %v3565 = vpop.permute.xlu0 %3564
  %3568 = vset.pattern.permute.xlu0 1
  %3569 = vperm.xlu0 %3568, %v2884
  %v3570 = vpop.permute.xlu0 %3569
  %3573 = vset.pattern.permute.xlu0 1
  %3574 = vperm.xlu0 %3573, %v2885
  %v3575 = vpop.permute.xlu0 %3574
  %3578 = vset.pattern.permute.xlu0 1
  %3579 = vperm.xlu0 %3578, %v2886
  %v3580 = vpop.permute.xlu0 %3579
  %3583 = vset.pattern.permute.xlu0 1
  %3584 = vperm.xlu0 %3583, %v2887
  %v3585 = vpop.permute.xlu0 %3584
  %3588 = vset.pattern.permute.xlu0 1
  %3589 = vperm.xlu0 %3588, %v2888
  %v3590 = vpop.permute.xlu0 %3589
  %3593 = vset.pattern.permute.xlu0 1
  %3594 = vperm.xlu0 %3593, %v2889
  %v3595 = vpop.permute.xlu0 %3594
  %3598 = vset.pattern.permute.xlu0 1
  %3599 = vperm.xlu0 %3598, %v2890
  %v3600 = vpop.permute.xlu0 %3599
  %3603 = vset.pattern.permute.xlu0 1
  %3604 = vperm.xlu0 %3603, %v2891
  %v3605 = vpop.permute.xlu0 %3604
  %v3607 = vadd.f32 %v3277, %v3335
  %v3608 = vadd.f32 %v3278, %v3340
  %v3609 = vadd.f32 %v3279, %v3345
  %v3610 = vadd.f32 %v3280, %v3350
  %v3611 = vadd.f32 %v3281, %v3355
  %v3612 = vadd.f32 %v3282, %v3360
  %v3613 = vadd.f32 %v3283, %v3365
  %v3614 = vadd.f32 %v3284, %v3370
  %v3615 = vadd.f32 %v3285, %v3375
  %v3616 = vadd.f32 %v3286, %v3380
  %v3617 = vadd.f32 %v3287, %v3385
  %v3618 = vadd.f32 %v3288, %v3390
  %v3619 = vadd.f32 %v3289, %v3395
  %v3620 = vadd.f32 %v3290, %v3400
  %v3621 = vadd.f32 %v3291, %v3405
  %v3622 = vadd.f32 %v3292, %v3410
  %v3623 = vadd.f32 %v3293, %v3415
  %v3624 = vadd.f32 %v3294, %v3420
  %v3625 = vadd.f32 %v3295, %v3425
  %v3626 = vadd.f32 %v3296, %v3430
  %v3627 = vadd.f32 %v3297, %v3435
  %v3628 = vadd.f32 %v3298, %v3440
  %v3629 = vadd.f32 %v3299, %v3445
  %v3630 = vadd.f32 %v3300, %v3450
  %v3631 = vadd.f32 %v3301, %v3455
  %v3632 = vadd.f32 %v3302, %v3460
  %v3633 = vadd.f32 %v3303, %v3465
  %v3634 = vadd.f32 %v3304, %v3470
  %v3635 = vadd.f32 %v3305, %v3475
  %v3636 = vadd.f32 %v3306, %v3480
  %v3637 = vadd.f32 %v3307, %v3485
  %v3638 = vadd.f32 %v3308, %v3490
  %v3639 = vadd.f32 %v3309, %v3495
  %v3640 = vadd.f32 %v3310, %v3500
  %v3641 = vadd.f32 %v3311, %v3505
  %v3642 = vadd.f32 %v3312, %v3510
  %v3643 = vadd.f32 %v3313, %v3515
  %v3644 = vadd.f32 %v3314, %v3520
  %v3645 = vadd.f32 %v3315, %v3525
  %v3646 = vadd.f32 %v3316, %v3530
  %v3647 = vadd.f32 %v3317, %v3535
  %v3648 = vadd.f32 %v3318, %v3540
  %v3649 = vadd.f32 %v3319, %v3545
  %v3650 = vadd.f32 %v3320, %v3550
  %v3651 = vadd.f32 %v3321, %v3555
  %v3652 = vadd.f32 %v3322, %v3560
  %v3653 = vadd.f32 %v3323, %v3565
  %v3654 = vadd.f32 %v3324, %v3570
  %v3655 = vadd.f32 %v3325, %v3575
  %v3656 = vadd.f32 %v3326, %v3580
  %v3657 = vadd.f32 %v3327, %v3585
  %v3658 = vadd.f32 %v3328, %v3590
  %v3659 = vadd.f32 %v3329, %v3595
  %v3660 = vadd.f32 %v3330, %v3600
  %v3661 = vadd.f32 %v3331, %v3605
  %3662 = vst.msk [vmem:[%s4] sm:$0xff] %vm1186, %v3607
  %3663 = vst.msk [vmem:[%s4 + $0x8] sm:$0xff] %vm1186, %v3608
  %3664 = vst.msk [vmem:[%s4 + $0x10] sm:$0xff] %vm1186, %v3609
  %3665 = vst.msk [vmem:[%s4 + $0x18] sm:$0xff] %vm1186, %v3610
  %3666 = vst.msk [vmem:[%s4 + $0x20] sm:$0xff] %vm1186, %v3611
  %3667 = vst.msk [vmem:[%s4 + $0x28] sm:$0xff] %vm1186, %v3612
  %3668 = vst.msk [vmem:[%s4 + $0x30] sm:$0xff] %vm1186, %v3613
  %3669 = vst.msk [vmem:[%s4 + $0x38] sm:$0xff] %vm1186, %v3614
  %3670 = vst.msk [vmem:[%s4 + $0x40] sm:$0xff] %vm1186, %v3615
  %3671 = vst.msk [vmem:[%s4 + $0x48] sm:$0xff] %vm1186, %v3616
  %3672 = vst.msk [vmem:[%s4 + $0x50] sm:$0xff] %vm1186, %v3617
  %3673 = vst.msk [vmem:[%s4 + $0x58] sm:$0xff] %vm1186, %v3618
  %3674 = vst.msk [vmem:[%s4 + $0x60] sm:$0xff] %vm1186, %v3619
  %3675 = vst.msk [vmem:[%s4 + $0x68] sm:$0xff] %vm1186, %v3620
  %3676 = vst.msk [vmem:[%s4 + $0x70] sm:$0xff] %vm1186, %v3621
  %3677 = vst.msk [vmem:[%s4 + $0x78] sm:$0xff] %vm1186, %v3622
  %3678 = vst.msk [vmem:[%s4 + $0x80] sm:$0xff] %vm1186, %v3623
  %3679 = vst.msk [vmem:[%s4 + $0x88] sm:$0xff] %vm1186, %v3624
  %3680 = vst.msk [vmem:[%s4 + $0x90] sm:$0xff] %vm1186, %v3625
  %3681 = vst.msk [vmem:[%s4 + $0x98] sm:$0xff] %vm1186, %v3626
  %3682 = vst.msk [vmem:[%s4 + $0xa0] sm:$0xff] %vm1186, %v3627
  %3683 = vst.msk [vmem:[%s4 + $0xa8] sm:$0xff] %vm1186, %v3628
  %3684 = vst.msk [vmem:[%s4 + $0xb0] sm:$0xff] %vm1186, %v3629
  %3685 = vst.msk [vmem:[%s4 + $0xb8] sm:$0xff] %vm1186, %v3630
  %3686 = vst.msk [vmem:[%s4 + $0xc0] sm:$0xff] %vm1186, %v3631
  %3687 = vst.msk [vmem:[%s4 + $0xc8] sm:$0xff] %vm1186, %v3632
  %3688 = vst.msk [vmem:[%s4 + $0xd0] sm:$0xff] %vm1186, %v3633
  %3689 = vst.msk [vmem:[%s4 + $0xd8] sm:$0xff] %vm1186, %v3634
  %3690 = vst.msk [vmem:[%s4 + $0xe0] sm:$0xff] %vm1186, %v3635
  %3691 = vst.msk [vmem:[%s4 + $0xe8] sm:$0xff] %vm1186, %v3636
  %3692 = vst.msk [vmem:[%s4 + $0xf0] sm:$0xff] %vm1186, %v3637
  %3693 = vst.msk [vmem:[%s4 + $0xf8] sm:$0xff] %vm1186, %v3638
  %3694 = vst.msk [vmem:[%s4 + $0x100] sm:$0xff] %vm1186, %v3639
  %3695 = vst.msk [vmem:[%s4 + $0x108] sm:$0xff] %vm1186, %v3640
  %3696 = vst.msk [vmem:[%s4 + $0x110] sm:$0xff] %vm1186, %v3641
  %3697 = vst.msk [vmem:[%s4 + $0x118] sm:$0xff] %vm1186, %v3642
  %3698 = vst.msk [vmem:[%s4 + $0x120] sm:$0xff] %vm1186, %v3643
  %3699 = vst.msk [vmem:[%s4 + $0x128] sm:$0xff] %vm1186, %v3644
  %3700 = vst.msk [vmem:[%s4 + $0x130] sm:$0xff] %vm1186, %v3645
  %3701 = vst.msk [vmem:[%s4 + $0x138] sm:$0xff] %vm1186, %v3646
  %3702 = vst.msk [vmem:[%s4 + $0x140] sm:$0xff] %vm1186, %v3647
  %3703 = vst.msk [vmem:[%s4 + $0x148] sm:$0xff] %vm1186, %v3648
  %3704 = vst.msk [vmem:[%s4 + $0x150] sm:$0xff] %vm1186, %v3649
  %3705 = vst.msk [vmem:[%s4 + $0x158] sm:$0xff] %vm1186, %v3650
  %3706 = vst.msk [vmem:[%s4 + $0x160] sm:$0xff] %vm1186, %v3651
  %3707 = vst.msk [vmem:[%s4 + $0x168] sm:$0xff] %vm1186, %v3652
  %3708 = vst.msk [vmem:[%s4 + $0x170] sm:$0xff] %vm1186, %v3653
  %3709 = vst.msk [vmem:[%s4 + $0x178] sm:$0xff] %vm1186, %v3654
  %3710 = vst.msk [vmem:[%s4 + $0x180] sm:$0xff] %vm1186, %v3655
  %3711 = vst.msk [vmem:[%s4 + $0x188] sm:$0xff] %vm1186, %v3656
  %3712 = vst.msk [vmem:[%s4 + $0x190] sm:$0xff] %vm1186, %v3657
  %3713 = vst.msk [vmem:[%s4 + $0x198] sm:$0xff] %vm1186, %v3658
  %3714 = vst.msk [vmem:[%s4 + $0x1a0] sm:$0xff] %vm1186, %v3659
  %3715 = vst.msk [vmem:[%s4 + $0x1a8] sm:$0xff] %vm1186, %v3660
  %3716 = vst.msk [vmem:[%s4 + $0x1b0] sm:$0xff] %vm1186, %v3661
  // Predicated region
  $region18: #{conv_bn_add.1} parent=0 // pred_check
    _
  $region19: #{conv_bn_add.1} parent=0 // pred_check_branch
    %3718 = sbr.rel (0) target = $region21
  $region20: #{conv_bn_add.1} parent=0 // pred_region
    _
  $region21: #{conv_bn_add.1} parent=0 // pred_fallthru
    _
  // Predicated region
  $region22: #{conv_bn_add.1} parent=0 // pred_check
    _
  $region23: #{conv_bn_add.1} parent=0 // pred_check_branch
    %3720 = sbr.rel (0) target = $region25
  $region24: #{conv_bn_add.1} parent=0 // pred_region
    _
  $region25: #{conv_bn_add.1} parent=0 // pred_fallthru
    _

</llo_original>
